<compile_context>
chip_gen: v7x
topology: tpu7x:2x2x1
jax: 0.10.0
libtpu: 0.0.40
codegen_flags: <defaults>
</compile_context>

<pallas_src>
import jax
import jax.numpy as jnp
from jax import lax
from jax.experimental import pallas as pl
from jax.experimental.pallas import tpu as pltpu

H = W = 128            # input spatial size implied by fc = 16 * 64 * 64
C_OUT = 16
P = H // 2             # pooled spatial size (64)
PP = P * P             # 4096 pooled pixels per channel (lane-dense)
FEAT = C_OUT * PP      # 65536
N_CLS = 2
N_PHASE = 4            # 2x2 pool phases
KTAPS = 10             # 9 real conv taps + 1 all-ones row (bias fold)


# --------------------------------------------------------------------------
# Fused kernel: conv(3x3,pad=1)+bias+ReLU+maxpool(2)+fc for BB batch elements
# --------------------------------------------------------------------------
def fused_cnn_kernel(w_ref, fcw_ref, fcb_ref, taps_ref, o_ref):
    # w_ref:    VMEM (16, 10) bf16          3x3 conv taps + bias column
    # fcw_ref:  VMEM (2, 16, 4096) f32      fc weights, lane-dense, grid-resident
    # fcb_ref:  VMEM (1, 2) f32             fc bias
    # taps_ref: VMEM (1, 10, 4*BB*4096) bf16  phase-major tap planes, BB batches
    # o_ref:    VMEM (1, BB, 2) f32         logits for this batch block
    bb = o_ref.shape[1]
    lanes = bb * PP
    w = w_ref[...]

    # Conv (+ folded bias) as MXU contraction over the taps: one dot per pool
    # phase covering all BB batch elements.  2x2 maxpool == elementwise max
    # over the 4 phase lane-blocks (bias is phase-constant, commutes with max).
    pooled = jnp.dot(w, taps_ref[0, :, 0:lanes],
                     preferred_element_type=jnp.float32)          # (16, BB*4096)
    for ph in range(1, N_PHASE):
        pooled = jnp.maximum(
            pooled,
            jnp.dot(w, taps_ref[0, :, ph * lanes:(ph + 1) * lanes],
                    preferred_element_type=jnp.float32))
    y = jnp.maximum(pooled, 0.0)                                   # ReLU

    # Fused fc: logits[b, n] = sum(y_b * fc_w[n]) + fc_b[n].  The multiply
    # feeds the reduction directly (no named full-size temporaries); one store
    # for the whole (BB, 2) logits block.
    fcw0 = fcw_ref[0]
    fcw1 = fcw_ref[1]
    rows = []
    for i in range(bb):
        yb = y[:, i * PP:(i + 1) * PP]
        l0 = jnp.sum(jnp.sum(yb * fcw0, axis=1, keepdims=True),
                     axis=0, keepdims=True)
        l1 = jnp.sum(jnp.sum(yb * fcw1, axis=1, keepdims=True),
                     axis=0, keepdims=True)
        rows.append(jnp.concatenate([l0, l1], axis=1))             # (1, 2)
    o_ref[0] = jnp.concatenate(rows, axis=0) + fcb_ref[...]


# --------------------------------------------------------------------------
# Wrapper: layout prep (padding, phase/tap stacking, bf16 cast) in plain XLA,
# then one pallas_call for the whole forward pass.
# --------------------------------------------------------------------------
def _phase_taps(x, bb):
    """Lane-dense, phase-major tap planes for the MXU conv.

    Returns (G, 10, 4*bb*PP) bf16 with G = ceil(B/bb):
      taps[g, 3*dy+dx, (2*rh+rw)*bb*PP + b*PP + i*P + j]
        = xpad[g*bb + b, 2*i + rh + dy, 2*j + rw + dx]
    and row 9 is all ones (carries the conv bias through the dot).
    """
    B = x.shape[0]
    g = pl.cdiv(B, bb)
    bp = g * bb
    if bp != B:
        x = jnp.pad(x, ((0, bp - B), (0, 0), (0, 0), (0, 0)))
    xpad = jnp.pad(x[:, 0], ((0, 0), (1, 1), (1, 1)))              # (Bp,130,130)
    taps = []
    for dy in range(3):
        for dx in range(3):
            phases = [xpad[:, rh + dy:rh + dy + 2 * P:2,
                              rw + dx:rw + dx + 2 * P:2].reshape(bp, PP)
                      for rh in (0, 1) for rw in (0, 1)]
            taps.append(jnp.stack(phases, axis=1))                 # (Bp, 4, PP)
    taps = jnp.stack(taps, axis=1)                                 # (Bp, 9, 4, PP)
    taps = jnp.concatenate(
        [taps, jnp.ones((bp, 1, N_PHASE, PP), taps.dtype)], axis=1)  # K = 10
    taps = taps.reshape(g, bb, KTAPS, N_PHASE, PP)
    taps = jnp.transpose(taps, (0, 2, 3, 1, 4))                    # (G,K,4,BB,PP)
    return taps.reshape(g, KTAPS, N_PHASE * bb * PP).astype(jnp.bfloat16)


@jax.jit
def simple_cnn_forward(x, conv_w, conv_b, fc_w, fc_b):
    B = x.shape[0]
    bb = min(8, max(1, B // 2))        # batch elems per grid step; keep grid >= 2
    g = pl.cdiv(B, bb)

    taps = _phase_taps(x, bb)                                      # (G,10,4*BB*PP)
    # 3x3 conv weights flattened, conv bias folded in as the 10th column (bf16).
    w_flat = jnp.concatenate(
        [conv_w.reshape(C_OUT, 9), conv_b.reshape(C_OUT, 1)],
        axis=1).astype(jnp.bfloat16)                               # (16, 10)
    fcw = fc_w.reshape(N_CLS, C_OUT, PP)                           # (2, 16, 4096)
    fcb = fc_b.reshape(1, N_CLS)                                   # (1, 2)

    out = pl.pallas_call(
        fused_cnn_kernel,
        out_shape=jax.ShapeDtypeStruct((g, bb, N_CLS), jnp.float32),
        grid=(g,),
        in_specs=[
            pl.BlockSpec((C_OUT, KTAPS), lambda i: (0, 0)),            # conv w+b
            pl.BlockSpec((N_CLS, C_OUT, PP), lambda i: (0, 0, 0)),     # fc w (resident)
            pl.BlockSpec((1, N_CLS), lambda i: (0, 0)),                # fc b
            pl.BlockSpec((1, KTAPS, N_PHASE * bb * PP),
                         lambda i: (i, 0, 0)),                         # taps
        ],
        out_specs=pl.BlockSpec((1, bb, N_CLS), lambda i: (i, 0, 0)),
        compiler_params=pltpu.CompilerParams(
            dimension_semantics=("parallel",)),
    )(w_flat, fcw, fcb, taps)
    return out.reshape(g * bb, N_CLS)[:B]


def reference_forward(x, conv_w, conv_b, fc_w, fc_b):
    """Pure-JAX reference using the same bf16 input/weight quantization the
    kernel uses (f32 accumulation everywhere)."""
    y = lax.conv_general_dilated(
        x.astype(jnp.bfloat16), conv_w.astype(jnp.bfloat16),
        window_strides=(1, 1), padding=((1, 1), (1, 1)),
        dimension_numbers=('NCHW', 'OIHW', 'NCHW'),
        preferred_element_type=jnp.float32)
    bias = conv_b.astype(jnp.bfloat16).astype(jnp.float32)
    y = jnp.maximum(y + bias[None, :, None, None], 0.0)
    B = x.shape[0]
    y = y.reshape(B, C_OUT, P, 2, P, 2).max(axis=(3, 5))
    return jnp.dot(y.reshape(B, FEAT), fc_w.T,
                   precision=lax.Precision.HIGHEST) + fc_b


if __name__ == "__main__":
    key = jax.random.PRNGKey(0)
    k1, k2, k3, k4, k5 = jax.random.split(key, 5)
    conv_w = jax.random.normal(k1, (C_OUT, 1, 3, 3), jnp.float32) * 0.1
    conv_b = jax.random.normal(k2, (C_OUT,), jnp.float32) * 0.1
    fc_w = jax.random.normal(k3, (N_CLS, FEAT), jnp.float32) * 0.01
    fc_b = jax.random.normal(k4, (N_CLS,), jnp.float32) * 0.01
    # 128x128 input is forced by the module (fc expects 16*64*64 features).
    x = jax.random.normal(k5, (2, 1, H, W), jnp.float32)

    out = simple_cnn_forward(x, conv_w, conv_b, fc_w, fc_b)
    jax.block_until_ready(out)

    ref = reference_forward(x, conv_w, conv_b, fc_w, fc_b)
    assert out.shape == (2, N_CLS)
    assert jnp.allclose(out, ref, atol=2e-3, rtol=2e-3), (out, ref)

    print("KERNEL_OK")
</pallas_src>

<mosaic_0001>
module attributes {stable_mosaic.version = 11 : i64} {
  func.func @fused_cnn_kernel(%arg0: i32, %arg1: memref<16x10xbf16, #tpu.memory_space<vmem>>, %arg2: memref<2x16x4096xf32, #tpu.memory_space<vmem>>, %arg3: memref<1x2xf32, #tpu.memory_space<vmem>>, %arg4: memref<1x10x16384xbf16, #tpu.memory_space<vmem>>, %arg5: memref<1x1x2xf32, #tpu.memory_space<vmem>>) attributes {dimension_semantics = [#tpu.dimension_semantics<parallel>], iteration_bounds = array<i64: 2>, scalar_prefetch = 0 : i64, scratch_operands = 0 : i64, tpu.core_type = #tpu.core_type<tc>, window_params = [{pipeline_mode = #tpu.pipeline_mode<synchronous>, transform_indices = @transform_0, window_bounds = array<i64: 16, 10>}, {pipeline_mode = #tpu.pipeline_mode<synchronous>, transform_indices = @transform_1, window_bounds = array<i64: 2, 16, 4096>}, {pipeline_mode = #tpu.pipeline_mode<synchronous>, transform_indices = @transform_2, window_bounds = array<i64: 1, 2>}, {transform_indices = @transform_3, window_bounds = array<i64: 1, 10, 16384>}, {transform_indices = @transform_4, window_bounds = array<i64: 1, 1, 2>}]} {
    %c0 = arith.constant 0 : index
    %c0_0 = arith.constant 0 : index
    %0 = vector.load %arg1[%c0, %c0_0] : memref<16x10xbf16, #tpu.memory_space<vmem>>, vector<16x10xbf16>
    %c0_1 = arith.constant 0 : index
    %c0_2 = arith.constant 0 : index
    %c0_3 = arith.constant 0 : index
    %1 = vector.load %arg4[%c0_1, %c0_2, %c0_3] : memref<1x10x16384xbf16, #tpu.memory_space<vmem>>, vector<1x10x4096xbf16>
    %2 = vector.shape_cast %1 : vector<1x10x4096xbf16> to vector<10x4096xbf16>
    %cst = arith.constant dense<0.000000e+00> : vector<16x4096xf32>
    %3 = tpu.matmul %0, %2, %cst {dimension_numbers = #tpu.dot_dimension_numbers<[1], [0], [0], [1], [0, 0, 1, 1], [], []>} : vector<16x10xbf16>, vector<10x4096xbf16>, vector<16x4096xf32> -> vector<16x4096xf32>
    %c0_4 = arith.constant 0 : index
    %c0_5 = arith.constant 0 : index
    %c4096 = arith.constant 4096 : index
    %4 = vector.load %arg4[%c0_4, %c0_5, %c4096] : memref<1x10x16384xbf16, #tpu.memory_space<vmem>>, vector<1x10x4096xbf16>
    %5 = vector.shape_cast %4 : vector<1x10x4096xbf16> to vector<10x4096xbf16>
    %cst_6 = arith.constant dense<0.000000e+00> : vector<16x4096xf32>
    %6 = tpu.matmul %0, %5, %cst_6 {dimension_numbers = #tpu.dot_dimension_numbers<[1], [0], [0], [1], [0, 0, 1, 1], [], []>} : vector<16x10xbf16>, vector<10x4096xbf16>, vector<16x4096xf32> -> vector<16x4096xf32>
    %7 = arith.maximumf %3, %6 : vector<16x4096xf32>
    %c0_7 = arith.constant 0 : index
    %c0_8 = arith.constant 0 : index
    %c8192 = arith.constant 8192 : index
    %8 = vector.load %arg4[%c0_7, %c0_8, %c8192] : memref<1x10x16384xbf16, #tpu.memory_space<vmem>>, vector<1x10x4096xbf16>
    %9 = vector.shape_cast %8 : vector<1x10x4096xbf16> to vector<10x4096xbf16>
    %cst_9 = arith.constant dense<0.000000e+00> : vector<16x4096xf32>
    %10 = tpu.matmul %0, %9, %cst_9 {dimension_numbers = #tpu.dot_dimension_numbers<[1], [0], [0], [1], [0, 0, 1, 1], [], []>} : vector<16x10xbf16>, vector<10x4096xbf16>, vector<16x4096xf32> -> vector<16x4096xf32>
    %11 = arith.maximumf %7, %10 : vector<16x4096xf32>
    %c0_10 = arith.constant 0 : index
    %c0_11 = arith.constant 0 : index
    %c12288 = arith.constant 12288 : index
    %12 = vector.load %arg4[%c0_10, %c0_11, %c12288] : memref<1x10x16384xbf16, #tpu.memory_space<vmem>>, vector<1x10x4096xbf16>
    %13 = vector.shape_cast %12 : vector<1x10x4096xbf16> to vector<10x4096xbf16>
    %cst_12 = arith.constant dense<0.000000e+00> : vector<16x4096xf32>
    %14 = tpu.matmul %0, %13, %cst_12 {dimension_numbers = #tpu.dot_dimension_numbers<[1], [0], [0], [1], [0, 0, 1, 1], [], []>} : vector<16x10xbf16>, vector<10x4096xbf16>, vector<16x4096xf32> -> vector<16x4096xf32>
    %15 = arith.maximumf %11, %14 : vector<16x4096xf32>
    %cst_13 = arith.constant 0.000000e+00 : f32
    %16 = vector.broadcast %cst_13 : f32 to vector<16x4096xf32>
    %17 = arith.maximumf %15, %16 : vector<16x4096xf32>
    %c0_14 = arith.constant 0 : index
    %c0_15 = arith.constant 0 : index
    %c0_16 = arith.constant 0 : index
    %18 = vector.load %arg2[%c0_14, %c0_15, %c0_16] : memref<2x16x4096xf32, #tpu.memory_space<vmem>>, vector<1x16x4096xf32>
    %19 = vector.shape_cast %18 : vector<1x16x4096xf32> to vector<16x4096xf32>
    %c1 = arith.constant 1 : index
    %c0_17 = arith.constant 0 : index
    %c0_18 = arith.constant 0 : index
    %20 = vector.load %arg2[%c1, %c0_17, %c0_18] : memref<2x16x4096xf32, #tpu.memory_space<vmem>>, vector<1x16x4096xf32>
    %21 = vector.shape_cast %20 : vector<1x16x4096xf32> to vector<16x4096xf32>
    %22 = arith.mulf %17, %19 : vector<16x4096xf32>
    %cst_19 = arith.constant dense<0.000000e+00> : vector<16xf32>
    %23 = vector.multi_reduction <add>, %22, %cst_19 [1] : vector<16x4096xf32> to vector<16xf32>
    %24 = vector.shape_cast %23 : vector<16xf32> to vector<16x1xf32>
    %cst_20 = arith.constant dense<0.000000e+00> : vector<1xf32>
    %25 = vector.multi_reduction <add>, %24, %cst_20 [0] : vector<16x1xf32> to vector<1xf32>
    %26 = vector.shape_cast %25 : vector<1xf32> to vector<1x1xf32>
    %27 = arith.mulf %17, %21 : vector<16x4096xf32>
    %cst_21 = arith.constant dense<0.000000e+00> : vector<16xf32>
    %28 = vector.multi_reduction <add>, %27, %cst_21 [1] : vector<16x4096xf32> to vector<16xf32>
    %29 = vector.shape_cast %28 : vector<16xf32> to vector<16x1xf32>
    %cst_22 = arith.constant dense<0.000000e+00> : vector<1xf32>
    %30 = vector.multi_reduction <add>, %29, %cst_22 [0] : vector<16x1xf32> to vector<1xf32>
    %31 = vector.shape_cast %30 : vector<1xf32> to vector<1x1xf32>
    %32 = tpu.concatenate %26, %31 in 1 : vector<1x1xf32>, vector<1x1xf32> -> vector<1x2xf32>
    %c0_23 = arith.constant 0 : index
    %c0_24 = arith.constant 0 : index
    %33 = vector.load %arg3[%c0_23, %c0_24] : memref<1x2xf32, #tpu.memory_space<vmem>>, vector<1x2xf32>
    %34 = arith.addf %32, %33 : vector<1x2xf32>
    %c0_25 = arith.constant 0 : index
    %c0_26 = arith.constant 0 : index
    %c0_27 = arith.constant 0 : index
    %35 = vector.load %arg5[%c0_25, %c0_26, %c0_27] : memref<1x1x2xf32, #tpu.memory_space<vmem>>, vector<1x1x2xf32>
    %36 = vector.shape_cast %35 : vector<1x1x2xf32> to vector<1x2xf32>
    %37 = vector.shape_cast %34 : vector<1x2xf32> to vector<1x1x2xf32>
    tpu.vector_store %arg5[%c0_25, %c0_26, %c0_27], %37 {strides = array<i32>} : memref<1x1x2xf32, #tpu.memory_space<vmem>>, vector<1x1x2xf32>,
    return
  }
  func.func @transform_0(%arg0: i32) -> (i32, i32) {
    %c0_i32 = arith.constant 0 : i32
    %c0_i32_0 = arith.constant 0 : i32
    %c0_i32_1 = arith.constant 0 : i32
    return %c0_i32, %c0_i32_0 : i32, i32
  }
  func.func @transform_1(%arg0: i32) -> (i32, i32, i32) {
    %c0_i32 = arith.constant 0 : i32
    %c0_i32_0 = arith.constant 0 : i32
    %c0_i32_1 = arith.constant 0 : i32
    %c0_i32_2 = arith.constant 0 : i32
    return %c0_i32, %c0_i32_0, %c0_i32_1 : i32, i32, i32
  }
  func.func @transform_2(%arg0: i32) -> (i32, i32) {
    %c0_i32 = arith.constant 0 : i32
    %c0_i32_0 = arith.constant 0 : i32
    %c0_i32_1 = arith.constant 0 : i32
    return %c0_i32, %c0_i32_0 : i32, i32
  }
  func.func @transform_3(%arg0: i32) -> (i32, i32, i32) {
    %c0_i32 = arith.constant 0 : i32
    %c0_i32_0 = arith.constant 0 : i32
    %c0_i32_1 = arith.constant 0 : i32
    return %arg0, %c0_i32, %c0_i32_0 : i32, i32, i32
  }
  func.func @transform_4(%arg0: i32) -> (i32, i32, i32) {
    %c0_i32 = arith.constant 0 : i32
    %c0_i32_0 = arith.constant 0 : i32
    %c0_i32_1 = arith.constant 0 : i32
    return %arg0, %c0_i32, %c0_i32_0 : i32, i32, i32
  }
}

</mosaic_0001>

<llo_original>
// kernel: simple_cnn_forward.1
$region0: #{simple_cnn_forward.1}
  #allocation0 [shape = 'u32[]', space=smem, size = 0x4, offset = 0x4, fixed_abs, tag = 'smem constant byte address 0x4 - core index']
  #allocation1 [shape = 'u32[144,128]{1,0:T(1,128)}', space=vmem, size = 0x12000, scoped, tag = 'internal scratch']
  %s0 = inlined_call_operand.vmem [shape: bf16[16,10], index: 0, kind: input, shape index: {}]
  %s1 = inlined_call_operand.vmem [shape: f32[2,16,4096], index: 1, kind: input, shape index: {}]
  %s2 = inlined_call_operand.vmem [shape: f32[1,2], index: 2, kind: input, shape index: {}]
  %s3 = inlined_call_operand.vmem [shape: bf16[2,10,16384], index: 3, kind: input, shape index: {}]
  %s4 = inlined_call_operand.hbm [shape: f32[2,1,2], index: 4, kind: output, shape index: {}]
  %s5 = sld [smem:[#allocation0]]
  $region49: #{simple_cnn_forward.1} parent=0
    _
  %s7 = ssub.s32 1, %s5
  %s8 = scalar_select 0, %s7, %s5
  $region1: #{simple_cnn_forward.1} parent=0
    #allocation2 [shape = 'u8[1024]{0}', space=vmem, size = 0x400, scoped, tag = 'output window, operand 0']
    #allocation3 [shape = 's32[2]{0}', space=sflag, size = 0x8, scoped, tag = 'scoped memory for simple_cnn_forward.1']
    %9 = vsyncpa [#allocation3], 0
    %s10 = scalar_lea.sflag [#allocation3], 1
    %11 = vsyncpa %s10, 0
    loop: start=0, step=1, limit=4
    $region2: #{simple_cnn_forward.1} parent=1 // loop_pre_header
      _
    $region3: #{simple_cnn_forward.1} parent=1 // loop_header
      %s13 = sphi 0, %s17
      %p14 = scmp.ge.s32.totalorder %s13, 4
      %s21 = sphi 0, %s21
      %s23 = sphi 0, %s21
      %s24 = sphi 0, %s23
      %s38 = sphi 0, %s24
      %s42 = sphi 0, %s42
      %s44 = sphi 0, %s42
      %s45 = sphi 0, %s44
      %s59 = sphi 0, %s45
      %s63 = sphi 0, %s63
      %s65 = sphi 0, %s63
      %s66 = sphi 0, %s65
      %s80 = sphi 0, %s66
      %s86 = sphi 0, %s88
      %s89 = sphi 0, %s86
      %s90 = sphi 0, %s89
      %s106 = sphi 0, %s90
      %s112 = sphi 0, %s114
      %s115 = sphi 0, %s112
      %s116 = sphi 0, %s115
      %s132 = sphi 0, %s116
    $region4: #{simple_cnn_forward.1} parent=1 // loop_header_branch
      %16 = sbr.rel (%p14) target = $region8
    $region5: #{simple_cnn_forward.1} parent=1 // loop_body
      %s18 = ssub.s32 %s13, 1
      %s19 = ssub.s32 %s13, 2
      %s20 = sadd.s32 %s13, 1
      %s22 = sadd.s32 %s21, 1
      %p25 = scmp.eq.s32.totalorder %s13, 1
      %p26 = scmp.ne.s32.totalorder %s21, %s23
      %p27 = scmp.eq.s32.totalorder %s13, 0
      %p28 = por %p26, %p27
      %p29 = scmp.ne.s32.totalorder %s21, %s23
      %p30 = scmp.eq.s32.totalorder %s18, 1
      %p31 = por %p29, %p30
      %p32 = scmp.ne.s32.totalorder %s23, %s24
      %p33 = scmp.eq.s32.totalorder %s18, 0
      %p34 = por %p32, %p33
      %p35 = scmp.ne.s32.totalorder %s23, %s24
      %p36 = scmp.eq.s32.totalorder %s19, 1
      %p37 = por %p35, %p36
      %p39 = scmp.ne.s32.totalorder %s24, %s38
      %p40 = scmp.eq.s32.totalorder %s19, 0
      %p41 = por %p39, %p40
      %s43 = sadd.s32 %s42, 1
      %p46 = scmp.eq.s32.totalorder %s13, 1
      %p47 = scmp.ne.s32.totalorder %s42, %s44
      %p48 = scmp.eq.s32.totalorder %s13, 0
      %p49 = por %p47, %p48
      %p50 = scmp.ne.s32.totalorder %s42, %s44
      %p51 = scmp.eq.s32.totalorder %s18, 1
      %p52 = por %p50, %p51
      %p53 = scmp.ne.s32.totalorder %s44, %s45
      %p54 = scmp.eq.s32.totalorder %s18, 0
      %p55 = por %p53, %p54
      %p56 = scmp.ne.s32.totalorder %s44, %s45
      %p57 = scmp.eq.s32.totalorder %s19, 1
      %p58 = por %p56, %p57
      %p60 = scmp.ne.s32.totalorder %s45, %s59
      %p61 = scmp.eq.s32.totalorder %s19, 0
      %p62 = por %p60, %p61
      %s64 = sadd.s32 %s63, 1
      %p67 = scmp.eq.s32.totalorder %s13, 1
      %p68 = scmp.ne.s32.totalorder %s63, %s65
      %p69 = scmp.eq.s32.totalorder %s13, 0
      %p70 = por %p68, %p69
      %p71 = scmp.ne.s32.totalorder %s63, %s65
      %p72 = scmp.eq.s32.totalorder %s18, 1
      %p73 = por %p71, %p72
      %p74 = scmp.ne.s32.totalorder %s65, %s66
      %p75 = scmp.eq.s32.totalorder %s18, 0
      %p76 = por %p74, %p75
      %p77 = scmp.ne.s32.totalorder %s65, %s66
      %p78 = scmp.eq.s32.totalorder %s19, 1
      %p79 = por %p77, %p78
      %p81 = scmp.ne.s32.totalorder %s66, %s80
      %p82 = scmp.eq.s32.totalorder %s19, 0
      %p83 = por %p81, %p82
      %s84 = ssub.s32 %s13, %s20
      %p85 = scmp.eq.s32.totalorder %s84, 0
      %s87 = sadd.s32 %s86, 1
      %s88 = scalar_select %p85, %s86, %s87
      %p91 = pneg %p85
      %p92 = scmp.eq.s32.totalorder %s13, 1
      %p93 = por %p91, %p92
      %p94 = scmp.ne.s32.totalorder %s86, %s89
      %p95 = scmp.eq.s32.totalorder %s13, 0
      %p96 = por %p94, %p95
      %p97 = scmp.ne.s32.totalorder %s86, %s89
      %p98 = scmp.eq.s32.totalorder %s18, 1
      %p99 = por %p97, %p98
      %p100 = scmp.ne.s32.totalorder %s89, %s90
      %p101 = scmp.eq.s32.totalorder %s18, 0
      %p102 = por %p100, %p101
      %p103 = scmp.ne.s32.totalorder %s89, %s90
      %p104 = scmp.eq.s32.totalorder %s19, 1
      %p105 = por %p103, %p104
      %p107 = scmp.ne.s32.totalorder %s90, %s106
      %p108 = scmp.eq.s32.totalorder %s19, 0
      %p109 = por %p107, %p108
      %s110 = ssub.s32 %s13, %s20
      %p111 = scmp.eq.s32.totalorder %s110, 0
      %s113 = sadd.s32 %s112, 1
      %s114 = scalar_select %p111, %s112, %s113
      %p117 = pneg %p111
      %p118 = scmp.eq.s32.totalorder %s13, 1
      %p119 = por %p117, %p118
      %p120 = scmp.ne.s32.totalorder %s112, %s115
      %p121 = scmp.eq.s32.totalorder %s13, 0
      %p122 = por %p120, %p121
      %p123 = scmp.ne.s32.totalorder %s112, %s115
      %p124 = scmp.eq.s32.totalorder %s18, 1
      %p125 = por %p123, %p124
      %p126 = scmp.ne.s32.totalorder %s115, %s116
      %p127 = scmp.eq.s32.totalorder %s18, 0
      %p128 = por %p126, %p127
      %p129 = scmp.ne.s32.totalorder %s115, %s116
      %p130 = scmp.eq.s32.totalorder %s19, 1
      %p131 = por %p129, %p130
      %p133 = scmp.ne.s32.totalorder %s116, %s132
      %p134 = scmp.eq.s32.totalorder %s19, 0
      %p135 = por %p133, %p134
      %p136 = scmp.le.s32.totalorder 1, %s13
      %p137 = scmp.lt.s32.totalorder %s13, 3
      %p138 = pnand %p136, %p137
      %p139 = pneg %p138
      // Predicated region
      $region9: #{simple_cnn_forward.1} parent=5 // pred_check
        _
      $region10: #{simple_cnn_forward.1} parent=5 // pred_check_branch
        %141 = sbr.rel (%p138) target = $region12
      $region11: #{simple_cnn_forward.1} parent=5 // pred_region
        %s142 = ssub.s32 %s13, 1
        // Predicated region
        $region13: #{simple_cnn_forward.1} parent=11 // pred_check
          %p143 = pneg %p34
        $region14: #{simple_cnn_forward.1} parent=11 // pred_check_branch
          %145 = sbr.rel (%p143) target = $region16
        $region15: #{simple_cnn_forward.1} parent=11 // pred_region
          _
        $region16: #{simple_cnn_forward.1} parent=11 // pred_fallthru
          _
        // Predicated region
        $region17: #{simple_cnn_forward.1} parent=11 // pred_check
          %p146 = pneg %p55
        $region18: #{simple_cnn_forward.1} parent=11 // pred_check_branch
          %148 = sbr.rel (%p146) target = $region20
        $region19: #{simple_cnn_forward.1} parent=11 // pred_region
          _
        $region20: #{simple_cnn_forward.1} parent=11 // pred_fallthru
          _
        // Predicated region
        $region21: #{simple_cnn_forward.1} parent=11 // pred_check
          %p149 = pneg %p76
        $region22: #{simple_cnn_forward.1} parent=11 // pred_check_branch
          %151 = sbr.rel (%p149) target = $region24
        $region23: #{simple_cnn_forward.1} parent=11 // pred_region
          _
        $region24: #{simple_cnn_forward.1} parent=11 // pred_fallthru
          _
      $region12: #{simple_cnn_forward.1} parent=5 // pred_fallthru
        _
      %p152 = scmp.lt.s32.totalorder %s13, 2
      // Predicated region
      $region25: #{simple_cnn_forward.1} parent=5 // pred_check
        %p153 = pneg %p152
      $region26: #{simple_cnn_forward.1} parent=5 // pred_check_branch
        %155 = sbr.rel (%p153) target = $region28
      $region27: #{simple_cnn_forward.1} parent=5 // pred_region
        // Predicated region
        $region29: #{simple_cnn_forward.1} parent=27 // pred_check
          %p156 = pneg %p96
        $region30: #{simple_cnn_forward.1} parent=27 // pred_check_branch
          %158 = sbr.rel (%p156) target = $region32
        $region31: #{simple_cnn_forward.1} parent=27 // pred_region
          %p159 = scmp.lt.s32.totalorder %s13, 1
          %s160 = scalar_select %p159, %s13, 1
          %s161 = smul.addr %s160, 256
          %s162 = smul.addr %s161, 4
          %s163 = scalar_lea.vmem %s3, %s162
        $region32: #{simple_cnn_forward.1} parent=27 // pred_fallthru
          _
      $region28: #{simple_cnn_forward.1} parent=5 // pred_fallthru
        _
      %p164 = scmp.le.s32.totalorder 1, %s13
      %p165 = scmp.lt.s32.totalorder %s13, 3
      %p166 = pnand %p164, %p165
      %p167 = pneg %p166
      // Predicated region
      $region33: #{simple_cnn_forward.1} parent=5 // pred_check
        _
      $region34: #{simple_cnn_forward.1} parent=5 // pred_check_branch
        %169 = sbr.rel (%p166) target = $region36
      $region35: #{simple_cnn_forward.1} parent=5 // pred_region
        %s170 = ssub.s32 %s13, 1
        %p171 = pneg %p34
        %p172 = pneg %p31
        %p173 = pneg %p55
        %p174 = pneg %p52
        %p175 = pneg %p76
        %p176 = pneg %p73
        %p177 = scmp.lt.s32.totalorder %s18, 1
        %s178 = scalar_select %p177, %s18, 1
        %s179 = smul.addr %s178, 256
        %s180 = smul.addr %s179, 4
        %s181 = scalar_lea.vmem %s3, %s180
        %p182 = pneg %p102
        %p183 = pneg %p99
        %p184 = pneg %p128
        %p185 = pneg %p125
        %s186 = sand.u32 %s115, 1
        %s187 = scalar_lea.sflag [#allocation3], %s186
        %s188 = sand.u32 %s115, 1
        %s189 = scalar_lea.vmem [#allocation2], %s188
        %p190 = scmp.lt.s32.totalorder %s18, 1
        %s191 = scalar_select %p190, %s18, 1
        %s192 = smul.addr %s191, 256
        %s193 = smul.addr %s192, 4
        %s194 = scalar_lea.vmem %s3, %s193
        %v196 = vld [vmem:[%s0] sm:$0xf]
        %v197 = vld [vmem:[%s0 + $0x4] sm:$0xf]
        %v198 = vld [vmem:[%s194] sm:$0xff]
        %v199 = vld [vmem:[%s194 + $0x8] sm:$0xff]
        %v200 = vld [vmem:[%s194 + $0x10] sm:$0xff]
        %v201 = vld [vmem:[%s194 + $0x18] sm:$0xff]
        %v202 = vld [vmem:[%s194 + $0x20] sm:$0xff]
        %v203 = vld [vmem:[%s194 + $0x28] sm:$0xff]
        %v204 = vld [vmem:[%s194 + $0x30] sm:$0xff]
        %v205 = vld [vmem:[%s194 + $0x38] sm:$0xff]
        %v206 = vld [vmem:[%s194 + $0x40] sm:$0xff]
        %v207 = vld [vmem:[%s194 + $0x48] sm:$0xff]
        %v208 = vld [vmem:[%s194 + $0x50] sm:$0xff]
        %v209 = vld [vmem:[%s194 + $0x58] sm:$0xff]
        %v210 = vld [vmem:[%s194 + $0x60] sm:$0xff]
        %v211 = vld [vmem:[%s194 + $0x68] sm:$0xff]
        %v212 = vld [vmem:[%s194 + $0x70] sm:$0xff]
        %v213 = vld [vmem:[%s194 + $0x78] sm:$0xff]
        %v214 = vld [vmem:[%s194 + $0x200] sm:$0x11]
        %v215 = vld [vmem:[%s194 + $0x208] sm:$0x11]
        %v216 = vld [vmem:[%s194 + $0x210] sm:$0x11]
        %v217 = vld [vmem:[%s194 + $0x218] sm:$0x11]
        %v218 = vld [vmem:[%s194 + $0x220] sm:$0x11]
        %v219 = vld [vmem:[%s194 + $0x228] sm:$0x11]
        %v220 = vld [vmem:[%s194 + $0x230] sm:$0x11]
        %v221 = vld [vmem:[%s194 + $0x238] sm:$0x11]
        %v222 = vld [vmem:[%s194 + $0x240] sm:$0x11]
        %v223 = vld [vmem:[%s194 + $0x248] sm:$0x11]
        %v224 = vld [vmem:[%s194 + $0x250] sm:$0x11]
        %v225 = vld [vmem:[%s194 + $0x258] sm:$0x11]
        %v226 = vld [vmem:[%s194 + $0x260] sm:$0x11]
        %v227 = vld [vmem:[%s194 + $0x268] sm:$0x11]
        %v228 = vld [vmem:[%s194 + $0x270] sm:$0x11]
        %v229 = vld [vmem:[%s194 + $0x278] sm:$0x11]
        %v232 = vunpack.c.l.b16 %v196
        %v233 = vunpack.c.l.b16 %v197
        %v234 = vpack.c.b16 %v233, %v232
        %v267 = vunpack.c.l.b16 %v198
        %v268 = vunpack.c.h.b16 %v198
        %v269 = vunpack.c.l.b16 %v199
        %v270 = vunpack.c.h.b16 %v199
        %v271 = vunpack.c.l.b16 %v200
        %v272 = vunpack.c.h.b16 %v200
        %v273 = vunpack.c.l.b16 %v201
        %v274 = vunpack.c.h.b16 %v201
        %v275 = vunpack.c.l.b16 %v202
        %v276 = vunpack.c.h.b16 %v202
        %v277 = vunpack.c.l.b16 %v203
        %v278 = vunpack.c.h.b16 %v203
        %v279 = vunpack.c.l.b16 %v204
        %v280 = vunpack.c.h.b16 %v204
        %v281 = vunpack.c.l.b16 %v205
        %v282 = vunpack.c.h.b16 %v205
        %v283 = vunpack.c.l.b16 %v206
        %v284 = vunpack.c.h.b16 %v206
        %v285 = vunpack.c.l.b16 %v207
        %v286 = vunpack.c.h.b16 %v207
        %v287 = vunpack.c.l.b16 %v208
        %v288 = vunpack.c.h.b16 %v208
        %v289 = vunpack.c.l.b16 %v209
        %v290 = vunpack.c.h.b16 %v209
        %v291 = vunpack.c.l.b16 %v210
        %v292 = vunpack.c.h.b16 %v210
        %v293 = vunpack.c.l.b16 %v211
        %v294 = vunpack.c.h.b16 %v211
        %v295 = vunpack.c.l.b16 %v212
        %v296 = vunpack.c.h.b16 %v212
        %v297 = vunpack.c.l.b16 %v213
        %v298 = vunpack.c.h.b16 %v213
        %v299 = vunpack.c.l.b16 %v214
        %v300 = vunpack.c.h.b16 %v214
        %v301 = vunpack.c.l.b16 %v215
        %v302 = vunpack.c.h.b16 %v215
        %v303 = vunpack.c.l.b16 %v216
        %v304 = vunpack.c.h.b16 %v216
        %v305 = vunpack.c.l.b16 %v217
        %v306 = vunpack.c.h.b16 %v217
        %v307 = vunpack.c.l.b16 %v218
        %v308 = vunpack.c.h.b16 %v218
        %v309 = vunpack.c.l.b16 %v219
        %v310 = vunpack.c.h.b16 %v219
        %v311 = vunpack.c.l.b16 %v220
        %v312 = vunpack.c.h.b16 %v220
        %v313 = vunpack.c.l.b16 %v221
        %v314 = vunpack.c.h.b16 %v221
        %v315 = vunpack.c.l.b16 %v222
        %v316 = vunpack.c.h.b16 %v222
        %v317 = vunpack.c.l.b16 %v223
        %v318 = vunpack.c.h.b16 %v223
        %v319 = vunpack.c.l.b16 %v224
        %v320 = vunpack.c.h.b16 %v224
        %v321 = vunpack.c.l.b16 %v225
        %v322 = vunpack.c.h.b16 %v225
        %v323 = vunpack.c.l.b16 %v226
        %v324 = vunpack.c.h.b16 %v226
        %v325 = vunpack.c.l.b16 %v227
        %v326 = vunpack.c.h.b16 %v227
        %v327 = vunpack.c.l.b16 %v228
        %v328 = vunpack.c.h.b16 %v228
        %v329 = vunpack.c.l.b16 %v229
        %v330 = vunpack.c.h.b16 %v229
        %v331 = vpack.c.b16 %v299, %v267
        %v332 = vpack.c.b16 %v300, %v268
        %v333 = vpack.c.b16 %v301, %v269
        %v334 = vpack.c.b16 %v302, %v270
        %v335 = vpack.c.b16 %v303, %v271
        %v336 = vpack.c.b16 %v304, %v272
        %v337 = vpack.c.b16 %v305, %v273
        %v338 = vpack.c.b16 %v306, %v274
        %v339 = vpack.c.b16 %v307, %v275
        %v340 = vpack.c.b16 %v308, %v276
        %v341 = vpack.c.b16 %v309, %v277
        %v342 = vpack.c.b16 %v310, %v278
        %v343 = vpack.c.b16 %v311, %v279
        %v344 = vpack.c.b16 %v312, %v280
        %v345 = vpack.c.b16 %v313, %v281
        %v346 = vpack.c.b16 %v314, %v282
        %v347 = vpack.c.b16 %v315, %v283
        %v348 = vpack.c.b16 %v316, %v284
        %v349 = vpack.c.b16 %v317, %v285
        %v350 = vpack.c.b16 %v318, %v286
        %v351 = vpack.c.b16 %v319, %v287
        %v352 = vpack.c.b16 %v320, %v288
        %v353 = vpack.c.b16 %v321, %v289
        %v354 = vpack.c.b16 %v322, %v290
        %v355 = vpack.c.b16 %v323, %v291
        %v356 = vpack.c.b16 %v324, %v292
        %v357 = vpack.c.b16 %v325, %v293
        %v358 = vpack.c.b16 %v326, %v294
        %v359 = vpack.c.b16 %v327, %v295
        %v360 = vpack.c.b16 %v328, %v296
        %v361 = vpack.c.b16 %v329, %v297
        %v362 = vpack.c.b16 %v330, %v298
        %vm363 = vcmask 80896
        %v365 = vsel %vm363, %v234, 0
        %vm367 = vcmask 1044480
        %v369 = vsel %vm367, %v331, 0
        %v372 = vsel %vm367, %v332, 0
        %v375 = vsel %vm367, %v333, 0
        %v378 = vsel %vm367, %v334, 0
        %v381 = vsel %vm367, %v335, 0
        %v384 = vsel %vm367, %v336, 0
        %v387 = vsel %vm367, %v337, 0
        %v390 = vsel %vm367, %v338, 0
        %v393 = vsel %vm367, %v339, 0
        %v396 = vsel %vm367, %v340, 0
        %v399 = vsel %vm367, %v341, 0
        %v402 = vsel %vm367, %v342, 0
        %v405 = vsel %vm367, %v343, 0
        %v408 = vsel %vm367, %v344, 0
        %v411 = vsel %vm367, %v345, 0
        %v414 = vsel %vm367, %v346, 0
        %v417 = vsel %vm367, %v347, 0
        %v420 = vsel %vm367, %v348, 0
        %v423 = vsel %vm367, %v349, 0
        %v426 = vsel %vm367, %v350, 0
        %v429 = vsel %vm367, %v351, 0
        %v432 = vsel %vm367, %v352, 0
        %v435 = vsel %vm367, %v353, 0
        %v438 = vsel %vm367, %v354, 0
        %v441 = vsel %vm367, %v355, 0
        %v444 = vsel %vm367, %v356, 0
        %v447 = vsel %vm367, %v357, 0
        %v450 = vsel %vm367, %v358, 0
        %v453 = vsel %vm367, %v359, 0
        %v456 = vsel %vm367, %v360, 0
        %v459 = vsel %vm367, %v361, 0
        %v462 = vsel %vm367, %v362, 0
        %464 = vmatprep.subr.bf16.mxu0 %v372
        %465 = vmatpush1.bf16.msra.mxu0 %v369
        %466 = vmatprep.subr.bf16.mxu0 0
        %467 = vmatpush1.bf16.msra.mxu0 0
        %468 = vmatprep.subr.bf16.mxu0 0
        %469 = vmatpush1.bf16.msra.mxu0 0
        %470 = vmatprep.subr.bf16.mxu0 0
        %471 = vmatpush1.bf16.msra.mxu0 0
        %472 = vmatprep.subr.bf16.mxu0 0
        %473 = vmatpush1.bf16.msra.mxu0 0
        %474 = vmatprep.subr.bf16.mxu0 0
        %475 = vmatpush1.bf16.msra.mxu0 0
        %476 = vmatprep.subr.bf16.mxu0 0
        %477 = vmatpush1.bf16.msra.mxu0 0
        %478 = vmatprep.subr.bf16.mxu0 0
        %479 = vmatpush1.bf16.msra.mxu0 0
        %480 = vmatprep.subr.bf16.mxu0 0
        %481 = vmatpush1.bf16.msra.mxu0 0
        %482 = vmatprep.subr.bf16.mxu0 0
        %483 = vmatpush1.bf16.msra.mxu0 0
        %484 = vmatprep.subr.bf16.mxu0 0
        %485 = vmatpush1.bf16.msra.mxu0 0
        %486 = vmatprep.subr.bf16.mxu0 0
        %487 = vmatpush1.bf16.msra.mxu0 0
        %488 = vmatprep.subr.bf16.mxu0 0
        %489 = vmatpush1.bf16.msra.mxu0 0
        %490 = vmatprep.subr.bf16.mxu0 0
        %491 = vmatpush1.bf16.msra.mxu0 0
        %492 = vmatprep.subr.bf16.mxu0 0
        %493 = vmatpush1.bf16.msra.mxu0 0
        %494 = vmatprep.subr.bf16.mxu0 0
        %495 = vmatpush1.bf16.msra.mxu0 0
        %496 = vmatprep.mubr.bf16.mxu0 0
        %497 = vmatmul.mubr.bf16.gmra.mrb[0].mxu0 %v365
        %v498 = vpop.f32.mrb[0].mxu0
        %v499 = vadd.f32 0.0, %v498
        %v500 = vpop.f32.mrb[0].mxu0
        %v501 = vadd.f32 0.0, %v500
        %v502 = vpop.f32.mrb[0].mxu0
        %v503 = vadd.f32 0.0, %v502
        %v504 = vpop.f32.mrb[0].mxu0
        %v505 = vadd.f32 0.0, %v504
        %506 = vdwg.mxu0
        %507 = vmatprep.subr.bf16.mxu0 %v378
        %508 = vmatpush1.bf16.msra.mxu0 %v375
        %509 = vmatprep.subr.bf16.mxu0 0
        %510 = vmatpush1.bf16.msra.mxu0 0
        %511 = vmatprep.subr.bf16.mxu0 0
        %512 = vmatpush1.bf16.msra.mxu0 0
        %513 = vmatprep.subr.bf16.mxu0 0
        %514 = vmatpush1.bf16.msra.mxu0 0
        %515 = vmatprep.subr.bf16.mxu0 0
        %516 = vmatpush1.bf16.msra.mxu0 0
        %517 = vmatprep.subr.bf16.mxu0 0
        %518 = vmatpush1.bf16.msra.mxu0 0
        %519 = vmatprep.subr.bf16.mxu0 0
        %520 = vmatpush1.bf16.msra.mxu0 0
        %521 = vmatprep.subr.bf16.mxu0 0
        %522 = vmatpush1.bf16.msra.mxu0 0
        %523 = vmatprep.subr.bf16.mxu0 0
        %524 = vmatpush1.bf16.msra.mxu0 0
        %525 = vmatprep.subr.bf16.mxu0 0
        %526 = vmatpush1.bf16.msra.mxu0 0
        %527 = vmatprep.subr.bf16.mxu0 0
        %528 = vmatpush1.bf16.msra.mxu0 0
        %529 = vmatprep.subr.bf16.mxu0 0
        %530 = vmatpush1.bf16.msra.mxu0 0
        %531 = vmatprep.subr.bf16.mxu0 0
        %532 = vmatpush1.bf16.msra.mxu0 0
        %533 = vmatprep.subr.bf16.mxu0 0
        %534 = vmatpush1.bf16.msra.mxu0 0
        %535 = vmatprep.subr.bf16.mxu0 0
        %536 = vmatpush1.bf16.msra.mxu0 0
        %537 = vmatprep.subr.bf16.mxu0 0
        %538 = vmatpush1.bf16.msra.mxu0 0
        %539 = vmatprep.mubr.bf16.mxu0 0
        %540 = vmatmul.mubr.bf16.gmra.mrb[0].mxu0 %v365
        %v541 = vpop.f32.mrb[0].mxu0
        %v542 = vadd.f32 0.0, %v541
        %v543 = vpop.f32.mrb[0].mxu0
        %v544 = vadd.f32 0.0, %v543
        %v545 = vpop.f32.mrb[0].mxu0
        %v546 = vadd.f32 0.0, %v545
        %v547 = vpop.f32.mrb[0].mxu0
        %v548 = vadd.f32 0.0, %v547
        %549 = vdwg.mxu0
        %550 = vmatprep.subr.bf16.mxu0 %v384
        %551 = vmatpush1.bf16.msra.mxu0 %v381
        %552 = vmatprep.subr.bf16.mxu0 0
        %553 = vmatpush1.bf16.msra.mxu0 0
        %554 = vmatprep.subr.bf16.mxu0 0
        %555 = vmatpush1.bf16.msra.mxu0 0
        %556 = vmatprep.subr.bf16.mxu0 0
        %557 = vmatpush1.bf16.msra.mxu0 0
        %558 = vmatprep.subr.bf16.mxu0 0
        %559 = vmatpush1.bf16.msra.mxu0 0
        %560 = vmatprep.subr.bf16.mxu0 0
        %561 = vmatpush1.bf16.msra.mxu0 0
        %562 = vmatprep.subr.bf16.mxu0 0
        %563 = vmatpush1.bf16.msra.mxu0 0
        %564 = vmatprep.subr.bf16.mxu0 0
        %565 = vmatpush1.bf16.msra.mxu0 0
        %566 = vmatprep.subr.bf16.mxu0 0
        %567 = vmatpush1.bf16.msra.mxu0 0
        %568 = vmatprep.subr.bf16.mxu0 0
        %569 = vmatpush1.bf16.msra.mxu0 0
        %570 = vmatprep.subr.bf16.mxu0 0
        %571 = vmatpush1.bf16.msra.mxu0 0
        %572 = vmatprep.subr.bf16.mxu0 0
        %573 = vmatpush1.bf16.msra.mxu0 0
        %574 = vmatprep.subr.bf16.mxu0 0
        %575 = vmatpush1.bf16.msra.mxu0 0
        %576 = vmatprep.subr.bf16.mxu0 0
        %577 = vmatpush1.bf16.msra.mxu0 0
        %578 = vmatprep.subr.bf16.mxu0 0
        %579 = vmatpush1.bf16.msra.mxu0 0
        %580 = vmatprep.subr.bf16.mxu0 0
        %581 = vmatpush1.bf16.msra.mxu0 0
        %582 = vmatprep.mubr.bf16.mxu0 0
        %583 = vmatmul.mubr.bf16.gmra.mrb[0].mxu0 %v365
        %v584 = vpop.f32.mrb[0].mxu0
        %v585 = vadd.f32 0.0, %v584
        %v586 = vpop.f32.mrb[0].mxu0
        %v587 = vadd.f32 0.0, %v586
        %v588 = vpop.f32.mrb[0].mxu0
        %v589 = vadd.f32 0.0, %v588
        %v590 = vpop.f32.mrb[0].mxu0
        %v591 = vadd.f32 0.0, %v590
        %592 = vdwg.mxu0
        %593 = vmatprep.subr.bf16.mxu0 %v390
        %594 = vmatpush1.bf16.msra.mxu0 %v387
        %595 = vmatprep.subr.bf16.mxu0 0
        %596 = vmatpush1.bf16.msra.mxu0 0
        %597 = vmatprep.subr.bf16.mxu0 0
        %598 = vmatpush1.bf16.msra.mxu0 0
        %599 = vmatprep.subr.bf16.mxu0 0
        %600 = vmatpush1.bf16.msra.mxu0 0
        %601 = vmatprep.subr.bf16.mxu0 0
        %602 = vmatpush1.bf16.msra.mxu0 0
        %603 = vmatprep.subr.bf16.mxu0 0
        %604 = vmatpush1.bf16.msra.mxu0 0
        %605 = vmatprep.subr.bf16.mxu0 0
        %606 = vmatpush1.bf16.msra.mxu0 0
        %607 = vmatprep.subr.bf16.mxu0 0
        %608 = vmatpush1.bf16.msra.mxu0 0
        %609 = vmatprep.subr.bf16.mxu0 0
        %610 = vmatpush1.bf16.msra.mxu0 0
        %611 = vmatprep.subr.bf16.mxu0 0
        %612 = vmatpush1.bf16.msra.mxu0 0
        %613 = vmatprep.subr.bf16.mxu0 0
        %614 = vmatpush1.bf16.msra.mxu0 0
        %615 = vmatprep.subr.bf16.mxu0 0
        %616 = vmatpush1.bf16.msra.mxu0 0
        %617 = vmatprep.subr.bf16.mxu0 0
        %618 = vmatpush1.bf16.msra.mxu0 0
        %619 = vmatprep.subr.bf16.mxu0 0
        %620 = vmatpush1.bf16.msra.mxu0 0
        %621 = vmatprep.subr.bf16.mxu0 0
        %622 = vmatpush1.bf16.msra.mxu0 0
        %623 = vmatprep.subr.bf16.mxu0 0
        %624 = vmatpush1.bf16.msra.mxu0 0
        %625 = vmatprep.mubr.bf16.mxu0 0
        %626 = vmatmul.mubr.bf16.gmra.mrb[0].mxu0 %v365
        %v627 = vpop.f32.mrb[0].mxu0
        %v628 = vadd.f32 0.0, %v627
        %v629 = vpop.f32.mrb[0].mxu0
        %v630 = vadd.f32 0.0, %v629
        %v631 = vpop.f32.mrb[0].mxu0
        %v632 = vadd.f32 0.0, %v631
        %v633 = vpop.f32.mrb[0].mxu0
        %v634 = vadd.f32 0.0, %v633
        %635 = vdwg.mxu0
        %636 = vmatprep.subr.bf16.mxu0 %v396
        %637 = vmatpush1.bf16.msra.mxu0 %v393
        %638 = vmatprep.subr.bf16.mxu0 0
        %639 = vmatpush1.bf16.msra.mxu0 0
        %640 = vmatprep.subr.bf16.mxu0 0
        %641 = vmatpush1.bf16.msra.mxu0 0
        %642 = vmatprep.subr.bf16.mxu0 0
        %643 = vmatpush1.bf16.msra.mxu0 0
        %644 = vmatprep.subr.bf16.mxu0 0
        %645 = vmatpush1.bf16.msra.mxu0 0
        %646 = vmatprep.subr.bf16.mxu0 0
        %647 = vmatpush1.bf16.msra.mxu0 0
        %648 = vmatprep.subr.bf16.mxu0 0
        %649 = vmatpush1.bf16.msra.mxu0 0
        %650 = vmatprep.subr.bf16.mxu0 0
        %651 = vmatpush1.bf16.msra.mxu0 0
        %652 = vmatprep.subr.bf16.mxu0 0
        %653 = vmatpush1.bf16.msra.mxu0 0
        %654 = vmatprep.subr.bf16.mxu0 0
        %655 = vmatpush1.bf16.msra.mxu0 0
        %656 = vmatprep.subr.bf16.mxu0 0
        %657 = vmatpush1.bf16.msra.mxu0 0
        %658 = vmatprep.subr.bf16.mxu0 0
        %659 = vmatpush1.bf16.msra.mxu0 0
        %660 = vmatprep.subr.bf16.mxu0 0
        %661 = vmatpush1.bf16.msra.mxu0 0
        %662 = vmatprep.subr.bf16.mxu0 0
        %663 = vmatpush1.bf16.msra.mxu0 0
        %664 = vmatprep.subr.bf16.mxu0 0
        %665 = vmatpush1.bf16.msra.mxu0 0
        %666 = vmatprep.subr.bf16.mxu0 0
        %667 = vmatpush1.bf16.msra.mxu0 0
        %668 = vmatprep.mubr.bf16.mxu0 0
        %669 = vmatmul.mubr.bf16.gmra.mrb[0].mxu0 %v365
        %v670 = vpop.f32.mrb[0].mxu0
        %v671 = vadd.f32 0.0, %v670
        %v672 = vpop.f32.mrb[0].mxu0
        %v673 = vadd.f32 0.0, %v672
        %v674 = vpop.f32.mrb[0].mxu0
        %v675 = vadd.f32 0.0, %v674
        %v676 = vpop.f32.mrb[0].mxu0
        %v677 = vadd.f32 0.0, %v676
        %678 = vdwg.mxu0
        %679 = vmatprep.subr.bf16.mxu0 %v402
        %680 = vmatpush1.bf16.msra.mxu0 %v399
        %681 = vmatprep.subr.bf16.mxu0 0
        %682 = vmatpush1.bf16.msra.mxu0 0
        %683 = vmatprep.subr.bf16.mxu0 0
        %684 = vmatpush1.bf16.msra.mxu0 0
        %685 = vmatprep.subr.bf16.mxu0 0
        %686 = vmatpush1.bf16.msra.mxu0 0
        %687 = vmatprep.subr.bf16.mxu0 0
        %688 = vmatpush1.bf16.msra.mxu0 0
        %689 = vmatprep.subr.bf16.mxu0 0
        %690 = vmatpush1.bf16.msra.mxu0 0
        %691 = vmatprep.subr.bf16.mxu0 0
        %692 = vmatpush1.bf16.msra.mxu0 0
        %693 = vmatprep.subr.bf16.mxu0 0
        %694 = vmatpush1.bf16.msra.mxu0 0
        %695 = vmatprep.subr.bf16.mxu0 0
        %696 = vmatpush1.bf16.msra.mxu0 0
        %697 = vmatprep.subr.bf16.mxu0 0
        %698 = vmatpush1.bf16.msra.mxu0 0
        %699 = vmatprep.subr.bf16.mxu0 0
        %700 = vmatpush1.bf16.msra.mxu0 0
        %701 = vmatprep.subr.bf16.mxu0 0
        %702 = vmatpush1.bf16.msra.mxu0 0
        %703 = vmatprep.subr.bf16.mxu0 0
        %704 = vmatpush1.bf16.msra.mxu0 0
        %705 = vmatprep.subr.bf16.mxu0 0
        %706 = vmatpush1.bf16.msra.mxu0 0
        %707 = vmatprep.subr.bf16.mxu0 0
        %708 = vmatpush1.bf16.msra.mxu0 0
        %709 = vmatprep.subr.bf16.mxu0 0
        %710 = vmatpush1.bf16.msra.mxu0 0
        %711 = vmatprep.mubr.bf16.mxu0 0
        %712 = vmatmul.mubr.bf16.gmra.mrb[0].mxu0 %v365
        %v713 = vpop.f32.mrb[0].mxu0
        %v714 = vadd.f32 0.0, %v713
        %v715 = vpop.f32.mrb[0].mxu0
        %v716 = vadd.f32 0.0, %v715
        %v717 = vpop.f32.mrb[0].mxu0
        %v718 = vadd.f32 0.0, %v717
        %v719 = vpop.f32.mrb[0].mxu0
        %v720 = vadd.f32 0.0, %v719
        %721 = vdwg.mxu0
        %722 = vmatprep.subr.bf16.mxu0 %v408
        %723 = vmatpush1.bf16.msra.mxu0 %v405
        %724 = vmatprep.subr.bf16.mxu0 0
        %725 = vmatpush1.bf16.msra.mxu0 0
        %726 = vmatprep.subr.bf16.mxu0 0
        %727 = vmatpush1.bf16.msra.mxu0 0
        %728 = vmatprep.subr.bf16.mxu0 0
        %729 = vmatpush1.bf16.msra.mxu0 0
        %730 = vmatprep.subr.bf16.mxu0 0
        %731 = vmatpush1.bf16.msra.mxu0 0
        %732 = vmatprep.subr.bf16.mxu0 0
        %733 = vmatpush1.bf16.msra.mxu0 0
        %734 = vmatprep.subr.bf16.mxu0 0
        %735 = vmatpush1.bf16.msra.mxu0 0
        %736 = vmatprep.subr.bf16.mxu0 0
        %737 = vmatpush1.bf16.msra.mxu0 0
        %738 = vmatprep.subr.bf16.mxu0 0
        %739 = vmatpush1.bf16.msra.mxu0 0
        %740 = vmatprep.subr.bf16.mxu0 0
        %741 = vmatpush1.bf16.msra.mxu0 0
        %742 = vmatprep.subr.bf16.mxu0 0
        %743 = vmatpush1.bf16.msra.mxu0 0
        %744 = vmatprep.subr.bf16.mxu0 0
        %745 = vmatpush1.bf16.msra.mxu0 0
        %746 = vmatprep.subr.bf16.mxu0 0
        %747 = vmatpush1.bf16.msra.mxu0 0
        %748 = vmatprep.subr.bf16.mxu0 0
        %749 = vmatpush1.bf16.msra.mxu0 0
        %750 = vmatprep.subr.bf16.mxu0 0
        %751 = vmatpush1.bf16.msra.mxu0 0
        %752 = vmatprep.subr.bf16.mxu0 0
        %753 = vmatpush1.bf16.msra.mxu0 0
        %754 = vmatprep.mubr.bf16.mxu0 0
        %755 = vmatmul.mubr.bf16.gmra.mrb[0].mxu0 %v365
        %v756 = vpop.f32.mrb[0].mxu0
        %v757 = vadd.f32 0.0, %v756
        %v758 = vpop.f32.mrb[0].mxu0
        %v759 = vadd.f32 0.0, %v758
        %v760 = vpop.f32.mrb[0].mxu0
        %v761 = vadd.f32 0.0, %v760
        %v762 = vpop.f32.mrb[0].mxu0
        %v763 = vadd.f32 0.0, %v762
        %764 = vdwg.mxu0
        %765 = vmatprep.subr.bf16.mxu0 %v414
        %766 = vmatpush1.bf16.msra.mxu0 %v411
        %767 = vmatprep.subr.bf16.mxu0 0
        %768 = vmatpush1.bf16.msra.mxu0 0
        %769 = vmatprep.subr.bf16.mxu0 0
        %770 = vmatpush1.bf16.msra.mxu0 0
        %771 = vmatprep.subr.bf16.mxu0 0
        %772 = vmatpush1.bf16.msra.mxu0 0
        %773 = vmatprep.subr.bf16.mxu0 0
        %774 = vmatpush1.bf16.msra.mxu0 0
        %775 = vmatprep.subr.bf16.mxu0 0
        %776 = vmatpush1.bf16.msra.mxu0 0
        %777 = vmatprep.subr.bf16.mxu0 0
        %778 = vmatpush1.bf16.msra.mxu0 0
        %779 = vmatprep.subr.bf16.mxu0 0
        %780 = vmatpush1.bf16.msra.mxu0 0
        %781 = vmatprep.subr.bf16.mxu0 0
        %782 = vmatpush1.bf16.msra.mxu0 0
        %783 = vmatprep.subr.bf16.mxu0 0
        %784 = vmatpush1.bf16.msra.mxu0 0
        %785 = vmatprep.subr.bf16.mxu0 0
        %786 = vmatpush1.bf16.msra.mxu0 0
        %787 = vmatprep.subr.bf16.mxu0 0
        %788 = vmatpush1.bf16.msra.mxu0 0
        %789 = vmatprep.subr.bf16.mxu0 0
        %790 = vmatpush1.bf16.msra.mxu0 0
        %791 = vmatprep.subr.bf16.mxu0 0
        %792 = vmatpush1.bf16.msra.mxu0 0
        %793 = vmatprep.subr.bf16.mxu0 0
        %794 = vmatpush1.bf16.msra.mxu0 0
        %795 = vmatprep.subr.bf16.mxu0 0
        %796 = vmatpush1.bf16.msra.mxu0 0
        %797 = vmatprep.mubr.bf16.mxu0 0
        %798 = vmatmul.mubr.bf16.gmra.mrb[0].mxu0 %v365
        %v799 = vpop.f32.mrb[0].mxu0
        %v800 = vadd.f32 0.0, %v799
        %v801 = vpop.f32.mrb[0].mxu0
        %v802 = vadd.f32 0.0, %v801
        %v803 = vpop.f32.mrb[0].mxu0
        %v804 = vadd.f32 0.0, %v803
        %v805 = vpop.f32.mrb[0].mxu0
        %v806 = vadd.f32 0.0, %v805
        %807 = vdwg.mxu0
        %808 = vmatprep.subr.bf16.mxu0 %v420
        %809 = vmatpush1.bf16.msra.mxu0 %v417
        %810 = vmatprep.subr.bf16.mxu0 0
        %811 = vmatpush1.bf16.msra.mxu0 0
        %812 = vmatprep.subr.bf16.mxu0 0
        %813 = vmatpush1.bf16.msra.mxu0 0
        %814 = vmatprep.subr.bf16.mxu0 0
        %815 = vmatpush1.bf16.msra.mxu0 0
        %816 = vmatprep.subr.bf16.mxu0 0
        %817 = vmatpush1.bf16.msra.mxu0 0
        %818 = vmatprep.subr.bf16.mxu0 0
        %819 = vmatpush1.bf16.msra.mxu0 0
        %820 = vmatprep.subr.bf16.mxu0 0
        %821 = vmatpush1.bf16.msra.mxu0 0
        %822 = vmatprep.subr.bf16.mxu0 0
        %823 = vmatpush1.bf16.msra.mxu0 0
        %824 = vmatprep.subr.bf16.mxu0 0
        %825 = vmatpush1.bf16.msra.mxu0 0
        %826 = vmatprep.subr.bf16.mxu0 0
        %827 = vmatpush1.bf16.msra.mxu0 0
        %828 = vmatprep.subr.bf16.mxu0 0
        %829 = vmatpush1.bf16.msra.mxu0 0
        %830 = vmatprep.subr.bf16.mxu0 0
        %831 = vmatpush1.bf16.msra.mxu0 0
        %832 = vmatprep.subr.bf16.mxu0 0
        %833 = vmatpush1.bf16.msra.mxu0 0
        %834 = vmatprep.subr.bf16.mxu0 0
        %835 = vmatpush1.bf16.msra.mxu0 0
        %836 = vmatprep.subr.bf16.mxu0 0
        %837 = vmatpush1.bf16.msra.mxu0 0
        %838 = vmatprep.subr.bf16.mxu0 0
        %839 = vmatpush1.bf16.msra.mxu0 0
        %840 = vmatprep.mubr.bf16.mxu0 0
        %841 = vmatmul.mubr.bf16.gmra.mrb[0].mxu0 %v365
        %v842 = vpop.f32.mrb[0].mxu0
        %v843 = vadd.f32 0.0, %v842
        %v844 = vpop.f32.mrb[0].mxu0
        %v845 = vadd.f32 0.0, %v844
        %v846 = vpop.f32.mrb[0].mxu0
        %v847 = vadd.f32 0.0, %v846
        %v848 = vpop.f32.mrb[0].mxu0
        %v849 = vadd.f32 0.0, %v848
        %850 = vdwg.mxu0
        %851 = vmatprep.subr.bf16.mxu0 %v426
        %852 = vmatpush1.bf16.msra.mxu0 %v423
        %853 = vmatprep.subr.bf16.mxu0 0
        %854 = vmatpush1.bf16.msra.mxu0 0
        %855 = vmatprep.subr.bf16.mxu0 0
        %856 = vmatpush1.bf16.msra.mxu0 0
        %857 = vmatprep.subr.bf16.mxu0 0
        %858 = vmatpush1.bf16.msra.mxu0 0
        %859 = vmatprep.subr.bf16.mxu0 0
        %860 = vmatpush1.bf16.msra.mxu0 0
        %861 = vmatprep.subr.bf16.mxu0 0
        %862 = vmatpush1.bf16.msra.mxu0 0
        %863 = vmatprep.subr.bf16.mxu0 0
        %864 = vmatpush1.bf16.msra.mxu0 0
        %865 = vmatprep.subr.bf16.mxu0 0
        %866 = vmatpush1.bf16.msra.mxu0 0
        %867 = vmatprep.subr.bf16.mxu0 0
        %868 = vmatpush1.bf16.msra.mxu0 0
        %869 = vmatprep.subr.bf16.mxu0 0
        %870 = vmatpush1.bf16.msra.mxu0 0
        %871 = vmatprep.subr.bf16.mxu0 0
        %872 = vmatpush1.bf16.msra.mxu0 0
        %873 = vmatprep.subr.bf16.mxu0 0
        %874 = vmatpush1.bf16.msra.mxu0 0
        %875 = vmatprep.subr.bf16.mxu0 0
        %876 = vmatpush1.bf16.msra.mxu0 0
        %877 = vmatprep.subr.bf16.mxu0 0
        %878 = vmatpush1.bf16.msra.mxu0 0
        %879 = vmatprep.subr.bf16.mxu0 0
        %880 = vmatpush1.bf16.msra.mxu0 0
        %881 = vmatprep.subr.bf16.mxu0 0
        %882 = vmatpush1.bf16.msra.mxu0 0
        %883 = vmatprep.mubr.bf16.mxu0 0
        %884 = vmatmul.mubr.bf16.gmra.mrb[0].mxu0 %v365
        %v885 = vpop.f32.mrb[0].mxu0
        %v886 = vadd.f32 0.0, %v885
        %v887 = vpop.f32.mrb[0].mxu0
        %v888 = vadd.f32 0.0, %v887
        %v889 = vpop.f32.mrb[0].mxu0
        %v890 = vadd.f32 0.0, %v889
        %v891 = vpop.f32.mrb[0].mxu0
        %v892 = vadd.f32 0.0, %v891
        %893 = vdwg.mxu0
        %894 = vmatprep.subr.bf16.mxu0 %v432
        %895 = vmatpush1.bf16.msra.mxu0 %v429
        %896 = vmatprep.subr.bf16.mxu0 0
        %897 = vmatpush1.bf16.msra.mxu0 0
        %898 = vmatprep.subr.bf16.mxu0 0
        %899 = vmatpush1.bf16.msra.mxu0 0
        %900 = vmatprep.subr.bf16.mxu0 0
        %901 = vmatpush1.bf16.msra.mxu0 0
        %902 = vmatprep.subr.bf16.mxu0 0
        %903 = vmatpush1.bf16.msra.mxu0 0
        %904 = vmatprep.subr.bf16.mxu0 0
        %905 = vmatpush1.bf16.msra.mxu0 0
        %906 = vmatprep.subr.bf16.mxu0 0
        %907 = vmatpush1.bf16.msra.mxu0 0
        %908 = vmatprep.subr.bf16.mxu0 0
        %909 = vmatpush1.bf16.msra.mxu0 0
        %910 = vmatprep.subr.bf16.mxu0 0
        %911 = vmatpush1.bf16.msra.mxu0 0
        %912 = vmatprep.subr.bf16.mxu0 0
        %913 = vmatpush1.bf16.msra.mxu0 0
        %914 = vmatprep.subr.bf16.mxu0 0
        %915 = vmatpush1.bf16.msra.mxu0 0
        %916 = vmatprep.subr.bf16.mxu0 0
        %917 = vmatpush1.bf16.msra.mxu0 0
        %918 = vmatprep.subr.bf16.mxu0 0
        %919 = vmatpush1.bf16.msra.mxu0 0
        %920 = vmatprep.subr.bf16.mxu0 0
        %921 = vmatpush1.bf16.msra.mxu0 0
        %922 = vmatprep.subr.bf16.mxu0 0
        %923 = vmatpush1.bf16.msra.mxu0 0
        %924 = vmatprep.subr.bf16.mxu0 0
        %925 = vmatpush1.bf16.msra.mxu0 0
        %926 = vmatprep.mubr.bf16.mxu0 0
        %927 = vmatmul.mubr.bf16.gmra.mrb[0].mxu0 %v365
        %v928 = vpop.f32.mrb[0].mxu0
        %v929 = vadd.f32 0.0, %v928
        %v930 = vpop.f32.mrb[0].mxu0
        %v931 = vadd.f32 0.0, %v930
        %v932 = vpop.f32.mrb[0].mxu0
        %v933 = vadd.f32 0.0, %v932
        %v934 = vpop.f32.mrb[0].mxu0
        %v935 = vadd.f32 0.0, %v934
        %936 = vdwg.mxu0
        %937 = vmatprep.subr.bf16.mxu0 %v438
        %938 = vmatpush1.bf16.msra.mxu0 %v435
        %939 = vmatprep.subr.bf16.mxu0 0
        %940 = vmatpush1.bf16.msra.mxu0 0
        %941 = vmatprep.subr.bf16.mxu0 0
        %942 = vmatpush1.bf16.msra.mxu0 0
        %943 = vmatprep.subr.bf16.mxu0 0
        %944 = vmatpush1.bf16.msra.mxu0 0
        %945 = vmatprep.subr.bf16.mxu0 0
        %946 = vmatpush1.bf16.msra.mxu0 0
        %947 = vmatprep.subr.bf16.mxu0 0
        %948 = vmatpush1.bf16.msra.mxu0 0
        %949 = vmatprep.subr.bf16.mxu0 0
        %950 = vmatpush1.bf16.msra.mxu0 0
        %951 = vmatprep.subr.bf16.mxu0 0
        %952 = vmatpush1.bf16.msra.mxu0 0
        %953 = vmatprep.subr.bf16.mxu0 0
        %954 = vmatpush1.bf16.msra.mxu0 0
        %955 = vmatprep.subr.bf16.mxu0 0
        %956 = vmatpush1.bf16.msra.mxu0 0
        %957 = vmatprep.subr.bf16.mxu0 0
        %958 = vmatpush1.bf16.msra.mxu0 0
        %959 = vmatprep.subr.bf16.mxu0 0
        %960 = vmatpush1.bf16.msra.mxu0 0
        %961 = vmatprep.subr.bf16.mxu0 0
        %962 = vmatpush1.bf16.msra.mxu0 0
        %963 = vmatprep.subr.bf16.mxu0 0
        %964 = vmatpush1.bf16.msra.mxu0 0
        %965 = vmatprep.subr.bf16.mxu0 0
        %966 = vmatpush1.bf16.msra.mxu0 0
        %967 = vmatprep.subr.bf16.mxu0 0
        %968 = vmatpush1.bf16.msra.mxu0 0
        %969 = vmatprep.mubr.bf16.mxu0 0
        %970 = vmatmul.mubr.bf16.gmra.mrb[0].mxu0 %v365
        %v971 = vpop.f32.mrb[0].mxu0
        %v972 = vadd.f32 0.0, %v971
        %v973 = vpop.f32.mrb[0].mxu0
        %v974 = vadd.f32 0.0, %v973
        %v975 = vpop.f32.mrb[0].mxu0
        %v976 = vadd.f32 0.0, %v975
        %v977 = vpop.f32.mrb[0].mxu0
        %v978 = vadd.f32 0.0, %v977
        %979 = vdwg.mxu0
        %980 = vmatprep.subr.bf16.mxu0 %v444
        %981 = vmatpush1.bf16.msra.mxu0 %v441
        %982 = vmatprep.subr.bf16.mxu0 0
        %983 = vmatpush1.bf16.msra.mxu0 0
        %984 = vmatprep.subr.bf16.mxu0 0
        %985 = vmatpush1.bf16.msra.mxu0 0
        %986 = vmatprep.subr.bf16.mxu0 0
        %987 = vmatpush1.bf16.msra.mxu0 0
        %988 = vmatprep.subr.bf16.mxu0 0
        %989 = vmatpush1.bf16.msra.mxu0 0
        %990 = vmatprep.subr.bf16.mxu0 0
        %991 = vmatpush1.bf16.msra.mxu0 0
        %992 = vmatprep.subr.bf16.mxu0 0
        %993 = vmatpush1.bf16.msra.mxu0 0
        %994 = vmatprep.subr.bf16.mxu0 0
        %995 = vmatpush1.bf16.msra.mxu0 0
        %996 = vmatprep.subr.bf16.mxu0 0
        %997 = vmatpush1.bf16.msra.mxu0 0
        %998 = vmatprep.subr.bf16.mxu0 0
        %999 = vmatpush1.bf16.msra.mxu0 0
        %1000 = vmatprep.subr.bf16.mxu0 0
        %1001 = vmatpush1.bf16.msra.mxu0 0
        %1002 = vmatprep.subr.bf16.mxu0 0
        %1003 = vmatpush1.bf16.msra.mxu0 0
        %1004 = vmatprep.subr.bf16.mxu0 0
        %1005 = vmatpush1.bf16.msra.mxu0 0
        %1006 = vmatprep.subr.bf16.mxu0 0
        %1007 = vmatpush1.bf16.msra.mxu0 0
        %1008 = vmatprep.subr.bf16.mxu0 0
        %1009 = vmatpush1.bf16.msra.mxu0 0
        %1010 = vmatprep.subr.bf16.mxu0 0
        %1011 = vmatpush1.bf16.msra.mxu0 0
        %1012 = vmatprep.mubr.bf16.mxu0 0
        %1013 = vmatmul.mubr.bf16.gmra.mrb[0].mxu0 %v365
        %v1014 = vpop.f32.mrb[0].mxu0
        %v1015 = vadd.f32 0.0, %v1014
        %v1016 = vpop.f32.mrb[0].mxu0
        %v1017 = vadd.f32 0.0, %v1016
        %v1018 = vpop.f32.mrb[0].mxu0
        %v1019 = vadd.f32 0.0, %v1018
        %v1020 = vpop.f32.mrb[0].mxu0
        %v1021 = vadd.f32 0.0, %v1020
        %1022 = vdwg.mxu0
        %1023 = vmatprep.subr.bf16.mxu0 %v450
        %1024 = vmatpush1.bf16.msra.mxu0 %v447
        %1025 = vmatprep.subr.bf16.mxu0 0
        %1026 = vmatpush1.bf16.msra.mxu0 0
        %1027 = vmatprep.subr.bf16.mxu0 0
        %1028 = vmatpush1.bf16.msra.mxu0 0
        %1029 = vmatprep.subr.bf16.mxu0 0
        %1030 = vmatpush1.bf16.msra.mxu0 0
        %1031 = vmatprep.subr.bf16.mxu0 0
        %1032 = vmatpush1.bf16.msra.mxu0 0
        %1033 = vmatprep.subr.bf16.mxu0 0
        %1034 = vmatpush1.bf16.msra.mxu0 0
        %1035 = vmatprep.subr.bf16.mxu0 0
        %1036 = vmatpush1.bf16.msra.mxu0 0
        %1037 = vmatprep.subr.bf16.mxu0 0
        %1038 = vmatpush1.bf16.msra.mxu0 0
        %1039 = vmatprep.subr.bf16.mxu0 0
        %1040 = vmatpush1.bf16.msra.mxu0 0
        %1041 = vmatprep.subr.bf16.mxu0 0
        %1042 = vmatpush1.bf16.msra.mxu0 0
        %1043 = vmatprep.subr.bf16.mxu0 0
        %1044 = vmatpush1.bf16.msra.mxu0 0
        %1045 = vmatprep.subr.bf16.mxu0 0
        %1046 = vmatpush1.bf16.msra.mxu0 0
        %1047 = vmatprep.subr.bf16.mxu0 0
        %1048 = vmatpush1.bf16.msra.mxu0 0
        %1049 = vmatprep.subr.bf16.mxu0 0
        %1050 = vmatpush1.bf16.msra.mxu0 0
        %1051 = vmatprep.subr.bf16.mxu0 0
        %1052 = vmatpush1.bf16.msra.mxu0 0
        %1053 = vmatprep.subr.bf16.mxu0 0
        %1054 = vmatpush1.bf16.msra.mxu0 0
        %1055 = vmatprep.mubr.bf16.mxu0 0
        %1056 = vmatmul.mubr.bf16.gmra.mrb[0].mxu0 %v365
        %v1057 = vpop.f32.mrb[0].mxu0
        %v1058 = vadd.f32 0.0, %v1057
        %v1059 = vpop.f32.mrb[0].mxu0
        %v1060 = vadd.f32 0.0, %v1059
        %v1061 = vpop.f32.mrb[0].mxu0
        %v1062 = vadd.f32 0.0, %v1061
        %v1063 = vpop.f32.mrb[0].mxu0
        %v1064 = vadd.f32 0.0, %v1063
        %1065 = vdwg.mxu0
        %1066 = vmatprep.subr.bf16.mxu0 %v456
        %1067 = vmatpush1.bf16.msra.mxu0 %v453
        %1068 = vmatprep.subr.bf16.mxu0 0
        %1069 = vmatpush1.bf16.msra.mxu0 0
        %1070 = vmatprep.subr.bf16.mxu0 0
        %1071 = vmatpush1.bf16.msra.mxu0 0
        %1072 = vmatprep.subr.bf16.mxu0 0
        %1073 = vmatpush1.bf16.msra.mxu0 0
        %1074 = vmatprep.subr.bf16.mxu0 0
        %1075 = vmatpush1.bf16.msra.mxu0 0
        %1076 = vmatprep.subr.bf16.mxu0 0
        %1077 = vmatpush1.bf16.msra.mxu0 0
        %1078 = vmatprep.subr.bf16.mxu0 0
        %1079 = vmatpush1.bf16.msra.mxu0 0
        %1080 = vmatprep.subr.bf16.mxu0 0
        %1081 = vmatpush1.bf16.msra.mxu0 0
        %1082 = vmatprep.subr.bf16.mxu0 0
        %1083 = vmatpush1.bf16.msra.mxu0 0
        %1084 = vmatprep.subr.bf16.mxu0 0
        %1085 = vmatpush1.bf16.msra.mxu0 0
        %1086 = vmatprep.subr.bf16.mxu0 0
        %1087 = vmatpush1.bf16.msra.mxu0 0
        %1088 = vmatprep.subr.bf16.mxu0 0
        %1089 = vmatpush1.bf16.msra.mxu0 0
        %1090 = vmatprep.subr.bf16.mxu0 0
        %1091 = vmatpush1.bf16.msra.mxu0 0
        %1092 = vmatprep.subr.bf16.mxu0 0
        %1093 = vmatpush1.bf16.msra.mxu0 0
        %1094 = vmatprep.subr.bf16.mxu0 0
        %1095 = vmatpush1.bf16.msra.mxu0 0
        %1096 = vmatprep.subr.bf16.mxu0 0
        %1097 = vmatpush1.bf16.msra.mxu0 0
        %1098 = vmatprep.mubr.bf16.mxu0 0
        %1099 = vmatmul.mubr.bf16.gmra.mrb[0].mxu0 %v365
        %v1100 = vpop.f32.mrb[0].mxu0
        %v1101 = vadd.f32 0.0, %v1100
        %v1102 = vpop.f32.mrb[0].mxu0
        %v1103 = vadd.f32 0.0, %v1102
        %v1104 = vpop.f32.mrb[0].mxu0
        %v1105 = vadd.f32 0.0, %v1104
        %v1106 = vpop.f32.mrb[0].mxu0
        %v1107 = vadd.f32 0.0, %v1106
        %1108 = vdwg.mxu0
        %1109 = vmatprep.subr.bf16.mxu0 %v462
        %1110 = vmatpush1.bf16.msra.mxu0 %v459
        %1111 = vmatprep.subr.bf16.mxu0 0
        %1112 = vmatpush1.bf16.msra.mxu0 0
        %1113 = vmatprep.subr.bf16.mxu0 0
        %1114 = vmatpush1.bf16.msra.mxu0 0
        %1115 = vmatprep.subr.bf16.mxu0 0
        %1116 = vmatpush1.bf16.msra.mxu0 0
        %1117 = vmatprep.subr.bf16.mxu0 0
        %1118 = vmatpush1.bf16.msra.mxu0 0
        %1119 = vmatprep.subr.bf16.mxu0 0
        %1120 = vmatpush1.bf16.msra.mxu0 0
        %1121 = vmatprep.subr.bf16.mxu0 0
        %1122 = vmatpush1.bf16.msra.mxu0 0
        %1123 = vmatprep.subr.bf16.mxu0 0
        %1124 = vmatpush1.bf16.msra.mxu0 0
        %1125 = vmatprep.subr.bf16.mxu0 0
        %1126 = vmatpush1.bf16.msra.mxu0 0
        %1127 = vmatprep.subr.bf16.mxu0 0
        %1128 = vmatpush1.bf16.msra.mxu0 0
        %1129 = vmatprep.subr.bf16.mxu0 0
        %1130 = vmatpush1.bf16.msra.mxu0 0
        %1131 = vmatprep.subr.bf16.mxu0 0
        %1132 = vmatpush1.bf16.msra.mxu0 0
        %1133 = vmatprep.subr.bf16.mxu0 0
        %1134 = vmatpush1.bf16.msra.mxu0 0
        %1135 = vmatprep.subr.bf16.mxu0 0
        %1136 = vmatpush1.bf16.msra.mxu0 0
        %1137 = vmatprep.subr.bf16.mxu0 0
        %1138 = vmatpush1.bf16.msra.mxu0 0
        %1139 = vmatprep.subr.bf16.mxu0 0
        %1140 = vmatpush1.bf16.msra.mxu0 0
        %1141 = vmatprep.mubr.bf16.mxu0 0
        %1142 = vmatmul.mubr.bf16.gmra.mrb[0].mxu0 %v365
        %v1143 = vpop.f32.mrb[0].mxu0
        %v1144 = vadd.f32 0.0, %v1143
        %v1145 = vpop.f32.mrb[0].mxu0
        %v1146 = vadd.f32 0.0, %v1145
        %v1147 = vpop.f32.mrb[0].mxu0
        %v1148 = vadd.f32 0.0, %v1147
        %v1149 = vpop.f32.mrb[0].mxu0
        %v1150 = vadd.f32 0.0, %v1149
        %1151 = vdwg.mxu0
        %v1152 = vld [vmem:[%s194 + $0x80] sm:$0xff]
        %v1153 = vld [vmem:[%s194 + $0x88] sm:$0xff]
        %v1154 = vld [vmem:[%s194 + $0x90] sm:$0xff]
        %v1155 = vld [vmem:[%s194 + $0x98] sm:$0xff]
        %v1156 = vld [vmem:[%s194 + $0xa0] sm:$0xff]
        %v1157 = vld [vmem:[%s194 + $0xa8] sm:$0xff]
        %v1158 = vld [vmem:[%s194 + $0xb0] sm:$0xff]
        %v1159 = vld [vmem:[%s194 + $0xb8] sm:$0xff]
        %v1160 = vld [vmem:[%s194 + $0xc0] sm:$0xff]
        %v1161 = vld [vmem:[%s194 + $0xc8] sm:$0xff]
        %v1162 = vld [vmem:[%s194 + $0xd0] sm:$0xff]
        %v1163 = vld [vmem:[%s194 + $0xd8] sm:$0xff]
        %v1164 = vld [vmem:[%s194 + $0xe0] sm:$0xff]
        %v1165 = vld [vmem:[%s194 + $0xe8] sm:$0xff]
        %v1166 = vld [vmem:[%s194 + $0xf0] sm:$0xff]
        %v1167 = vld [vmem:[%s194 + $0xf8] sm:$0xff]
        %v1168 = vld [vmem:[%s194 + $0x280] sm:$0x11]
        %v1169 = vld [vmem:[%s194 + $0x288] sm:$0x11]
        %v1170 = vld [vmem:[%s194 + $0x290] sm:$0x11]
        %v1171 = vld [vmem:[%s194 + $0x298] sm:$0x11]
        %v1172 = vld [vmem:[%s194 + $0x2a0] sm:$0x11]
        %v1173 = vld [vmem:[%s194 + $0x2a8] sm:$0x11]
        %v1174 = vld [vmem:[%s194 + $0x2b0] sm:$0x11]
        %v1175 = vld [vmem:[%s194 + $0x2b8] sm:$0x11]
        %v1176 = vld [vmem:[%s194 + $0x2c0] sm:$0x11]
        %v1177 = vld [vmem:[%s194 + $0x2c8] sm:$0x11]
        %v1178 = vld [vmem:[%s194 + $0x2d0] sm:$0x11]
        %v1179 = vld [vmem:[%s194 + $0x2d8] sm:$0x11]
        %v1180 = vld [vmem:[%s194 + $0x2e0] sm:$0x11]
        %v1181 = vld [vmem:[%s194 + $0x2e8] sm:$0x11]
        %v1182 = vld [vmem:[%s194 + $0x2f0] sm:$0x11]
        %v1183 = vld [vmem:[%s194 + $0x2f8] sm:$0x11]
        %v1216 = vunpack.c.l.b16 %v1152
        %v1217 = vunpack.c.h.b16 %v1152
        %v1218 = vunpack.c.l.b16 %v1153
        %v1219 = vunpack.c.h.b16 %v1153
        %v1220 = vunpack.c.l.b16 %v1154
        %v1221 = vunpack.c.h.b16 %v1154
        %v1222 = vunpack.c.l.b16 %v1155
        %v1223 = vunpack.c.h.b16 %v1155
        %v1224 = vunpack.c.l.b16 %v1156
        %v1225 = vunpack.c.h.b16 %v1156
        %v1226 = vunpack.c.l.b16 %v1157
        %v1227 = vunpack.c.h.b16 %v1157
        %v1228 = vunpack.c.l.b16 %v1158
        %v1229 = vunpack.c.h.b16 %v1158
        %v1230 = vunpack.c.l.b16 %v1159
        %v1231 = vunpack.c.h.b16 %v1159
        %v1232 = vunpack.c.l.b16 %v1160
        %v1233 = vunpack.c.h.b16 %v1160
        %v1234 = vunpack.c.l.b16 %v1161
        %v1235 = vunpack.c.h.b16 %v1161
        %v1236 = vunpack.c.l.b16 %v1162
        %v1237 = vunpack.c.h.b16 %v1162
        %v1238 = vunpack.c.l.b16 %v1163
        %v1239 = vunpack.c.h.b16 %v1163
        %v1240 = vunpack.c.l.b16 %v1164
        %v1241 = vunpack.c.h.b16 %v1164
        %v1242 = vunpack.c.l.b16 %v1165
        %v1243 = vunpack.c.h.b16 %v1165
        %v1244 = vunpack.c.l.b16 %v1166
        %v1245 = vunpack.c.h.b16 %v1166
        %v1246 = vunpack.c.l.b16 %v1167
        %v1247 = vunpack.c.h.b16 %v1167
        %v1248 = vunpack.c.l.b16 %v1168
        %v1249 = vunpack.c.h.b16 %v1168
        %v1250 = vunpack.c.l.b16 %v1169
        %v1251 = vunpack.c.h.b16 %v1169
        %v1252 = vunpack.c.l.b16 %v1170
        %v1253 = vunpack.c.h.b16 %v1170
        %v1254 = vunpack.c.l.b16 %v1171
        %v1255 = vunpack.c.h.b16 %v1171
        %v1256 = vunpack.c.l.b16 %v1172
        %v1257 = vunpack.c.h.b16 %v1172
        %v1258 = vunpack.c.l.b16 %v1173
        %v1259 = vunpack.c.h.b16 %v1173
        %v1260 = vunpack.c.l.b16 %v1174
        %v1261 = vunpack.c.h.b16 %v1174
        %v1262 = vunpack.c.l.b16 %v1175
        %v1263 = vunpack.c.h.b16 %v1175
        %v1264 = vunpack.c.l.b16 %v1176
        %v1265 = vunpack.c.h.b16 %v1176
        %v1266 = vunpack.c.l.b16 %v1177
        %v1267 = vunpack.c.h.b16 %v1177
        %v1268 = vunpack.c.l.b16 %v1178
        %v1269 = vunpack.c.h.b16 %v1178
        %v1270 = vunpack.c.l.b16 %v1179
        %v1271 = vunpack.c.h.b16 %v1179
        %v1272 = vunpack.c.l.b16 %v1180
        %v1273 = vunpack.c.h.b16 %v1180
        %v1274 = vunpack.c.l.b16 %v1181
        %v1275 = vunpack.c.h.b16 %v1181
        %v1276 = vunpack.c.l.b16 %v1182
        %v1277 = vunpack.c.h.b16 %v1182
        %v1278 = vunpack.c.l.b16 %v1183
        %v1279 = vunpack.c.h.b16 %v1183
        %v1280 = vpack.c.b16 %v1248, %v1216
        %v1281 = vpack.c.b16 %v1249, %v1217
        %v1282 = vpack.c.b16 %v1250, %v1218
        %v1283 = vpack.c.b16 %v1251, %v1219
        %v1284 = vpack.c.b16 %v1252, %v1220
        %v1285 = vpack.c.b16 %v1253, %v1221
        %v1286 = vpack.c.b16 %v1254, %v1222
        %v1287 = vpack.c.b16 %v1255, %v1223
        %v1288 = vpack.c.b16 %v1256, %v1224
        %v1289 = vpack.c.b16 %v1257, %v1225
        %v1290 = vpack.c.b16 %v1258, %v1226
        %v1291 = vpack.c.b16 %v1259, %v1227
        %v1292 = vpack.c.b16 %v1260, %v1228
        %v1293 = vpack.c.b16 %v1261, %v1229
        %v1294 = vpack.c.b16 %v1262, %v1230
        %v1295 = vpack.c.b16 %v1263, %v1231
        %v1296 = vpack.c.b16 %v1264, %v1232
        %v1297 = vpack.c.b16 %v1265, %v1233
        %v1298 = vpack.c.b16 %v1266, %v1234
        %v1299 = vpack.c.b16 %v1267, %v1235
        %v1300 = vpack.c.b16 %v1268, %v1236
        %v1301 = vpack.c.b16 %v1269, %v1237
        %v1302 = vpack.c.b16 %v1270, %v1238
        %v1303 = vpack.c.b16 %v1271, %v1239
        %v1304 = vpack.c.b16 %v1272, %v1240
        %v1305 = vpack.c.b16 %v1273, %v1241
        %v1306 = vpack.c.b16 %v1274, %v1242
        %v1307 = vpack.c.b16 %v1275, %v1243
        %v1308 = vpack.c.b16 %v1276, %v1244
        %v1309 = vpack.c.b16 %v1277, %v1245
        %v1310 = vpack.c.b16 %v1278, %v1246
        %v1311 = vpack.c.b16 %v1279, %v1247
        %v1313 = vsel %vm367, %v1280, 0
        %v1316 = vsel %vm367, %v1281, 0
        %v1319 = vsel %vm367, %v1282, 0
        %v1322 = vsel %vm367, %v1283, 0
        %v1325 = vsel %vm367, %v1284, 0
        %v1328 = vsel %vm367, %v1285, 0
        %v1331 = vsel %vm367, %v1286, 0
        %v1334 = vsel %vm367, %v1287, 0
        %v1337 = vsel %vm367, %v1288, 0
        %v1340 = vsel %vm367, %v1289, 0
        %v1343 = vsel %vm367, %v1290, 0
        %v1346 = vsel %vm367, %v1291, 0
        %v1349 = vsel %vm367, %v1292, 0
        %v1352 = vsel %vm367, %v1293, 0
        %v1355 = vsel %vm367, %v1294, 0
        %v1358 = vsel %vm367, %v1295, 0
        %v1361 = vsel %vm367, %v1296, 0
        %v1364 = vsel %vm367, %v1297, 0
        %v1367 = vsel %vm367, %v1298, 0
        %v1370 = vsel %vm367, %v1299, 0
        %v1373 = vsel %vm367, %v1300, 0
        %v1376 = vsel %vm367, %v1301, 0
        %v1379 = vsel %vm367, %v1302, 0
        %v1382 = vsel %vm367, %v1303, 0
        %v1385 = vsel %vm367, %v1304, 0
        %v1388 = vsel %vm367, %v1305, 0
        %v1391 = vsel %vm367, %v1306, 0
        %v1394 = vsel %vm367, %v1307, 0
        %v1397 = vsel %vm367, %v1308, 0
        %v1400 = vsel %vm367, %v1309, 0
        %v1403 = vsel %vm367, %v1310, 0
        %v1406 = vsel %vm367, %v1311, 0
        %1408 = vmatprep.subr.bf16.mxu0 %v1316
        %1409 = vmatpush1.bf16.msra.mxu0 %v1313
        %1410 = vmatprep.subr.bf16.mxu0 0
        %1411 = vmatpush1.bf16.msra.mxu0 0
        %1412 = vmatprep.subr.bf16.mxu0 0
        %1413 = vmatpush1.bf16.msra.mxu0 0
        %1414 = vmatprep.subr.bf16.mxu0 0
        %1415 = vmatpush1.bf16.msra.mxu0 0
        %1416 = vmatprep.subr.bf16.mxu0 0
        %1417 = vmatpush1.bf16.msra.mxu0 0
        %1418 = vmatprep.subr.bf16.mxu0 0
        %1419 = vmatpush1.bf16.msra.mxu0 0
        %1420 = vmatprep.subr.bf16.mxu0 0
        %1421 = vmatpush1.bf16.msra.mxu0 0
        %1422 = vmatprep.subr.bf16.mxu0 0
        %1423 = vmatpush1.bf16.msra.mxu0 0
        %1424 = vmatprep.subr.bf16.mxu0 0
        %1425 = vmatpush1.bf16.msra.mxu0 0
        %1426 = vmatprep.subr.bf16.mxu0 0
        %1427 = vmatpush1.bf16.msra.mxu0 0
        %1428 = vmatprep.subr.bf16.mxu0 0
        %1429 = vmatpush1.bf16.msra.mxu0 0
        %1430 = vmatprep.subr.bf16.mxu0 0
        %1431 = vmatpush1.bf16.msra.mxu0 0
        %1432 = vmatprep.subr.bf16.mxu0 0
        %1433 = vmatpush1.bf16.msra.mxu0 0
        %1434 = vmatprep.subr.bf16.mxu0 0
        %1435 = vmatpush1.bf16.msra.mxu0 0
        %1436 = vmatprep.subr.bf16.mxu0 0
        %1437 = vmatpush1.bf16.msra.mxu0 0
        %1438 = vmatprep.subr.bf16.mxu0 0
        %1439 = vmatpush1.bf16.msra.mxu0 0
        %1440 = vmatprep.mubr.bf16.mxu0 0
        %1441 = vmatmul.mubr.bf16.gmra.mrb[0].mxu0 %v365
        %v1442 = vpop.f32.mrb[0].mxu0
        %v1443 = vadd.f32 0.0, %v1442
        %v1444 = vpop.f32.mrb[0].mxu0
        %v1445 = vadd.f32 0.0, %v1444
        %v1446 = vpop.f32.mrb[0].mxu0
        %v1447 = vadd.f32 0.0, %v1446
        %v1448 = vpop.f32.mrb[0].mxu0
        %v1449 = vadd.f32 0.0, %v1448
        %1450 = vdwg.mxu0
        %1451 = vmatprep.subr.bf16.mxu0 %v1322
        %1452 = vmatpush1.bf16.msra.mxu0 %v1319
        %1453 = vmatprep.subr.bf16.mxu0 0
        %1454 = vmatpush1.bf16.msra.mxu0 0
        %1455 = vmatprep.subr.bf16.mxu0 0
        %1456 = vmatpush1.bf16.msra.mxu0 0
        %1457 = vmatprep.subr.bf16.mxu0 0
        %1458 = vmatpush1.bf16.msra.mxu0 0
        %1459 = vmatprep.subr.bf16.mxu0 0
        %1460 = vmatpush1.bf16.msra.mxu0 0
        %1461 = vmatprep.subr.bf16.mxu0 0
        %1462 = vmatpush1.bf16.msra.mxu0 0
        %1463 = vmatprep.subr.bf16.mxu0 0
        %1464 = vmatpush1.bf16.msra.mxu0 0
        %1465 = vmatprep.subr.bf16.mxu0 0
        %1466 = vmatpush1.bf16.msra.mxu0 0
        %1467 = vmatprep.subr.bf16.mxu0 0
        %1468 = vmatpush1.bf16.msra.mxu0 0
        %1469 = vmatprep.subr.bf16.mxu0 0
        %1470 = vmatpush1.bf16.msra.mxu0 0
        %1471 = vmatprep.subr.bf16.mxu0 0
        %1472 = vmatpush1.bf16.msra.mxu0 0
        %1473 = vmatprep.subr.bf16.mxu0 0
        %1474 = vmatpush1.bf16.msra.mxu0 0
        %1475 = vmatprep.subr.bf16.mxu0 0
        %1476 = vmatpush1.bf16.msra.mxu0 0
        %1477 = vmatprep.subr.bf16.mxu0 0
        %1478 = vmatpush1.bf16.msra.mxu0 0
        %1479 = vmatprep.subr.bf16.mxu0 0
        %1480 = vmatpush1.bf16.msra.mxu0 0
        %1481 = vmatprep.subr.bf16.mxu0 0
        %1482 = vmatpush1.bf16.msra.mxu0 0
        %1483 = vmatprep.mubr.bf16.mxu0 0
        %1484 = vmatmul.mubr.bf16.gmra.mrb[0].mxu0 %v365
        %v1485 = vpop.f32.mrb[0].mxu0
        %v1486 = vadd.f32 0.0, %v1485
        %v1487 = vpop.f32.mrb[0].mxu0
        %v1488 = vadd.f32 0.0, %v1487
        %v1489 = vpop.f32.mrb[0].mxu0
        %v1490 = vadd.f32 0.0, %v1489
        %v1491 = vpop.f32.mrb[0].mxu0
        %v1492 = vadd.f32 0.0, %v1491
        %1493 = vdwg.mxu0
        %1494 = vmatprep.subr.bf16.mxu0 %v1328
        %1495 = vmatpush1.bf16.msra.mxu0 %v1325
        %1496 = vmatprep.subr.bf16.mxu0 0
        %1497 = vmatpush1.bf16.msra.mxu0 0
        %1498 = vmatprep.subr.bf16.mxu0 0
        %1499 = vmatpush1.bf16.msra.mxu0 0
        %1500 = vmatprep.subr.bf16.mxu0 0
        %1501 = vmatpush1.bf16.msra.mxu0 0
        %1502 = vmatprep.subr.bf16.mxu0 0
        %1503 = vmatpush1.bf16.msra.mxu0 0
        %1504 = vmatprep.subr.bf16.mxu0 0
        %1505 = vmatpush1.bf16.msra.mxu0 0
        %1506 = vmatprep.subr.bf16.mxu0 0
        %1507 = vmatpush1.bf16.msra.mxu0 0
        %1508 = vmatprep.subr.bf16.mxu0 0
        %1509 = vmatpush1.bf16.msra.mxu0 0
        %1510 = vmatprep.subr.bf16.mxu0 0
        %1511 = vmatpush1.bf16.msra.mxu0 0
        %1512 = vmatprep.subr.bf16.mxu0 0
        %1513 = vmatpush1.bf16.msra.mxu0 0
        %1514 = vmatprep.subr.bf16.mxu0 0
        %1515 = vmatpush1.bf16.msra.mxu0 0
        %1516 = vmatprep.subr.bf16.mxu0 0
        %1517 = vmatpush1.bf16.msra.mxu0 0
        %1518 = vmatprep.subr.bf16.mxu0 0
        %1519 = vmatpush1.bf16.msra.mxu0 0
        %1520 = vmatprep.subr.bf16.mxu0 0
        %1521 = vmatpush1.bf16.msra.mxu0 0
        %1522 = vmatprep.subr.bf16.mxu0 0
        %1523 = vmatpush1.bf16.msra.mxu0 0
        %1524 = vmatprep.subr.bf16.mxu0 0
        %1525 = vmatpush1.bf16.msra.mxu0 0
        %1526 = vmatprep.mubr.bf16.mxu0 0
        %1527 = vmatmul.mubr.bf16.gmra.mrb[0].mxu0 %v365
        %v1528 = vpop.f32.mrb[0].mxu0
        %v1529 = vadd.f32 0.0, %v1528
        %v1530 = vpop.f32.mrb[0].mxu0
        %v1531 = vadd.f32 0.0, %v1530
        %v1532 = vpop.f32.mrb[0].mxu0
        %v1533 = vadd.f32 0.0, %v1532
        %v1534 = vpop.f32.mrb[0].mxu0
        %v1535 = vadd.f32 0.0, %v1534
        %1536 = vdwg.mxu0
        %1537 = vmatprep.subr.bf16.mxu0 %v1334
        %1538 = vmatpush1.bf16.msra.mxu0 %v1331
        %1539 = vmatprep.subr.bf16.mxu0 0
        %1540 = vmatpush1.bf16.msra.mxu0 0
        %1541 = vmatprep.subr.bf16.mxu0 0
        %1542 = vmatpush1.bf16.msra.mxu0 0
        %1543 = vmatprep.subr.bf16.mxu0 0
        %1544 = vmatpush1.bf16.msra.mxu0 0
        %1545 = vmatprep.subr.bf16.mxu0 0
        %1546 = vmatpush1.bf16.msra.mxu0 0
        %1547 = vmatprep.subr.bf16.mxu0 0
        %1548 = vmatpush1.bf16.msra.mxu0 0
        %1549 = vmatprep.subr.bf16.mxu0 0
        %1550 = vmatpush1.bf16.msra.mxu0 0
        %1551 = vmatprep.subr.bf16.mxu0 0
        %1552 = vmatpush1.bf16.msra.mxu0 0
        %1553 = vmatprep.subr.bf16.mxu0 0
        %1554 = vmatpush1.bf16.msra.mxu0 0
        %1555 = vmatprep.subr.bf16.mxu0 0
        %1556 = vmatpush1.bf16.msra.mxu0 0
        %1557 = vmatprep.subr.bf16.mxu0 0
        %1558 = vmatpush1.bf16.msra.mxu0 0
        %1559 = vmatprep.subr.bf16.mxu0 0
        %1560 = vmatpush1.bf16.msra.mxu0 0
        %1561 = vmatprep.subr.bf16.mxu0 0
        %1562 = vmatpush1.bf16.msra.mxu0 0
        %1563 = vmatprep.subr.bf16.mxu0 0
        %1564 = vmatpush1.bf16.msra.mxu0 0
        %1565 = vmatprep.subr.bf16.mxu0 0
        %1566 = vmatpush1.bf16.msra.mxu0 0
        %1567 = vmatprep.subr.bf16.mxu0 0
        %1568 = vmatpush1.bf16.msra.mxu0 0
        %1569 = vmatprep.mubr.bf16.mxu0 0
        %1570 = vmatmul.mubr.bf16.gmra.mrb[0].mxu0 %v365
        %v1571 = vpop.f32.mrb[0].mxu0
        %v1572 = vadd.f32 0.0, %v1571
        %v1573 = vpop.f32.mrb[0].mxu0
        %v1574 = vadd.f32 0.0, %v1573
        %v1575 = vpop.f32.mrb[0].mxu0
        %v1576 = vadd.f32 0.0, %v1575
        %v1577 = vpop.f32.mrb[0].mxu0
        %v1578 = vadd.f32 0.0, %v1577
        %1579 = vdwg.mxu0
        %1580 = vmatprep.subr.bf16.mxu0 %v1340
        %1581 = vmatpush1.bf16.msra.mxu0 %v1337
        %1582 = vmatprep.subr.bf16.mxu0 0
        %1583 = vmatpush1.bf16.msra.mxu0 0
        %1584 = vmatprep.subr.bf16.mxu0 0
        %1585 = vmatpush1.bf16.msra.mxu0 0
        %1586 = vmatprep.subr.bf16.mxu0 0
        %1587 = vmatpush1.bf16.msra.mxu0 0
        %1588 = vmatprep.subr.bf16.mxu0 0
        %1589 = vmatpush1.bf16.msra.mxu0 0
        %1590 = vmatprep.subr.bf16.mxu0 0
        %1591 = vmatpush1.bf16.msra.mxu0 0
        %1592 = vmatprep.subr.bf16.mxu0 0
        %1593 = vmatpush1.bf16.msra.mxu0 0
        %1594 = vmatprep.subr.bf16.mxu0 0
        %1595 = vmatpush1.bf16.msra.mxu0 0
        %1596 = vmatprep.subr.bf16.mxu0 0
        %1597 = vmatpush1.bf16.msra.mxu0 0
        %1598 = vmatprep.subr.bf16.mxu0 0
        %1599 = vmatpush1.bf16.msra.mxu0 0
        %1600 = vmatprep.subr.bf16.mxu0 0
        %1601 = vmatpush1.bf16.msra.mxu0 0
        %1602 = vmatprep.subr.bf16.mxu0 0
        %1603 = vmatpush1.bf16.msra.mxu0 0
        %1604 = vmatprep.subr.bf16.mxu0 0
        %1605 = vmatpush1.bf16.msra.mxu0 0
        %1606 = vmatprep.subr.bf16.mxu0 0
        %1607 = vmatpush1.bf16.msra.mxu0 0
        %1608 = vmatprep.subr.bf16.mxu0 0
        %1609 = vmatpush1.bf16.msra.mxu0 0
        %1610 = vmatprep.subr.bf16.mxu0 0
        %1611 = vmatpush1.bf16.msra.mxu0 0
        %1612 = vmatprep.mubr.bf16.mxu0 0
        %1613 = vmatmul.mubr.bf16.gmra.mrb[0].mxu0 %v365
        %v1614 = vpop.f32.mrb[0].mxu0
        %v1615 = vadd.f32 0.0, %v1614
        %v1616 = vpop.f32.mrb[0].mxu0
        %v1617 = vadd.f32 0.0, %v1616
        %v1618 = vpop.f32.mrb[0].mxu0
        %v1619 = vadd.f32 0.0, %v1618
        %v1620 = vpop.f32.mrb[0].mxu0
        %v1621 = vadd.f32 0.0, %v1620
        %1622 = vdwg.mxu0
        %1623 = vmatprep.subr.bf16.mxu0 %v1346
        %1624 = vmatpush1.bf16.msra.mxu0 %v1343
        %1625 = vmatprep.subr.bf16.mxu0 0
        %1626 = vmatpush1.bf16.msra.mxu0 0
        %1627 = vmatprep.subr.bf16.mxu0 0
        %1628 = vmatpush1.bf16.msra.mxu0 0
        %1629 = vmatprep.subr.bf16.mxu0 0
        %1630 = vmatpush1.bf16.msra.mxu0 0
        %1631 = vmatprep.subr.bf16.mxu0 0
        %1632 = vmatpush1.bf16.msra.mxu0 0
        %1633 = vmatprep.subr.bf16.mxu0 0
        %1634 = vmatpush1.bf16.msra.mxu0 0
        %1635 = vmatprep.subr.bf16.mxu0 0
        %1636 = vmatpush1.bf16.msra.mxu0 0
        %1637 = vmatprep.subr.bf16.mxu0 0
        %1638 = vmatpush1.bf16.msra.mxu0 0
        %1639 = vmatprep.subr.bf16.mxu0 0
        %1640 = vmatpush1.bf16.msra.mxu0 0
        %1641 = vmatprep.subr.bf16.mxu0 0
        %1642 = vmatpush1.bf16.msra.mxu0 0
        %1643 = vmatprep.subr.bf16.mxu0 0
        %1644 = vmatpush1.bf16.msra.mxu0 0
        %1645 = vmatprep.subr.bf16.mxu0 0
        %1646 = vmatpush1.bf16.msra.mxu0 0
        %1647 = vmatprep.subr.bf16.mxu0 0
        %1648 = vmatpush1.bf16.msra.mxu0 0
        %1649 = vmatprep.subr.bf16.mxu0 0
        %1650 = vmatpush1.bf16.msra.mxu0 0
        %1651 = vmatprep.subr.bf16.mxu0 0
        %1652 = vmatpush1.bf16.msra.mxu0 0
        %1653 = vmatprep.subr.bf16.mxu0 0
        %1654 = vmatpush1.bf16.msra.mxu0 0
        %1655 = vmatprep.mubr.bf16.mxu0 0
        %1656 = vmatmul.mubr.bf16.gmra.mrb[0].mxu0 %v365
        %v1657 = vpop.f32.mrb[0].mxu0
        %v1658 = vadd.f32 0.0, %v1657
        %v1659 = vpop.f32.mrb[0].mxu0
        %v1660 = vadd.f32 0.0, %v1659
        %v1661 = vpop.f32.mrb[0].mxu0
        %v1662 = vadd.f32 0.0, %v1661
        %v1663 = vpop.f32.mrb[0].mxu0
        %v1664 = vadd.f32 0.0, %v1663
        %1665 = vdwg.mxu0
        %1666 = vmatprep.subr.bf16.mxu0 %v1352
        %1667 = vmatpush1.bf16.msra.mxu0 %v1349
        %1668 = vmatprep.subr.bf16.mxu0 0
        %1669 = vmatpush1.bf16.msra.mxu0 0
        %1670 = vmatprep.subr.bf16.mxu0 0
        %1671 = vmatpush1.bf16.msra.mxu0 0
        %1672 = vmatprep.subr.bf16.mxu0 0
        %1673 = vmatpush1.bf16.msra.mxu0 0
        %1674 = vmatprep.subr.bf16.mxu0 0
        %1675 = vmatpush1.bf16.msra.mxu0 0
        %1676 = vmatprep.subr.bf16.mxu0 0
        %1677 = vmatpush1.bf16.msra.mxu0 0
        %1678 = vmatprep.subr.bf16.mxu0 0
        %1679 = vmatpush1.bf16.msra.mxu0 0
        %1680 = vmatprep.subr.bf16.mxu0 0
        %1681 = vmatpush1.bf16.msra.mxu0 0
        %1682 = vmatprep.subr.bf16.mxu0 0
        %1683 = vmatpush1.bf16.msra.mxu0 0
        %1684 = vmatprep.subr.bf16.mxu0 0
        %1685 = vmatpush1.bf16.msra.mxu0 0
        %1686 = vmatprep.subr.bf16.mxu0 0
        %1687 = vmatpush1.bf16.msra.mxu0 0
        %1688 = vmatprep.subr.bf16.mxu0 0
        %1689 = vmatpush1.bf16.msra.mxu0 0
        %1690 = vmatprep.subr.bf16.mxu0 0
        %1691 = vmatpush1.bf16.msra.mxu0 0
        %1692 = vmatprep.subr.bf16.mxu0 0
        %1693 = vmatpush1.bf16.msra.mxu0 0
        %1694 = vmatprep.subr.bf16.mxu0 0
        %1695 = vmatpush1.bf16.msra.mxu0 0
        %1696 = vmatprep.subr.bf16.mxu0 0
        %1697 = vmatpush1.bf16.msra.mxu0 0
        %1698 = vmatprep.mubr.bf16.mxu0 0
        %1699 = vmatmul.mubr.bf16.gmra.mrb[0].mxu0 %v365
        %v1700 = vpop.f32.mrb[0].mxu0
        %v1701 = vadd.f32 0.0, %v1700
        %v1702 = vpop.f32.mrb[0].mxu0
        %v1703 = vadd.f32 0.0, %v1702
        %v1704 = vpop.f32.mrb[0].mxu0
        %v1705 = vadd.f32 0.0, %v1704
        %v1706 = vpop.f32.mrb[0].mxu0
        %v1707 = vadd.f32 0.0, %v1706
        %1708 = vdwg.mxu0
        %1709 = vmatprep.subr.bf16.mxu0 %v1358
        %1710 = vmatpush1.bf16.msra.mxu0 %v1355
        %1711 = vmatprep.subr.bf16.mxu0 0
        %1712 = vmatpush1.bf16.msra.mxu0 0
        %1713 = vmatprep.subr.bf16.mxu0 0
        %1714 = vmatpush1.bf16.msra.mxu0 0
        %1715 = vmatprep.subr.bf16.mxu0 0
        %1716 = vmatpush1.bf16.msra.mxu0 0
        %1717 = vmatprep.subr.bf16.mxu0 0
        %1718 = vmatpush1.bf16.msra.mxu0 0
        %1719 = vmatprep.subr.bf16.mxu0 0
        %1720 = vmatpush1.bf16.msra.mxu0 0
        %1721 = vmatprep.subr.bf16.mxu0 0
        %1722 = vmatpush1.bf16.msra.mxu0 0
        %1723 = vmatprep.subr.bf16.mxu0 0
        %1724 = vmatpush1.bf16.msra.mxu0 0
        %1725 = vmatprep.subr.bf16.mxu0 0
        %1726 = vmatpush1.bf16.msra.mxu0 0
        %1727 = vmatprep.subr.bf16.mxu0 0
        %1728 = vmatpush1.bf16.msra.mxu0 0
        %1729 = vmatprep.subr.bf16.mxu0 0
        %1730 = vmatpush1.bf16.msra.mxu0 0
        %1731 = vmatprep.subr.bf16.mxu0 0
        %1732 = vmatpush1.bf16.msra.mxu0 0
        %1733 = vmatprep.subr.bf16.mxu0 0
        %1734 = vmatpush1.bf16.msra.mxu0 0
        %1735 = vmatprep.subr.bf16.mxu0 0
        %1736 = vmatpush1.bf16.msra.mxu0 0
        %1737 = vmatprep.subr.bf16.mxu0 0
        %1738 = vmatpush1.bf16.msra.mxu0 0
        %1739 = vmatprep.subr.bf16.mxu0 0
        %1740 = vmatpush1.bf16.msra.mxu0 0
        %1741 = vmatprep.mubr.bf16.mxu0 0
        %1742 = vmatmul.mubr.bf16.gmra.mrb[0].mxu0 %v365
        %v1743 = vpop.f32.mrb[0].mxu0
        %v1744 = vadd.f32 0.0, %v1743
        %v1745 = vpop.f32.mrb[0].mxu0
        %v1746 = vadd.f32 0.0, %v1745
        %v1747 = vpop.f32.mrb[0].mxu0
        %v1748 = vadd.f32 0.0, %v1747
        %v1749 = vpop.f32.mrb[0].mxu0
        %v1750 = vadd.f32 0.0, %v1749
        %1751 = vdwg.mxu0
        %1752 = vmatprep.subr.bf16.mxu0 %v1364
        %1753 = vmatpush1.bf16.msra.mxu0 %v1361
        %1754 = vmatprep.subr.bf16.mxu0 0
        %1755 = vmatpush1.bf16.msra.mxu0 0
        %1756 = vmatprep.subr.bf16.mxu0 0
        %1757 = vmatpush1.bf16.msra.mxu0 0
        %1758 = vmatprep.subr.bf16.mxu0 0
        %1759 = vmatpush1.bf16.msra.mxu0 0
        %1760 = vmatprep.subr.bf16.mxu0 0
        %1761 = vmatpush1.bf16.msra.mxu0 0
        %1762 = vmatprep.subr.bf16.mxu0 0
        %1763 = vmatpush1.bf16.msra.mxu0 0
        %1764 = vmatprep.subr.bf16.mxu0 0
        %1765 = vmatpush1.bf16.msra.mxu0 0
        %1766 = vmatprep.subr.bf16.mxu0 0
        %1767 = vmatpush1.bf16.msra.mxu0 0
        %1768 = vmatprep.subr.bf16.mxu0 0
        %1769 = vmatpush1.bf16.msra.mxu0 0
        %1770 = vmatprep.subr.bf16.mxu0 0
        %1771 = vmatpush1.bf16.msra.mxu0 0
        %1772 = vmatprep.subr.bf16.mxu0 0
        %1773 = vmatpush1.bf16.msra.mxu0 0
        %1774 = vmatprep.subr.bf16.mxu0 0
        %1775 = vmatpush1.bf16.msra.mxu0 0
        %1776 = vmatprep.subr.bf16.mxu0 0
        %1777 = vmatpush1.bf16.msra.mxu0 0
        %1778 = vmatprep.subr.bf16.mxu0 0
        %1779 = vmatpush1.bf16.msra.mxu0 0
        %1780 = vmatprep.subr.bf16.mxu0 0
        %1781 = vmatpush1.bf16.msra.mxu0 0
        %1782 = vmatprep.subr.bf16.mxu0 0
        %1783 = vmatpush1.bf16.msra.mxu0 0
        %1784 = vmatprep.mubr.bf16.mxu0 0
        %1785 = vmatmul.mubr.bf16.gmra.mrb[0].mxu0 %v365
        %v1786 = vpop.f32.mrb[0].mxu0
        %v1787 = vadd.f32 0.0, %v1786
        %v1788 = vpop.f32.mrb[0].mxu0
        %v1789 = vadd.f32 0.0, %v1788
        %v1790 = vpop.f32.mrb[0].mxu0
        %v1791 = vadd.f32 0.0, %v1790
        %v1792 = vpop.f32.mrb[0].mxu0
        %v1793 = vadd.f32 0.0, %v1792
        %1794 = vdwg.mxu0
        %1795 = vmatprep.subr.bf16.mxu0 %v1370
        %1796 = vmatpush1.bf16.msra.mxu0 %v1367
        %1797 = vmatprep.subr.bf16.mxu0 0
        %1798 = vmatpush1.bf16.msra.mxu0 0
        %1799 = vmatprep.subr.bf16.mxu0 0
        %1800 = vmatpush1.bf16.msra.mxu0 0
        %1801 = vmatprep.subr.bf16.mxu0 0
        %1802 = vmatpush1.bf16.msra.mxu0 0
        %1803 = vmatprep.subr.bf16.mxu0 0
        %1804 = vmatpush1.bf16.msra.mxu0 0
        %1805 = vmatprep.subr.bf16.mxu0 0
        %1806 = vmatpush1.bf16.msra.mxu0 0
        %1807 = vmatprep.subr.bf16.mxu0 0
        %1808 = vmatpush1.bf16.msra.mxu0 0
        %1809 = vmatprep.subr.bf16.mxu0 0
        %1810 = vmatpush1.bf16.msra.mxu0 0
        %1811 = vmatprep.subr.bf16.mxu0 0
        %1812 = vmatpush1.bf16.msra.mxu0 0
        %1813 = vmatprep.subr.bf16.mxu0 0
        %1814 = vmatpush1.bf16.msra.mxu0 0
        %1815 = vmatprep.subr.bf16.mxu0 0
        %1816 = vmatpush1.bf16.msra.mxu0 0
        %1817 = vmatprep.subr.bf16.mxu0 0
        %1818 = vmatpush1.bf16.msra.mxu0 0
        %1819 = vmatprep.subr.bf16.mxu0 0
        %1820 = vmatpush1.bf16.msra.mxu0 0
        %1821 = vmatprep.subr.bf16.mxu0 0
        %1822 = vmatpush1.bf16.msra.mxu0 0
        %1823 = vmatprep.subr.bf16.mxu0 0
        %1824 = vmatpush1.bf16.msra.mxu0 0
        %1825 = vmatprep.subr.bf16.mxu0 0
        %1826 = vmatpush1.bf16.msra.mxu0 0
        %1827 = vmatprep.mubr.bf16.mxu0 0
        %1828 = vmatmul.mubr.bf16.gmra.mrb[0].mxu0 %v365
        %v1829 = vpop.f32.mrb[0].mxu0
        %v1830 = vadd.f32 0.0, %v1829
        %v1831 = vpop.f32.mrb[0].mxu0
        %v1832 = vadd.f32 0.0, %v1831
        %v1833 = vpop.f32.mrb[0].mxu0
        %v1834 = vadd.f32 0.0, %v1833
        %v1835 = vpop.f32.mrb[0].mxu0
        %v1836 = vadd.f32 0.0, %v1835
        %1837 = vdwg.mxu0
        %1838 = vmatprep.subr.bf16.mxu0 %v1376
        %1839 = vmatpush1.bf16.msra.mxu0 %v1373
        %1840 = vmatprep.subr.bf16.mxu0 0
        %1841 = vmatpush1.bf16.msra.mxu0 0
        %1842 = vmatprep.subr.bf16.mxu0 0
        %1843 = vmatpush1.bf16.msra.mxu0 0
        %1844 = vmatprep.subr.bf16.mxu0 0
        %1845 = vmatpush1.bf16.msra.mxu0 0
        %1846 = vmatprep.subr.bf16.mxu0 0
        %1847 = vmatpush1.bf16.msra.mxu0 0
        %1848 = vmatprep.subr.bf16.mxu0 0
        %1849 = vmatpush1.bf16.msra.mxu0 0
        %1850 = vmatprep.subr.bf16.mxu0 0
        %1851 = vmatpush1.bf16.msra.mxu0 0
        %1852 = vmatprep.subr.bf16.mxu0 0
        %1853 = vmatpush1.bf16.msra.mxu0 0
        %1854 = vmatprep.subr.bf16.mxu0 0
        %1855 = vmatpush1.bf16.msra.mxu0 0
        %1856 = vmatprep.subr.bf16.mxu0 0
        %1857 = vmatpush1.bf16.msra.mxu0 0
        %1858 = vmatprep.subr.bf16.mxu0 0
        %1859 = vmatpush1.bf16.msra.mxu0 0
        %1860 = vmatprep.subr.bf16.mxu0 0
        %1861 = vmatpush1.bf16.msra.mxu0 0
        %1862 = vmatprep.subr.bf16.mxu0 0
        %1863 = vmatpush1.bf16.msra.mxu0 0
        %1864 = vmatprep.subr.bf16.mxu0 0
        %1865 = vmatpush1.bf16.msra.mxu0 0
        %1866 = vmatprep.subr.bf16.mxu0 0
        %1867 = vmatpush1.bf16.msra.mxu0 0
        %1868 = vmatprep.subr.bf16.mxu0 0
        %1869 = vmatpush1.bf16.msra.mxu0 0
        %1870 = vmatprep.mubr.bf16.mxu0 0
        %1871 = vmatmul.mubr.bf16.gmra.mrb[0].mxu0 %v365
        %v1872 = vpop.f32.mrb[0].mxu0
        %v1873 = vadd.f32 0.0, %v1872
        %v1874 = vpop.f32.mrb[0].mxu0
        %v1875 = vadd.f32 0.0, %v1874
        %v1876 = vpop.f32.mrb[0].mxu0
        %v1877 = vadd.f32 0.0, %v1876
        %v1878 = vpop.f32.mrb[0].mxu0
        %v1879 = vadd.f32 0.0, %v1878
        %1880 = vdwg.mxu0
        %1881 = vmatprep.subr.bf16.mxu0 %v1382
        %1882 = vmatpush1.bf16.msra.mxu0 %v1379
        %1883 = vmatprep.subr.bf16.mxu0 0
        %1884 = vmatpush1.bf16.msra.mxu0 0
        %1885 = vmatprep.subr.bf16.mxu0 0
        %1886 = vmatpush1.bf16.msra.mxu0 0
        %1887 = vmatprep.subr.bf16.mxu0 0
        %1888 = vmatpush1.bf16.msra.mxu0 0
        %1889 = vmatprep.subr.bf16.mxu0 0
        %1890 = vmatpush1.bf16.msra.mxu0 0
        %1891 = vmatprep.subr.bf16.mxu0 0
        %1892 = vmatpush1.bf16.msra.mxu0 0
        %1893 = vmatprep.subr.bf16.mxu0 0
        %1894 = vmatpush1.bf16.msra.mxu0 0
        %1895 = vmatprep.subr.bf16.mxu0 0
        %1896 = vmatpush1.bf16.msra.mxu0 0
        %1897 = vmatprep.subr.bf16.mxu0 0
        %1898 = vmatpush1.bf16.msra.mxu0 0
        %1899 = vmatprep.subr.bf16.mxu0 0
        %1900 = vmatpush1.bf16.msra.mxu0 0
        %1901 = vmatprep.subr.bf16.mxu0 0
        %1902 = vmatpush1.bf16.msra.mxu0 0
        %1903 = vmatprep.subr.bf16.mxu0 0
        %1904 = vmatpush1.bf16.msra.mxu0 0
        %1905 = vmatprep.subr.bf16.mxu0 0
        %1906 = vmatpush1.bf16.msra.mxu0 0
        %1907 = vmatprep.subr.bf16.mxu0 0
        %1908 = vmatpush1.bf16.msra.mxu0 0
        %1909 = vmatprep.subr.bf16.mxu0 0
        %1910 = vmatpush1.bf16.msra.mxu0 0
        %1911 = vmatprep.subr.bf16.mxu0 0
        %1912 = vmatpush1.bf16.msra.mxu0 0
        %1913 = vmatprep.mubr.bf16.mxu0 0
        %1914 = vmatmul.mubr.bf16.gmra.mrb[0].mxu0 %v365
        %v1915 = vpop.f32.mrb[0].mxu0
        %v1916 = vadd.f32 0.0, %v1915
        %v1917 = vpop.f32.mrb[0].mxu0
        %v1918 = vadd.f32 0.0, %v1917
        %v1919 = vpop.f32.mrb[0].mxu0
        %v1920 = vadd.f32 0.0, %v1919
        %v1921 = vpop.f32.mrb[0].mxu0
        %v1922 = vadd.f32 0.0, %v1921
        %1923 = vdwg.mxu0
        %1924 = vmatprep.subr.bf16.mxu0 %v1388
        %1925 = vmatpush1.bf16.msra.mxu0 %v1385
        %1926 = vmatprep.subr.bf16.mxu0 0
        %1927 = vmatpush1.bf16.msra.mxu0 0
        %1928 = vmatprep.subr.bf16.mxu0 0
        %1929 = vmatpush1.bf16.msra.mxu0 0
        %1930 = vmatprep.subr.bf16.mxu0 0
        %1931 = vmatpush1.bf16.msra.mxu0 0
        %1932 = vmatprep.subr.bf16.mxu0 0
        %1933 = vmatpush1.bf16.msra.mxu0 0
        %1934 = vmatprep.subr.bf16.mxu0 0
        %1935 = vmatpush1.bf16.msra.mxu0 0
        %1936 = vmatprep.subr.bf16.mxu0 0
        %1937 = vmatpush1.bf16.msra.mxu0 0
        %1938 = vmatprep.subr.bf16.mxu0 0
        %1939 = vmatpush1.bf16.msra.mxu0 0
        %1940 = vmatprep.subr.bf16.mxu0 0
        %1941 = vmatpush1.bf16.msra.mxu0 0
        %1942 = vmatprep.subr.bf16.mxu0 0
        %1943 = vmatpush1.bf16.msra.mxu0 0
        %1944 = vmatprep.subr.bf16.mxu0 0
        %1945 = vmatpush1.bf16.msra.mxu0 0
        %1946 = vmatprep.subr.bf16.mxu0 0
        %1947 = vmatpush1.bf16.msra.mxu0 0
        %1948 = vmatprep.subr.bf16.mxu0 0
        %1949 = vmatpush1.bf16.msra.mxu0 0
        %1950 = vmatprep.subr.bf16.mxu0 0
        %1951 = vmatpush1.bf16.msra.mxu0 0
        %1952 = vmatprep.subr.bf16.mxu0 0
        %1953 = vmatpush1.bf16.msra.mxu0 0
        %1954 = vmatprep.subr.bf16.mxu0 0
        %1955 = vmatpush1.bf16.msra.mxu0 0
        %1956 = vmatprep.mubr.bf16.mxu0 0
        %1957 = vmatmul.mubr.bf16.gmra.mrb[0].mxu0 %v365
        %v1958 = vpop.f32.mrb[0].mxu0
        %v1959 = vadd.f32 0.0, %v1958
        %v1960 = vpop.f32.mrb[0].mxu0
        %v1961 = vadd.f32 0.0, %v1960
        %v1962 = vpop.f32.mrb[0].mxu0
        %v1963 = vadd.f32 0.0, %v1962
        %v1964 = vpop.f32.mrb[0].mxu0
        %v1965 = vadd.f32 0.0, %v1964
        %1966 = vdwg.mxu0
        %1967 = vmatprep.subr.bf16.mxu0 %v1394
        %1968 = vmatpush1.bf16.msra.mxu0 %v1391
        %1969 = vmatprep.subr.bf16.mxu0 0
        %1970 = vmatpush1.bf16.msra.mxu0 0
        %1971 = vmatprep.subr.bf16.mxu0 0
        %1972 = vmatpush1.bf16.msra.mxu0 0
        %1973 = vmatprep.subr.bf16.mxu0 0
        %1974 = vmatpush1.bf16.msra.mxu0 0
        %1975 = vmatprep.subr.bf16.mxu0 0
        %1976 = vmatpush1.bf16.msra.mxu0 0
        %1977 = vmatprep.subr.bf16.mxu0 0
        %1978 = vmatpush1.bf16.msra.mxu0 0
        %1979 = vmatprep.subr.bf16.mxu0 0
        %1980 = vmatpush1.bf16.msra.mxu0 0
        %1981 = vmatprep.subr.bf16.mxu0 0
        %1982 = vmatpush1.bf16.msra.mxu0 0
        %1983 = vmatprep.subr.bf16.mxu0 0
        %1984 = vmatpush1.bf16.msra.mxu0 0
        %1985 = vmatprep.subr.bf16.mxu0 0
        %1986 = vmatpush1.bf16.msra.mxu0 0
        %1987 = vmatprep.subr.bf16.mxu0 0
        %1988 = vmatpush1.bf16.msra.mxu0 0
        %1989 = vmatprep.subr.bf16.mxu0 0
        %1990 = vmatpush1.bf16.msra.mxu0 0
        %1991 = vmatprep.subr.bf16.mxu0 0
        %1992 = vmatpush1.bf16.msra.mxu0 0
        %1993 = vmatprep.subr.bf16.mxu0 0
        %1994 = vmatpush1.bf16.msra.mxu0 0
        %1995 = vmatprep.subr.bf16.mxu0 0
        %1996 = vmatpush1.bf16.msra.mxu0 0
        %1997 = vmatprep.subr.bf16.mxu0 0
        %1998 = vmatpush1.bf16.msra.mxu0 0
        %1999 = vmatprep.mubr.bf16.mxu0 0
        %2000 = vmatmul.mubr.bf16.gmra.mrb[0].mxu0 %v365
        %v2001 = vpop.f32.mrb[0].mxu0
        %v2002 = vadd.f32 0.0, %v2001
        %v2003 = vpop.f32.mrb[0].mxu0
        %v2004 = vadd.f32 0.0, %v2003
        %v2005 = vpop.f32.mrb[0].mxu0
        %v2006 = vadd.f32 0.0, %v2005
        %v2007 = vpop.f32.mrb[0].mxu0
        %v2008 = vadd.f32 0.0, %v2007
        %2009 = vdwg.mxu0
        %2010 = vmatprep.subr.bf16.mxu0 %v1400
        %2011 = vmatpush1.bf16.msra.mxu0 %v1397
        %2012 = vmatprep.subr.bf16.mxu0 0
        %2013 = vmatpush1.bf16.msra.mxu0 0
        %2014 = vmatprep.subr.bf16.mxu0 0
        %2015 = vmatpush1.bf16.msra.mxu0 0
        %2016 = vmatprep.subr.bf16.mxu0 0
        %2017 = vmatpush1.bf16.msra.mxu0 0
        %2018 = vmatprep.subr.bf16.mxu0 0
        %2019 = vmatpush1.bf16.msra.mxu0 0
        %2020 = vmatprep.subr.bf16.mxu0 0
        %2021 = vmatpush1.bf16.msra.mxu0 0
        %2022 = vmatprep.subr.bf16.mxu0 0
        %2023 = vmatpush1.bf16.msra.mxu0 0
        %2024 = vmatprep.subr.bf16.mxu0 0
        %2025 = vmatpush1.bf16.msra.mxu0 0
        %2026 = vmatprep.subr.bf16.mxu0 0
        %2027 = vmatpush1.bf16.msra.mxu0 0
        %2028 = vmatprep.subr.bf16.mxu0 0
        %2029 = vmatpush1.bf16.msra.mxu0 0
        %2030 = vmatprep.subr.bf16.mxu0 0
        %2031 = vmatpush1.bf16.msra.mxu0 0
        %2032 = vmatprep.subr.bf16.mxu0 0
        %2033 = vmatpush1.bf16.msra.mxu0 0
        %2034 = vmatprep.subr.bf16.mxu0 0
        %2035 = vmatpush1.bf16.msra.mxu0 0
        %2036 = vmatprep.subr.bf16.mxu0 0
        %2037 = vmatpush1.bf16.msra.mxu0 0
        %2038 = vmatprep.subr.bf16.mxu0 0
        %2039 = vmatpush1.bf16.msra.mxu0 0
        %2040 = vmatprep.subr.bf16.mxu0 0
        %2041 = vmatpush1.bf16.msra.mxu0 0
        %2042 = vmatprep.mubr.bf16.mxu0 0
        %2043 = vmatmul.mubr.bf16.gmra.mrb[0].mxu0 %v365
        %v2044 = vpop.f32.mrb[0].mxu0
        %v2045 = vadd.f32 0.0, %v2044
        %v2046 = vpop.f32.mrb[0].mxu0
        %v2047 = vadd.f32 0.0, %v2046
        %v2048 = vpop.f32.mrb[0].mxu0
        %v2049 = vadd.f32 0.0, %v2048
        %v2050 = vpop.f32.mrb[0].mxu0
        %v2051 = vadd.f32 0.0, %v2050
        %2052 = vdwg.mxu0
        %2053 = vmatprep.subr.bf16.mxu0 %v1406
        %2054 = vmatpush1.bf16.msra.mxu0 %v1403
        %2055 = vmatprep.subr.bf16.mxu0 0
        %2056 = vmatpush1.bf16.msra.mxu0 0
        %2057 = vmatprep.subr.bf16.mxu0 0
        %2058 = vmatpush1.bf16.msra.mxu0 0
        %2059 = vmatprep.subr.bf16.mxu0 0
        %2060 = vmatpush1.bf16.msra.mxu0 0
        %2061 = vmatprep.subr.bf16.mxu0 0
        %2062 = vmatpush1.bf16.msra.mxu0 0
        %2063 = vmatprep.subr.bf16.mxu0 0
        %2064 = vmatpush1.bf16.msra.mxu0 0
        %2065 = vmatprep.subr.bf16.mxu0 0
        %2066 = vmatpush1.bf16.msra.mxu0 0
        %2067 = vmatprep.subr.bf16.mxu0 0
        %2068 = vmatpush1.bf16.msra.mxu0 0
        %2069 = vmatprep.subr.bf16.mxu0 0
        %2070 = vmatpush1.bf16.msra.mxu0 0
        %2071 = vmatprep.subr.bf16.mxu0 0
        %2072 = vmatpush1.bf16.msra.mxu0 0
        %2073 = vmatprep.subr.bf16.mxu0 0
        %2074 = vmatpush1.bf16.msra.mxu0 0
        %2075 = vmatprep.subr.bf16.mxu0 0
        %2076 = vmatpush1.bf16.msra.mxu0 0
        %2077 = vmatprep.subr.bf16.mxu0 0
        %2078 = vmatpush1.bf16.msra.mxu0 0
        %2079 = vmatprep.subr.bf16.mxu0 0
        %2080 = vmatpush1.bf16.msra.mxu0 0
        %2081 = vmatprep.subr.bf16.mxu0 0
        %2082 = vmatpush1.bf16.msra.mxu0 0
        %2083 = vmatprep.subr.bf16.mxu0 0
        %2084 = vmatpush1.bf16.msra.mxu0 0
        %2085 = vmatprep.mubr.bf16.mxu0 0
        %2086 = vmatmul.mubr.bf16.gmra.mrb[0].mxu0 %v365
        %v2087 = vpop.f32.mrb[0].mxu0
        %v2088 = vadd.f32 0.0, %v2087
        %v2089 = vpop.f32.mrb[0].mxu0
        %v2090 = vadd.f32 0.0, %v2089
        %v2091 = vpop.f32.mrb[0].mxu0
        %v2092 = vadd.f32 0.0, %v2091
        %v2093 = vpop.f32.mrb[0].mxu0
        %v2094 = vadd.f32 0.0, %v2093
        %2095 = vdwg.mxu0
        %v2096 = vmax.f32 %v499, %v1443
        %v2097 = vmax.f32 %v501, %v1445
        %v2098 = vmax.f32 %v542, %v1486
        %v2099 = vmax.f32 %v544, %v1488
        %v2100 = vmax.f32 %v585, %v1529
        %v2101 = vmax.f32 %v587, %v1531
        %v2102 = vmax.f32 %v628, %v1572
        %v2103 = vmax.f32 %v630, %v1574
        %v2104 = vmax.f32 %v671, %v1615
        %v2105 = vmax.f32 %v673, %v1617
        %v2106 = vmax.f32 %v714, %v1658
        %v2107 = vmax.f32 %v716, %v1660
        %v2108 = vmax.f32 %v757, %v1701
        %v2109 = vmax.f32 %v759, %v1703
        %v2110 = vmax.f32 %v800, %v1744
        %v2111 = vmax.f32 %v802, %v1746
        %v2112 = vmax.f32 %v843, %v1787
        %v2113 = vmax.f32 %v845, %v1789
        %v2114 = vmax.f32 %v886, %v1830
        %v2115 = vmax.f32 %v888, %v1832
        %v2116 = vmax.f32 %v929, %v1873
        %v2117 = vmax.f32 %v931, %v1875
        %v2118 = vmax.f32 %v972, %v1916
        %v2119 = vmax.f32 %v974, %v1918
        %v2120 = vmax.f32 %v1015, %v1959
        %v2121 = vmax.f32 %v1017, %v1961
        %v2122 = vmax.f32 %v1058, %v2002
        %v2123 = vmax.f32 %v1060, %v2004
        %v2124 = vmax.f32 %v1101, %v2045
        %v2125 = vmax.f32 %v1103, %v2047
        %v2126 = vmax.f32 %v1144, %v2088
        %v2127 = vmax.f32 %v1146, %v2090
        %v2128 = vmax.f32 %v503, %v1447
        %v2129 = vmax.f32 %v505, %v1449
        %v2130 = vmax.f32 %v546, %v1490
        %v2131 = vmax.f32 %v548, %v1492
        %v2132 = vmax.f32 %v589, %v1533
        %v2133 = vmax.f32 %v591, %v1535
        %v2134 = vmax.f32 %v632, %v1576
        %v2135 = vmax.f32 %v634, %v1578
        %v2136 = vmax.f32 %v675, %v1619
        %v2137 = vmax.f32 %v677, %v1621
        %v2138 = vmax.f32 %v718, %v1662
        %v2139 = vmax.f32 %v720, %v1664
        %v2140 = vmax.f32 %v761, %v1705
        %v2141 = vmax.f32 %v763, %v1707
        %v2142 = vmax.f32 %v804, %v1748
        %v2143 = vmax.f32 %v806, %v1750
        %v2144 = vmax.f32 %v847, %v1791
        %v2145 = vmax.f32 %v849, %v1793
        %v2146 = vmax.f32 %v890, %v1834
        %v2147 = vmax.f32 %v892, %v1836
        %v2148 = vmax.f32 %v933, %v1877
        %v2149 = vmax.f32 %v935, %v1879
        %v2150 = vmax.f32 %v976, %v1920
        %v2151 = vmax.f32 %v978, %v1922
        %v2152 = vmax.f32 %v1019, %v1963
        %v2153 = vmax.f32 %v1021, %v1965
        %v2154 = vmax.f32 %v1062, %v2006
        %v2155 = vmax.f32 %v1064, %v2008
        %v2156 = vmax.f32 %v1105, %v2049
        %v2157 = vmax.f32 %v1107, %v2051
        %v2158 = vmax.f32 %v1148, %v2092
        %v2159 = vmax.f32 %v1150, %v2094
        %v2160 = vld [vmem:[%s194 + $0x100] sm:$0xff]
        %v2161 = vld [vmem:[%s194 + $0x108] sm:$0xff]
        %v2162 = vld [vmem:[%s194 + $0x110] sm:$0xff]
        %v2163 = vld [vmem:[%s194 + $0x118] sm:$0xff]
        %v2164 = vld [vmem:[%s194 + $0x120] sm:$0xff]
        %v2165 = vld [vmem:[%s194 + $0x128] sm:$0xff]
        %v2166 = vld [vmem:[%s194 + $0x130] sm:$0xff]
        %v2167 = vld [vmem:[%s194 + $0x138] sm:$0xff]
        %v2168 = vld [vmem:[%s194 + $0x140] sm:$0xff]
        %v2169 = vld [vmem:[%s194 + $0x148] sm:$0xff]
        %v2170 = vld [vmem:[%s194 + $0x150] sm:$0xff]
        %v2171 = vld [vmem:[%s194 + $0x158] sm:$0xff]
        %v2172 = vld [vmem:[%s194 + $0x160] sm:$0xff]
        %v2173 = vld [vmem:[%s194 + $0x168] sm:$0xff]
        %v2174 = vld [vmem:[%s194 + $0x170] sm:$0xff]
        %v2175 = vld [vmem:[%s194 + $0x178] sm:$0xff]
        %v2176 = vld [vmem:[%s194 + $0x300] sm:$0x11]
        %v2177 = vld [vmem:[%s194 + $0x308] sm:$0x11]
        %v2178 = vld [vmem:[%s194 + $0x310] sm:$0x11]
        %v2179 = vld [vmem:[%s194 + $0x318] sm:$0x11]
        %v2180 = vld [vmem:[%s194 + $0x320] sm:$0x11]
        %v2181 = vld [vmem:[%s194 + $0x328] sm:$0x11]
        %v2182 = vld [vmem:[%s194 + $0x330] sm:$0x11]
        %v2183 = vld [vmem:[%s194 + $0x338] sm:$0x11]
        %v2184 = vld [vmem:[%s194 + $0x340] sm:$0x11]
        %v2185 = vld [vmem:[%s194 + $0x348] sm:$0x11]
        %v2186 = vld [vmem:[%s194 + $0x350] sm:$0x11]
        %v2187 = vld [vmem:[%s194 + $0x358] sm:$0x11]
        %v2188 = vld [vmem:[%s194 + $0x360] sm:$0x11]
        %v2189 = vld [vmem:[%s194 + $0x368] sm:$0x11]
        %v2190 = vld [vmem:[%s194 + $0x370] sm:$0x11]
        %v2191 = vld [vmem:[%s194 + $0x378] sm:$0x11]
        %v2224 = vunpack.c.l.b16 %v2160
        %v2225 = vunpack.c.h.b16 %v2160
        %v2226 = vunpack.c.l.b16 %v2161
        %v2227 = vunpack.c.h.b16 %v2161
        %v2228 = vunpack.c.l.b16 %v2162
        %v2229 = vunpack.c.h.b16 %v2162
        %v2230 = vunpack.c.l.b16 %v2163
        %v2231 = vunpack.c.h.b16 %v2163
        %v2232 = vunpack.c.l.b16 %v2164
        %v2233 = vunpack.c.h.b16 %v2164
        %v2234 = vunpack.c.l.b16 %v2165
        %v2235 = vunpack.c.h.b16 %v2165
        %v2236 = vunpack.c.l.b16 %v2166
        %v2237 = vunpack.c.h.b16 %v2166
        %v2238 = vunpack.c.l.b16 %v2167
        %v2239 = vunpack.c.h.b16 %v2167
        %v2240 = vunpack.c.l.b16 %v2168
        %v2241 = vunpack.c.h.b16 %v2168
        %v2242 = vunpack.c.l.b16 %v2169
        %v2243 = vunpack.c.h.b16 %v2169
        %v2244 = vunpack.c.l.b16 %v2170
        %v2245 = vunpack.c.h.b16 %v2170
        %v2246 = vunpack.c.l.b16 %v2171
        %v2247 = vunpack.c.h.b16 %v2171
        %v2248 = vunpack.c.l.b16 %v2172
        %v2249 = vunpack.c.h.b16 %v2172
        %v2250 = vunpack.c.l.b16 %v2173
        %v2251 = vunpack.c.h.b16 %v2173
        %v2252 = vunpack.c.l.b16 %v2174
        %v2253 = vunpack.c.h.b16 %v2174
        %v2254 = vunpack.c.l.b16 %v2175
        %v2255 = vunpack.c.h.b16 %v2175
        %v2256 = vunpack.c.l.b16 %v2176
        %v2257 = vunpack.c.h.b16 %v2176
        %v2258 = vunpack.c.l.b16 %v2177
        %v2259 = vunpack.c.h.b16 %v2177
        %v2260 = vunpack.c.l.b16 %v2178
        %v2261 = vunpack.c.h.b16 %v2178
        %v2262 = vunpack.c.l.b16 %v2179
        %v2263 = vunpack.c.h.b16 %v2179
        %v2264 = vunpack.c.l.b16 %v2180
        %v2265 = vunpack.c.h.b16 %v2180
        %v2266 = vunpack.c.l.b16 %v2181
        %v2267 = vunpack.c.h.b16 %v2181
        %v2268 = vunpack.c.l.b16 %v2182
        %v2269 = vunpack.c.h.b16 %v2182
        %v2270 = vunpack.c.l.b16 %v2183
        %v2271 = vunpack.c.h.b16 %v2183
        %v2272 = vunpack.c.l.b16 %v2184
        %v2273 = vunpack.c.h.b16 %v2184
        %v2274 = vunpack.c.l.b16 %v2185
        %v2275 = vunpack.c.h.b16 %v2185
        %v2276 = vunpack.c.l.b16 %v2186
        %v2277 = vunpack.c.h.b16 %v2186
        %v2278 = vunpack.c.l.b16 %v2187
        %v2279 = vunpack.c.h.b16 %v2187
        %v2280 = vunpack.c.l.b16 %v2188
        %v2281 = vunpack.c.h.b16 %v2188
        %v2282 = vunpack.c.l.b16 %v2189
        %v2283 = vunpack.c.h.b16 %v2189
        %v2284 = vunpack.c.l.b16 %v2190
        %v2285 = vunpack.c.h.b16 %v2190
        %v2286 = vunpack.c.l.b16 %v2191
        %v2287 = vunpack.c.h.b16 %v2191
        %v2288 = vpack.c.b16 %v2256, %v2224
        %v2289 = vpack.c.b16 %v2257, %v2225
        %v2290 = vpack.c.b16 %v2258, %v2226
        %v2291 = vpack.c.b16 %v2259, %v2227
        %v2292 = vpack.c.b16 %v2260, %v2228
        %v2293 = vpack.c.b16 %v2261, %v2229
        %v2294 = vpack.c.b16 %v2262, %v2230
        %v2295 = vpack.c.b16 %v2263, %v2231
        %v2296 = vpack.c.b16 %v2264, %v2232
        %v2297 = vpack.c.b16 %v2265, %v2233
        %v2298 = vpack.c.b16 %v2266, %v2234
        %v2299 = vpack.c.b16 %v2267, %v2235
        %v2300 = vpack.c.b16 %v2268, %v2236
        %v2301 = vpack.c.b16 %v2269, %v2237
        %v2302 = vpack.c.b16 %v2270, %v2238
        %v2303 = vpack.c.b16 %v2271, %v2239
        %v2304 = vpack.c.b16 %v2272, %v2240
        %v2305 = vpack.c.b16 %v2273, %v2241
        %v2306 = vpack.c.b16 %v2274, %v2242
        %v2307 = vpack.c.b16 %v2275, %v2243
        %v2308 = vpack.c.b16 %v2276, %v2244
        %v2309 = vpack.c.b16 %v2277, %v2245
        %v2310 = vpack.c.b16 %v2278, %v2246
        %v2311 = vpack.c.b16 %v2279, %v2247
        %v2312 = vpack.c.b16 %v2280, %v2248
        %v2313 = vpack.c.b16 %v2281, %v2249
        %v2314 = vpack.c.b16 %v2282, %v2250
        %v2315 = vpack.c.b16 %v2283, %v2251
        %v2316 = vpack.c.b16 %v2284, %v2252
        %v2317 = vpack.c.b16 %v2285, %v2253
        %v2318 = vpack.c.b16 %v2286, %v2254
        %v2319 = vpack.c.b16 %v2287, %v2255
        %v2321 = vsel %vm367, %v2288, 0
        %v2324 = vsel %vm367, %v2289, 0
        %v2327 = vsel %vm367, %v2290, 0
        %v2330 = vsel %vm367, %v2291, 0
        %v2333 = vsel %vm367, %v2292, 0
        %v2336 = vsel %vm367, %v2293, 0
        %v2339 = vsel %vm367, %v2294, 0
        %v2342 = vsel %vm367, %v2295, 0
        %v2345 = vsel %vm367, %v2296, 0
        %v2348 = vsel %vm367, %v2297, 0
        %v2351 = vsel %vm367, %v2298, 0
        %v2354 = vsel %vm367, %v2299, 0
        %v2357 = vsel %vm367, %v2300, 0
        %v2360 = vsel %vm367, %v2301, 0
        %v2363 = vsel %vm367, %v2302, 0
        %v2366 = vsel %vm367, %v2303, 0
        %v2369 = vsel %vm367, %v2304, 0
        %v2372 = vsel %vm367, %v2305, 0
        %v2375 = vsel %vm367, %v2306, 0
        %v2378 = vsel %vm367, %v2307, 0
        %v2381 = vsel %vm367, %v2308, 0
        %v2384 = vsel %vm367, %v2309, 0
        %v2387 = vsel %vm367, %v2310, 0
        %v2390 = vsel %vm367, %v2311, 0
        %v2393 = vsel %vm367, %v2312, 0
        %v2396 = vsel %vm367, %v2313, 0
        %v2399 = vsel %vm367, %v2314, 0
        %v2402 = vsel %vm367, %v2315, 0
        %v2405 = vsel %vm367, %v2316, 0
        %v2408 = vsel %vm367, %v2317, 0
        %v2411 = vsel %vm367, %v2318, 0
        %v2414 = vsel %vm367, %v2319, 0
        %2416 = vmatprep.subr.bf16.mxu0 %v2324
        %2417 = vmatpush1.bf16.msra.mxu0 %v2321
        %2418 = vmatprep.subr.bf16.mxu0 0
        %2419 = vmatpush1.bf16.msra.mxu0 0
        %2420 = vmatprep.subr.bf16.mxu0 0
        %2421 = vmatpush1.bf16.msra.mxu0 0
        %2422 = vmatprep.subr.bf16.mxu0 0
        %2423 = vmatpush1.bf16.msra.mxu0 0
        %2424 = vmatprep.subr.bf16.mxu0 0
        %2425 = vmatpush1.bf16.msra.mxu0 0
        %2426 = vmatprep.subr.bf16.mxu0 0
        %2427 = vmatpush1.bf16.msra.mxu0 0
        %2428 = vmatprep.subr.bf16.mxu0 0
        %2429 = vmatpush1.bf16.msra.mxu0 0
        %2430 = vmatprep.subr.bf16.mxu0 0
        %2431 = vmatpush1.bf16.msra.mxu0 0
        %2432 = vmatprep.subr.bf16.mxu0 0
        %2433 = vmatpush1.bf16.msra.mxu0 0
        %2434 = vmatprep.subr.bf16.mxu0 0
        %2435 = vmatpush1.bf16.msra.mxu0 0
        %2436 = vmatprep.subr.bf16.mxu0 0
        %2437 = vmatpush1.bf16.msra.mxu0 0
        %2438 = vmatprep.subr.bf16.mxu0 0
        %2439 = vmatpush1.bf16.msra.mxu0 0
        %2440 = vmatprep.subr.bf16.mxu0 0
        %2441 = vmatpush1.bf16.msra.mxu0 0
        %2442 = vmatprep.subr.bf16.mxu0 0
        %2443 = vmatpush1.bf16.msra.mxu0 0
        %2444 = vmatprep.subr.bf16.mxu0 0
        %2445 = vmatpush1.bf16.msra.mxu0 0
        %2446 = vmatprep.subr.bf16.mxu0 0
        %2447 = vmatpush1.bf16.msra.mxu0 0
        %2448 = vmatprep.mubr.bf16.mxu0 0
        %2449 = vmatmul.mubr.bf16.gmra.mrb[0].mxu0 %v365
        %v2450 = vpop.f32.mrb[0].mxu0
        %v2451 = vadd.f32 0.0, %v2450
        %v2452 = vpop.f32.mrb[0].mxu0
        %v2453 = vadd.f32 0.0, %v2452
        %v2454 = vpop.f32.mrb[0].mxu0
        %v2455 = vadd.f32 0.0, %v2454
        %v2456 = vpop.f32.mrb[0].mxu0
        %v2457 = vadd.f32 0.0, %v2456
        %2458 = vdwg.mxu0
        %2459 = vmatprep.subr.bf16.mxu0 %v2330
        %2460 = vmatpush1.bf16.msra.mxu0 %v2327
        %2461 = vmatprep.subr.bf16.mxu0 0
        %2462 = vmatpush1.bf16.msra.mxu0 0
        %2463 = vmatprep.subr.bf16.mxu0 0
        %2464 = vmatpush1.bf16.msra.mxu0 0
        %2465 = vmatprep.subr.bf16.mxu0 0
        %2466 = vmatpush1.bf16.msra.mxu0 0
        %2467 = vmatprep.subr.bf16.mxu0 0
        %2468 = vmatpush1.bf16.msra.mxu0 0
        %2469 = vmatprep.subr.bf16.mxu0 0
        %2470 = vmatpush1.bf16.msra.mxu0 0
        %2471 = vmatprep.subr.bf16.mxu0 0
        %2472 = vmatpush1.bf16.msra.mxu0 0
        %2473 = vmatprep.subr.bf16.mxu0 0
        %2474 = vmatpush1.bf16.msra.mxu0 0
        %2475 = vmatprep.subr.bf16.mxu0 0
        %2476 = vmatpush1.bf16.msra.mxu0 0
        %2477 = vmatprep.subr.bf16.mxu0 0
        %2478 = vmatpush1.bf16.msra.mxu0 0
        %2479 = vmatprep.subr.bf16.mxu0 0
        %2480 = vmatpush1.bf16.msra.mxu0 0
        %2481 = vmatprep.subr.bf16.mxu0 0
        %2482 = vmatpush1.bf16.msra.mxu0 0
        %2483 = vmatprep.subr.bf16.mxu0 0
        %2484 = vmatpush1.bf16.msra.mxu0 0
        %2485 = vmatprep.subr.bf16.mxu0 0
        %2486 = vmatpush1.bf16.msra.mxu0 0
        %2487 = vmatprep.subr.bf16.mxu0 0
        %2488 = vmatpush1.bf16.msra.mxu0 0
        %2489 = vmatprep.subr.bf16.mxu0 0
        %2490 = vmatpush1.bf16.msra.mxu0 0
        %2491 = vmatprep.mubr.bf16.mxu0 0
        %2492 = vmatmul.mubr.bf16.gmra.mrb[0].mxu0 %v365
        %v2493 = vpop.f32.mrb[0].mxu0
        %v2494 = vadd.f32 0.0, %v2493
        %v2495 = vpop.f32.mrb[0].mxu0
        %v2496 = vadd.f32 0.0, %v2495
        %v2497 = vpop.f32.mrb[0].mxu0
        %v2498 = vadd.f32 0.0, %v2497
        %v2499 = vpop.f32.mrb[0].mxu0
        %v2500 = vadd.f32 0.0, %v2499
        %2501 = vdwg.mxu0
        %2502 = vmatprep.subr.bf16.mxu0 %v2336
        %2503 = vmatpush1.bf16.msra.mxu0 %v2333
        %2504 = vmatprep.subr.bf16.mxu0 0
        %2505 = vmatpush1.bf16.msra.mxu0 0
        %2506 = vmatprep.subr.bf16.mxu0 0
        %2507 = vmatpush1.bf16.msra.mxu0 0
        %2508 = vmatprep.subr.bf16.mxu0 0
        %2509 = vmatpush1.bf16.msra.mxu0 0
        %2510 = vmatprep.subr.bf16.mxu0 0
        %2511 = vmatpush1.bf16.msra.mxu0 0
        %2512 = vmatprep.subr.bf16.mxu0 0
        %2513 = vmatpush1.bf16.msra.mxu0 0
        %2514 = vmatprep.subr.bf16.mxu0 0
        %2515 = vmatpush1.bf16.msra.mxu0 0
        %2516 = vmatprep.subr.bf16.mxu0 0
        %2517 = vmatpush1.bf16.msra.mxu0 0
        %2518 = vmatprep.subr.bf16.mxu0 0
        %2519 = vmatpush1.bf16.msra.mxu0 0
        %2520 = vmatprep.subr.bf16.mxu0 0
        %2521 = vmatpush1.bf16.msra.mxu0 0
        %2522 = vmatprep.subr.bf16.mxu0 0
        %2523 = vmatpush1.bf16.msra.mxu0 0
        %2524 = vmatprep.subr.bf16.mxu0 0
        %2525 = vmatpush1.bf16.msra.mxu0 0
        %2526 = vmatprep.subr.bf16.mxu0 0
        %2527 = vmatpush1.bf16.msra.mxu0 0
        %2528 = vmatprep.subr.bf16.mxu0 0
        %2529 = vmatpush1.bf16.msra.mxu0 0
        %2530 = vmatprep.subr.bf16.mxu0 0
        %2531 = vmatpush1.bf16.msra.mxu0 0
        %2532 = vmatprep.subr.bf16.mxu0 0
        %2533 = vmatpush1.bf16.msra.mxu0 0
        %2534 = vmatprep.mubr.bf16.mxu0 0
        %2535 = vmatmul.mubr.bf16.gmra.mrb[0].mxu0 %v365
        %v2536 = vpop.f32.mrb[0].mxu0
        %v2537 = vadd.f32 0.0, %v2536
        %v2538 = vpop.f32.mrb[0].mxu0
        %v2539 = vadd.f32 0.0, %v2538
        %v2540 = vpop.f32.mrb[0].mxu0
        %v2541 = vadd.f32 0.0, %v2540
        %v2542 = vpop.f32.mrb[0].mxu0
        %v2543 = vadd.f32 0.0, %v2542
        %2544 = vdwg.mxu0
        %2545 = vmatprep.subr.bf16.mxu0 %v2342
        %2546 = vmatpush1.bf16.msra.mxu0 %v2339
        %2547 = vmatprep.subr.bf16.mxu0 0
        %2548 = vmatpush1.bf16.msra.mxu0 0
        %2549 = vmatprep.subr.bf16.mxu0 0
        %2550 = vmatpush1.bf16.msra.mxu0 0
        %2551 = vmatprep.subr.bf16.mxu0 0
        %2552 = vmatpush1.bf16.msra.mxu0 0
        %2553 = vmatprep.subr.bf16.mxu0 0
        %2554 = vmatpush1.bf16.msra.mxu0 0
        %2555 = vmatprep.subr.bf16.mxu0 0
        %2556 = vmatpush1.bf16.msra.mxu0 0
        %2557 = vmatprep.subr.bf16.mxu0 0
        %2558 = vmatpush1.bf16.msra.mxu0 0
        %2559 = vmatprep.subr.bf16.mxu0 0
        %2560 = vmatpush1.bf16.msra.mxu0 0
        %2561 = vmatprep.subr.bf16.mxu0 0
        %2562 = vmatpush1.bf16.msra.mxu0 0
        %2563 = vmatprep.subr.bf16.mxu0 0
        %2564 = vmatpush1.bf16.msra.mxu0 0
        %2565 = vmatprep.subr.bf16.mxu0 0
        %2566 = vmatpush1.bf16.msra.mxu0 0
        %2567 = vmatprep.subr.bf16.mxu0 0
        %2568 = vmatpush1.bf16.msra.mxu0 0
        %2569 = vmatprep.subr.bf16.mxu0 0
        %2570 = vmatpush1.bf16.msra.mxu0 0
        %2571 = vmatprep.subr.bf16.mxu0 0
        %2572 = vmatpush1.bf16.msra.mxu0 0
        %2573 = vmatprep.subr.bf16.mxu0 0
        %2574 = vmatpush1.bf16.msra.mxu0 0
        %2575 = vmatprep.subr.bf16.mxu0 0
        %2576 = vmatpush1.bf16.msra.mxu0 0
        %2577 = vmatprep.mubr.bf16.mxu0 0
        %2578 = vmatmul.mubr.bf16.gmra.mrb[0].mxu0 %v365
        %v2579 = vpop.f32.mrb[0].mxu0
        %v2580 = vadd.f32 0.0, %v2579
        %v2581 = vpop.f32.mrb[0].mxu0
        %v2582 = vadd.f32 0.0, %v2581
        %v2583 = vpop.f32.mrb[0].mxu0
        %v2584 = vadd.f32 0.0, %v2583
        %v2585 = vpop.f32.mrb[0].mxu0
        %v2586 = vadd.f32 0.0, %v2585
        %2587 = vdwg.mxu0
        %2588 = vmatprep.subr.bf16.mxu0 %v2348
        %2589 = vmatpush1.bf16.msra.mxu0 %v2345
        %2590 = vmatprep.subr.bf16.mxu0 0
        %2591 = vmatpush1.bf16.msra.mxu0 0
        %2592 = vmatprep.subr.bf16.mxu0 0
        %2593 = vmatpush1.bf16.msra.mxu0 0
        %2594 = vmatprep.subr.bf16.mxu0 0
        %2595 = vmatpush1.bf16.msra.mxu0 0
        %2596 = vmatprep.subr.bf16.mxu0 0
        %2597 = vmatpush1.bf16.msra.mxu0 0
        %2598 = vmatprep.subr.bf16.mxu0 0
        %2599 = vmatpush1.bf16.msra.mxu0 0
        %2600 = vmatprep.subr.bf16.mxu0 0
        %2601 = vmatpush1.bf16.msra.mxu0 0
        %2602 = vmatprep.subr.bf16.mxu0 0
        %2603 = vmatpush1.bf16.msra.mxu0 0
        %2604 = vmatprep.subr.bf16.mxu0 0
        %2605 = vmatpush1.bf16.msra.mxu0 0
        %2606 = vmatprep.subr.bf16.mxu0 0
        %2607 = vmatpush1.bf16.msra.mxu0 0
        %2608 = vmatprep.subr.bf16.mxu0 0
        %2609 = vmatpush1.bf16.msra.mxu0 0
        %2610 = vmatprep.subr.bf16.mxu0 0
        %2611 = vmatpush1.bf16.msra.mxu0 0
        %2612 = vmatprep.subr.bf16.mxu0 0
        %2613 = vmatpush1.bf16.msra.mxu0 0
        %2614 = vmatprep.subr.bf16.mxu0 0
        %2615 = vmatpush1.bf16.msra.mxu0 0
        %2616 = vmatprep.subr.bf16.mxu0 0
        %2617 = vmatpush1.bf16.msra.mxu0 0
        %2618 = vmatprep.subr.bf16.mxu0 0
        %2619 = vmatpush1.bf16.msra.mxu0 0
        %2620 = vmatprep.mubr.bf16.mxu0 0
        %2621 = vmatmul.mubr.bf16.gmra.mrb[0].mxu0 %v365
        %v2622 = vpop.f32.mrb[0].mxu0
        %v2623 = vadd.f32 0.0, %v2622
        %v2624 = vpop.f32.mrb[0].mxu0
        %v2625 = vadd.f32 0.0, %v2624
        %v2626 = vpop.f32.mrb[0].mxu0
        %v2627 = vadd.f32 0.0, %v2626
        %v2628 = vpop.f32.mrb[0].mxu0
        %v2629 = vadd.f32 0.0, %v2628
        %2630 = vdwg.mxu0
        %2631 = vmatprep.subr.bf16.mxu0 %v2354
        %2632 = vmatpush1.bf16.msra.mxu0 %v2351
        %2633 = vmatprep.subr.bf16.mxu0 0
        %2634 = vmatpush1.bf16.msra.mxu0 0
        %2635 = vmatprep.subr.bf16.mxu0 0
        %2636 = vmatpush1.bf16.msra.mxu0 0
        %2637 = vmatprep.subr.bf16.mxu0 0
        %2638 = vmatpush1.bf16.msra.mxu0 0
        %2639 = vmatprep.subr.bf16.mxu0 0
        %2640 = vmatpush1.bf16.msra.mxu0 0
        %2641 = vmatprep.subr.bf16.mxu0 0
        %2642 = vmatpush1.bf16.msra.mxu0 0
        %2643 = vmatprep.subr.bf16.mxu0 0
        %2644 = vmatpush1.bf16.msra.mxu0 0
        %2645 = vmatprep.subr.bf16.mxu0 0
        %2646 = vmatpush1.bf16.msra.mxu0 0
        %2647 = vmatprep.subr.bf16.mxu0 0
        %2648 = vmatpush1.bf16.msra.mxu0 0
        %2649 = vmatprep.subr.bf16.mxu0 0
        %2650 = vmatpush1.bf16.msra.mxu0 0
        %2651 = vmatprep.subr.bf16.mxu0 0
        %2652 = vmatpush1.bf16.msra.mxu0 0
        %2653 = vmatprep.subr.bf16.mxu0 0
        %2654 = vmatpush1.bf16.msra.mxu0 0
        %2655 = vmatprep.subr.bf16.mxu0 0
        %2656 = vmatpush1.bf16.msra.mxu0 0
        %2657 = vmatprep.subr.bf16.mxu0 0
        %2658 = vmatpush1.bf16.msra.mxu0 0
        %2659 = vmatprep.subr.bf16.mxu0 0
        %2660 = vmatpush1.bf16.msra.mxu0 0
        %2661 = vmatprep.subr.bf16.mxu0 0
        %2662 = vmatpush1.bf16.msra.mxu0 0
        %2663 = vmatprep.mubr.bf16.mxu0 0
        %2664 = vmatmul.mubr.bf16.gmra.mrb[0].mxu0 %v365
        %v2665 = vpop.f32.mrb[0].mxu0
        %v2666 = vadd.f32 0.0, %v2665
        %v2667 = vpop.f32.mrb[0].mxu0
        %v2668 = vadd.f32 0.0, %v2667
        %v2669 = vpop.f32.mrb[0].mxu0
        %v2670 = vadd.f32 0.0, %v2669
        %v2671 = vpop.f32.mrb[0].mxu0
        %v2672 = vadd.f32 0.0, %v2671
        %2673 = vdwg.mxu0
        %2674 = vmatprep.subr.bf16.mxu0 %v2360
        %2675 = vmatpush1.bf16.msra.mxu0 %v2357
        %2676 = vmatprep.subr.bf16.mxu0 0
        %2677 = vmatpush1.bf16.msra.mxu0 0
        %2678 = vmatprep.subr.bf16.mxu0 0
        %2679 = vmatpush1.bf16.msra.mxu0 0
        %2680 = vmatprep.subr.bf16.mxu0 0
        %2681 = vmatpush1.bf16.msra.mxu0 0
        %2682 = vmatprep.subr.bf16.mxu0 0
        %2683 = vmatpush1.bf16.msra.mxu0 0
        %2684 = vmatprep.subr.bf16.mxu0 0
        %2685 = vmatpush1.bf16.msra.mxu0 0
        %2686 = vmatprep.subr.bf16.mxu0 0
        %2687 = vmatpush1.bf16.msra.mxu0 0
        %2688 = vmatprep.subr.bf16.mxu0 0
        %2689 = vmatpush1.bf16.msra.mxu0 0
        %2690 = vmatprep.subr.bf16.mxu0 0
        %2691 = vmatpush1.bf16.msra.mxu0 0
        %2692 = vmatprep.subr.bf16.mxu0 0
        %2693 = vmatpush1.bf16.msra.mxu0 0
        %2694 = vmatprep.subr.bf16.mxu0 0
        %2695 = vmatpush1.bf16.msra.mxu0 0
        %2696 = vmatprep.subr.bf16.mxu0 0
        %2697 = vmatpush1.bf16.msra.mxu0 0
        %2698 = vmatprep.subr.bf16.mxu0 0
        %2699 = vmatpush1.bf16.msra.mxu0 0
        %2700 = vmatprep.subr.bf16.mxu0 0
        %2701 = vmatpush1.bf16.msra.mxu0 0
        %2702 = vmatprep.subr.bf16.mxu0 0
        %2703 = vmatpush1.bf16.msra.mxu0 0
        %2704 = vmatprep.subr.bf16.mxu0 0
        %2705 = vmatpush1.bf16.msra.mxu0 0
        %2706 = vmatprep.mubr.bf16.mxu0 0
        %2707 = vmatmul.mubr.bf16.gmra.mrb[0].mxu0 %v365
        %v2708 = vpop.f32.mrb[0].mxu0
        %v2709 = vadd.f32 0.0, %v2708
        %v2710 = vpop.f32.mrb[0].mxu0
        %v2711 = vadd.f32 0.0, %v2710
        %v2712 = vpop.f32.mrb[0].mxu0
        %v2713 = vadd.f32 0.0, %v2712
        %v2714 = vpop.f32.mrb[0].mxu0
        %v2715 = vadd.f32 0.0, %v2714
        %2716 = vdwg.mxu0
        %2717 = vmatprep.subr.bf16.mxu0 %v2366
        %2718 = vmatpush1.bf16.msra.mxu0 %v2363
        %2719 = vmatprep.subr.bf16.mxu0 0
        %2720 = vmatpush1.bf16.msra.mxu0 0
        %2721 = vmatprep.subr.bf16.mxu0 0
        %2722 = vmatpush1.bf16.msra.mxu0 0
        %2723 = vmatprep.subr.bf16.mxu0 0
        %2724 = vmatpush1.bf16.msra.mxu0 0
        %2725 = vmatprep.subr.bf16.mxu0 0
        %2726 = vmatpush1.bf16.msra.mxu0 0
        %2727 = vmatprep.subr.bf16.mxu0 0
        %2728 = vmatpush1.bf16.msra.mxu0 0
        %2729 = vmatprep.subr.bf16.mxu0 0
        %2730 = vmatpush1.bf16.msra.mxu0 0
        %2731 = vmatprep.subr.bf16.mxu0 0
        %2732 = vmatpush1.bf16.msra.mxu0 0
        %2733 = vmatprep.subr.bf16.mxu0 0
        %2734 = vmatpush1.bf16.msra.mxu0 0
        %2735 = vmatprep.subr.bf16.mxu0 0
        %2736 = vmatpush1.bf16.msra.mxu0 0
        %2737 = vmatprep.subr.bf16.mxu0 0
        %2738 = vmatpush1.bf16.msra.mxu0 0
        %2739 = vmatprep.subr.bf16.mxu0 0
        %2740 = vmatpush1.bf16.msra.mxu0 0
        %2741 = vmatprep.subr.bf16.mxu0 0
        %2742 = vmatpush1.bf16.msra.mxu0 0
        %2743 = vmatprep.subr.bf16.mxu0 0
        %2744 = vmatpush1.bf16.msra.mxu0 0
        %2745 = vmatprep.subr.bf16.mxu0 0
        %2746 = vmatpush1.bf16.msra.mxu0 0
        %2747 = vmatprep.subr.bf16.mxu0 0
        %2748 = vmatpush1.bf16.msra.mxu0 0
        %2749 = vmatprep.mubr.bf16.mxu0 0
        %2750 = vmatmul.mubr.bf16.gmra.mrb[0].mxu0 %v365
        %v2751 = vpop.f32.mrb[0].mxu0
        %v2752 = vadd.f32 0.0, %v2751
        %v2753 = vpop.f32.mrb[0].mxu0
        %v2754 = vadd.f32 0.0, %v2753
        %v2755 = vpop.f32.mrb[0].mxu0
        %v2756 = vadd.f32 0.0, %v2755
        %v2757 = vpop.f32.mrb[0].mxu0
        %v2758 = vadd.f32 0.0, %v2757
        %2759 = vdwg.mxu0
        %2760 = vmatprep.subr.bf16.mxu0 %v2372
        %2761 = vmatpush1.bf16.msra.mxu0 %v2369
        %2762 = vmatprep.subr.bf16.mxu0 0
        %2763 = vmatpush1.bf16.msra.mxu0 0
        %2764 = vmatprep.subr.bf16.mxu0 0
        %2765 = vmatpush1.bf16.msra.mxu0 0
        %2766 = vmatprep.subr.bf16.mxu0 0
        %2767 = vmatpush1.bf16.msra.mxu0 0
        %2768 = vmatprep.subr.bf16.mxu0 0
        %2769 = vmatpush1.bf16.msra.mxu0 0
        %2770 = vmatprep.subr.bf16.mxu0 0
        %2771 = vmatpush1.bf16.msra.mxu0 0
        %2772 = vmatprep.subr.bf16.mxu0 0
        %2773 = vmatpush1.bf16.msra.mxu0 0
        %2774 = vmatprep.subr.bf16.mxu0 0
        %2775 = vmatpush1.bf16.msra.mxu0 0
        %2776 = vmatprep.subr.bf16.mxu0 0
        %2777 = vmatpush1.bf16.msra.mxu0 0
        %2778 = vmatprep.subr.bf16.mxu0 0
        %2779 = vmatpush1.bf16.msra.mxu0 0
        %2780 = vmatprep.subr.bf16.mxu0 0
        %2781 = vmatpush1.bf16.msra.mxu0 0
        %2782 = vmatprep.subr.bf16.mxu0 0
        %2783 = vmatpush1.bf16.msra.mxu0 0
        %2784 = vmatprep.subr.bf16.mxu0 0
        %2785 = vmatpush1.bf16.msra.mxu0 0
        %2786 = vmatprep.subr.bf16.mxu0 0
        %2787 = vmatpush1.bf16.msra.mxu0 0
        %2788 = vmatprep.subr.bf16.mxu0 0
        %2789 = vmatpush1.bf16.msra.mxu0 0
        %2790 = vmatprep.subr.bf16.mxu0 0
        %2791 = vmatpush1.bf16.msra.mxu0 0
        %2792 = vmatprep.mubr.bf16.mxu0 0
        %2793 = vmatmul.mubr.bf16.gmra.mrb[0].mxu0 %v365
        %v2794 = vpop.f32.mrb[0].mxu0
        %v2795 = vadd.f32 0.0, %v2794
        %v2796 = vpop.f32.mrb[0].mxu0
        %v2797 = vadd.f32 0.0, %v2796
        %v2798 = vpop.f32.mrb[0].mxu0
        %v2799 = vadd.f32 0.0, %v2798
        %v2800 = vpop.f32.mrb[0].mxu0
        %v2801 = vadd.f32 0.0, %v2800
        %2802 = vdwg.mxu0
        %2803 = vmatprep.subr.bf16.mxu0 %v2378
        %2804 = vmatpush1.bf16.msra.mxu0 %v2375
        %2805 = vmatprep.subr.bf16.mxu0 0
        %2806 = vmatpush1.bf16.msra.mxu0 0
        %2807 = vmatprep.subr.bf16.mxu0 0
        %2808 = vmatpush1.bf16.msra.mxu0 0
        %2809 = vmatprep.subr.bf16.mxu0 0
        %2810 = vmatpush1.bf16.msra.mxu0 0
        %2811 = vmatprep.subr.bf16.mxu0 0
        %2812 = vmatpush1.bf16.msra.mxu0 0
        %2813 = vmatprep.subr.bf16.mxu0 0
        %2814 = vmatpush1.bf16.msra.mxu0 0
        %2815 = vmatprep.subr.bf16.mxu0 0
        %2816 = vmatpush1.bf16.msra.mxu0 0
        %2817 = vmatprep.subr.bf16.mxu0 0
        %2818 = vmatpush1.bf16.msra.mxu0 0
        %2819 = vmatprep.subr.bf16.mxu0 0
        %2820 = vmatpush1.bf16.msra.mxu0 0
        %2821 = vmatprep.subr.bf16.mxu0 0
        %2822 = vmatpush1.bf16.msra.mxu0 0
        %2823 = vmatprep.subr.bf16.mxu0 0
        %2824 = vmatpush1.bf16.msra.mxu0 0
        %2825 = vmatprep.subr.bf16.mxu0 0
        %2826 = vmatpush1.bf16.msra.mxu0 0
        %2827 = vmatprep.subr.bf16.mxu0 0
        %2828 = vmatpush1.bf16.msra.mxu0 0
        %2829 = vmatprep.subr.bf16.mxu0 0
        %2830 = vmatpush1.bf16.msra.mxu0 0
        %2831 = vmatprep.subr.bf16.mxu0 0
        %2832 = vmatpush1.bf16.msra.mxu0 0
        %2833 = vmatprep.subr.bf16.mxu0 0
        %2834 = vmatpush1.bf16.msra.mxu0 0
        %2835 = vmatprep.mubr.bf16.mxu0 0
        %2836 = vmatmul.mubr.bf16.gmra.mrb[0].mxu0 %v365
        %v2837 = vpop.f32.mrb[0].mxu0
        %v2838 = vadd.f32 0.0, %v2837
        %v2839 = vpop.f32.mrb[0].mxu0
        %v2840 = vadd.f32 0.0, %v2839
        %v2841 = vpop.f32.mrb[0].mxu0
        %v2842 = vadd.f32 0.0, %v2841
        %v2843 = vpop.f32.mrb[0].mxu0
        %v2844 = vadd.f32 0.0, %v2843
        %2845 = vdwg.mxu0
        %2846 = vmatprep.subr.bf16.mxu0 %v2384
        %2847 = vmatpush1.bf16.msra.mxu0 %v2381
        %2848 = vmatprep.subr.bf16.mxu0 0
        %2849 = vmatpush1.bf16.msra.mxu0 0
        %2850 = vmatprep.subr.bf16.mxu0 0
        %2851 = vmatpush1.bf16.msra.mxu0 0
        %2852 = vmatprep.subr.bf16.mxu0 0
        %2853 = vmatpush1.bf16.msra.mxu0 0
        %2854 = vmatprep.subr.bf16.mxu0 0
        %2855 = vmatpush1.bf16.msra.mxu0 0
        %2856 = vmatprep.subr.bf16.mxu0 0
        %2857 = vmatpush1.bf16.msra.mxu0 0
        %2858 = vmatprep.subr.bf16.mxu0 0
        %2859 = vmatpush1.bf16.msra.mxu0 0
        %2860 = vmatprep.subr.bf16.mxu0 0
        %2861 = vmatpush1.bf16.msra.mxu0 0
        %2862 = vmatprep.subr.bf16.mxu0 0
        %2863 = vmatpush1.bf16.msra.mxu0 0
        %2864 = vmatprep.subr.bf16.mxu0 0
        %2865 = vmatpush1.bf16.msra.mxu0 0
        %2866 = vmatprep.subr.bf16.mxu0 0
        %2867 = vmatpush1.bf16.msra.mxu0 0
        %2868 = vmatprep.subr.bf16.mxu0 0
        %2869 = vmatpush1.bf16.msra.mxu0 0
        %2870 = vmatprep.subr.bf16.mxu0 0
        %2871 = vmatpush1.bf16.msra.mxu0 0
        %2872 = vmatprep.subr.bf16.mxu0 0
        %2873 = vmatpush1.bf16.msra.mxu0 0
        %2874 = vmatprep.subr.bf16.mxu0 0
        %2875 = vmatpush1.bf16.msra.mxu0 0
        %2876 = vmatprep.subr.bf16.mxu0 0
        %2877 = vmatpush1.bf16.msra.mxu0 0
        %2878 = vmatprep.mubr.bf16.mxu0 0
        %2879 = vmatmul.mubr.bf16.gmra.mrb[0].mxu0 %v365
        %v2880 = vpop.f32.mrb[0].mxu0
        %v2881 = vadd.f32 0.0, %v2880
        %v2882 = vpop.f32.mrb[0].mxu0
        %v2883 = vadd.f32 0.0, %v2882
        %v2884 = vpop.f32.mrb[0].mxu0
        %v2885 = vadd.f32 0.0, %v2884
        %v2886 = vpop.f32.mrb[0].mxu0
        %v2887 = vadd.f32 0.0, %v2886
        %2888 = vdwg.mxu0
        %2889 = vmatprep.subr.bf16.mxu0 %v2390
        %2890 = vmatpush1.bf16.msra.mxu0 %v2387
        %2891 = vmatprep.subr.bf16.mxu0 0
        %2892 = vmatpush1.bf16.msra.mxu0 0
        %2893 = vmatprep.subr.bf16.mxu0 0
        %2894 = vmatpush1.bf16.msra.mxu0 0
        %2895 = vmatprep.subr.bf16.mxu0 0
        %2896 = vmatpush1.bf16.msra.mxu0 0
        %2897 = vmatprep.subr.bf16.mxu0 0
        %2898 = vmatpush1.bf16.msra.mxu0 0
        %2899 = vmatprep.subr.bf16.mxu0 0
        %2900 = vmatpush1.bf16.msra.mxu0 0
        %2901 = vmatprep.subr.bf16.mxu0 0
        %2902 = vmatpush1.bf16.msra.mxu0 0
        %2903 = vmatprep.subr.bf16.mxu0 0
        %2904 = vmatpush1.bf16.msra.mxu0 0
        %2905 = vmatprep.subr.bf16.mxu0 0
        %2906 = vmatpush1.bf16.msra.mxu0 0
        %2907 = vmatprep.subr.bf16.mxu0 0
        %2908 = vmatpush1.bf16.msra.mxu0 0
        %2909 = vmatprep.subr.bf16.mxu0 0
        %2910 = vmatpush1.bf16.msra.mxu0 0
        %2911 = vmatprep.subr.bf16.mxu0 0
        %2912 = vmatpush1.bf16.msra.mxu0 0
        %2913 = vmatprep.subr.bf16.mxu0 0
        %2914 = vmatpush1.bf16.msra.mxu0 0
        %2915 = vmatprep.subr.bf16.mxu0 0
        %2916 = vmatpush1.bf16.msra.mxu0 0
        %2917 = vmatprep.subr.bf16.mxu0 0
        %2918 = vmatpush1.bf16.msra.mxu0 0
        %2919 = vmatprep.subr.bf16.mxu0 0
        %2920 = vmatpush1.bf16.msra.mxu0 0
        %2921 = vmatprep.mubr.bf16.mxu0 0
        %2922 = vmatmul.mubr.bf16.gmra.mrb[0].mxu0 %v365
        %v2923 = vpop.f32.mrb[0].mxu0
        %v2924 = vadd.f32 0.0, %v2923
        %v2925 = vpop.f32.mrb[0].mxu0
        %v2926 = vadd.f32 0.0, %v2925
        %v2927 = vpop.f32.mrb[0].mxu0
        %v2928 = vadd.f32 0.0, %v2927
        %v2929 = vpop.f32.mrb[0].mxu0
        %v2930 = vadd.f32 0.0, %v2929
        %2931 = vdwg.mxu0
        %2932 = vmatprep.subr.bf16.mxu0 %v2396
        %2933 = vmatpush1.bf16.msra.mxu0 %v2393
        %2934 = vmatprep.subr.bf16.mxu0 0
        %2935 = vmatpush1.bf16.msra.mxu0 0
        %2936 = vmatprep.subr.bf16.mxu0 0
        %2937 = vmatpush1.bf16.msra.mxu0 0
        %2938 = vmatprep.subr.bf16.mxu0 0
        %2939 = vmatpush1.bf16.msra.mxu0 0
        %2940 = vmatprep.subr.bf16.mxu0 0
        %2941 = vmatpush1.bf16.msra.mxu0 0
        %2942 = vmatprep.subr.bf16.mxu0 0
        %2943 = vmatpush1.bf16.msra.mxu0 0
        %2944 = vmatprep.subr.bf16.mxu0 0
        %2945 = vmatpush1.bf16.msra.mxu0 0
        %2946 = vmatprep.subr.bf16.mxu0 0
        %2947 = vmatpush1.bf16.msra.mxu0 0
        %2948 = vmatprep.subr.bf16.mxu0 0
        %2949 = vmatpush1.bf16.msra.mxu0 0
        %2950 = vmatprep.subr.bf16.mxu0 0
        %2951 = vmatpush1.bf16.msra.mxu0 0
        %2952 = vmatprep.subr.bf16.mxu0 0
        %2953 = vmatpush1.bf16.msra.mxu0 0
        %2954 = vmatprep.subr.bf16.mxu0 0
        %2955 = vmatpush1.bf16.msra.mxu0 0
        %2956 = vmatprep.subr.bf16.mxu0 0
        %2957 = vmatpush1.bf16.msra.mxu0 0
        %2958 = vmatprep.subr.bf16.mxu0 0
        %2959 = vmatpush1.bf16.msra.mxu0 0
        %2960 = vmatprep.subr.bf16.mxu0 0
        %2961 = vmatpush1.bf16.msra.mxu0 0
        %2962 = vmatprep.subr.bf16.mxu0 0
        %2963 = vmatpush1.bf16.msra.mxu0 0
        %2964 = vmatprep.mubr.bf16.mxu0 0
        %2965 = vmatmul.mubr.bf16.gmra.mrb[0].mxu0 %v365
        %v2966 = vpop.f32.mrb[0].mxu0
        %v2967 = vadd.f32 0.0, %v2966
        %v2968 = vpop.f32.mrb[0].mxu0
        %v2969 = vadd.f32 0.0, %v2968
        %v2970 = vpop.f32.mrb[0].mxu0
        %v2971 = vadd.f32 0.0, %v2970
        %v2972 = vpop.f32.mrb[0].mxu0
        %v2973 = vadd.f32 0.0, %v2972
        %2974 = vdwg.mxu0
        %2975 = vmatprep.subr.bf16.mxu0 %v2402
        %2976 = vmatpush1.bf16.msra.mxu0 %v2399
        %2977 = vmatprep.subr.bf16.mxu0 0
        %2978 = vmatpush1.bf16.msra.mxu0 0
        %2979 = vmatprep.subr.bf16.mxu0 0
        %2980 = vmatpush1.bf16.msra.mxu0 0
        %2981 = vmatprep.subr.bf16.mxu0 0
        %2982 = vmatpush1.bf16.msra.mxu0 0
        %2983 = vmatprep.subr.bf16.mxu0 0
        %2984 = vmatpush1.bf16.msra.mxu0 0
        %2985 = vmatprep.subr.bf16.mxu0 0
        %2986 = vmatpush1.bf16.msra.mxu0 0
        %2987 = vmatprep.subr.bf16.mxu0 0
        %2988 = vmatpush1.bf16.msra.mxu0 0
        %2989 = vmatprep.subr.bf16.mxu0 0
        %2990 = vmatpush1.bf16.msra.mxu0 0
        %2991 = vmatprep.subr.bf16.mxu0 0
        %2992 = vmatpush1.bf16.msra.mxu0 0
        %2993 = vmatprep.subr.bf16.mxu0 0
        %2994 = vmatpush1.bf16.msra.mxu0 0
        %2995 = vmatprep.subr.bf16.mxu0 0
        %2996 = vmatpush1.bf16.msra.mxu0 0
        %2997 = vmatprep.subr.bf16.mxu0 0
        %2998 = vmatpush1.bf16.msra.mxu0 0
        %2999 = vmatprep.subr.bf16.mxu0 0
        %3000 = vmatpush1.bf16.msra.mxu0 0
        %3001 = vmatprep.subr.bf16.mxu0 0
        %3002 = vmatpush1.bf16.msra.mxu0 0
        %3003 = vmatprep.subr.bf16.mxu0 0
        %3004 = vmatpush1.bf16.msra.mxu0 0
        %3005 = vmatprep.subr.bf16.mxu0 0
        %3006 = vmatpush1.bf16.msra.mxu0 0
        %3007 = vmatprep.mubr.bf16.mxu0 0
        %3008 = vmatmul.mubr.bf16.gmra.mrb[0].mxu0 %v365
        %v3009 = vpop.f32.mrb[0].mxu0
        %v3010 = vadd.f32 0.0, %v3009
        %v3011 = vpop.f32.mrb[0].mxu0
        %v3012 = vadd.f32 0.0, %v3011
        %v3013 = vpop.f32.mrb[0].mxu0
        %v3014 = vadd.f32 0.0, %v3013
        %v3015 = vpop.f32.mrb[0].mxu0
        %v3016 = vadd.f32 0.0, %v3015
        %3017 = vdwg.mxu0
        %3018 = vmatprep.subr.bf16.mxu0 %v2408
        %3019 = vmatpush1.bf16.msra.mxu0 %v2405
        %3020 = vmatprep.subr.bf16.mxu0 0
        %3021 = vmatpush1.bf16.msra.mxu0 0
        %3022 = vmatprep.subr.bf16.mxu0 0
        %3023 = vmatpush1.bf16.msra.mxu0 0
        %3024 = vmatprep.subr.bf16.mxu0 0
        %3025 = vmatpush1.bf16.msra.mxu0 0
        %3026 = vmatprep.subr.bf16.mxu0 0
        %3027 = vmatpush1.bf16.msra.mxu0 0
        %3028 = vmatprep.subr.bf16.mxu0 0
        %3029 = vmatpush1.bf16.msra.mxu0 0
        %3030 = vmatprep.subr.bf16.mxu0 0
        %3031 = vmatpush1.bf16.msra.mxu0 0
        %3032 = vmatprep.subr.bf16.mxu0 0
        %3033 = vmatpush1.bf16.msra.mxu0 0
        %3034 = vmatprep.subr.bf16.mxu0 0
        %3035 = vmatpush1.bf16.msra.mxu0 0
        %3036 = vmatprep.subr.bf16.mxu0 0
        %3037 = vmatpush1.bf16.msra.mxu0 0
        %3038 = vmatprep.subr.bf16.mxu0 0
        %3039 = vmatpush1.bf16.msra.mxu0 0
        %3040 = vmatprep.subr.bf16.mxu0 0
        %3041 = vmatpush1.bf16.msra.mxu0 0
        %3042 = vmatprep.subr.bf16.mxu0 0
        %3043 = vmatpush1.bf16.msra.mxu0 0
        %3044 = vmatprep.subr.bf16.mxu0 0
        %3045 = vmatpush1.bf16.msra.mxu0 0
        %3046 = vmatprep.subr.bf16.mxu0 0
        %3047 = vmatpush1.bf16.msra.mxu0 0
        %3048 = vmatprep.subr.bf16.mxu0 0
        %3049 = vmatpush1.bf16.msra.mxu0 0
        %3050 = vmatprep.mubr.bf16.mxu0 0
        %3051 = vmatmul.mubr.bf16.gmra.mrb[0].mxu0 %v365
        %v3052 = vpop.f32.mrb[0].mxu0
        %v3053 = vadd.f32 0.0, %v3052
        %v3054 = vpop.f32.mrb[0].mxu0
        %v3055 = vadd.f32 0.0, %v3054
        %v3056 = vpop.f32.mrb[0].mxu0
        %v3057 = vadd.f32 0.0, %v3056
        %v3058 = vpop.f32.mrb[0].mxu0
        %v3059 = vadd.f32 0.0, %v3058
        %3060 = vdwg.mxu0
        %3061 = vmatprep.subr.bf16.mxu0 %v2414
        %3062 = vmatpush1.bf16.msra.mxu0 %v2411
        %3063 = vmatprep.subr.bf16.mxu0 0
        %3064 = vmatpush1.bf16.msra.mxu0 0
        %3065 = vmatprep.subr.bf16.mxu0 0
        %3066 = vmatpush1.bf16.msra.mxu0 0
        %3067 = vmatprep.subr.bf16.mxu0 0
        %3068 = vmatpush1.bf16.msra.mxu0 0
        %3069 = vmatprep.subr.bf16.mxu0 0
        %3070 = vmatpush1.bf16.msra.mxu0 0
        %3071 = vmatprep.subr.bf16.mxu0 0
        %3072 = vmatpush1.bf16.msra.mxu0 0
        %3073 = vmatprep.subr.bf16.mxu0 0
        %3074 = vmatpush1.bf16.msra.mxu0 0
        %3075 = vmatprep.subr.bf16.mxu0 0
        %3076 = vmatpush1.bf16.msra.mxu0 0
        %3077 = vmatprep.subr.bf16.mxu0 0
        %3078 = vmatpush1.bf16.msra.mxu0 0
        %3079 = vmatprep.subr.bf16.mxu0 0
        %3080 = vmatpush1.bf16.msra.mxu0 0
        %3081 = vmatprep.subr.bf16.mxu0 0
        %3082 = vmatpush1.bf16.msra.mxu0 0
        %3083 = vmatprep.subr.bf16.mxu0 0
        %3084 = vmatpush1.bf16.msra.mxu0 0
        %3085 = vmatprep.subr.bf16.mxu0 0
        %3086 = vmatpush1.bf16.msra.mxu0 0
        %3087 = vmatprep.subr.bf16.mxu0 0
        %3088 = vmatpush1.bf16.msra.mxu0 0
        %3089 = vmatprep.subr.bf16.mxu0 0
        %3090 = vmatpush1.bf16.msra.mxu0 0
        %3091 = vmatprep.subr.bf16.mxu0 0
        %3092 = vmatpush1.bf16.msra.mxu0 0
        %3093 = vmatprep.mubr.bf16.mxu0 0
        %3094 = vmatmul.mubr.bf16.gmra.mrb[0].mxu0 %v365
        %v3095 = vpop.f32.mrb[0].mxu0
        %v3096 = vadd.f32 0.0, %v3095
        %v3097 = vpop.f32.mrb[0].mxu0
        %v3098 = vadd.f32 0.0, %v3097
        %v3099 = vpop.f32.mrb[0].mxu0
        %v3100 = vadd.f32 0.0, %v3099
        %v3101 = vpop.f32.mrb[0].mxu0
        %v3102 = vadd.f32 0.0, %v3101
        %3103 = vdwg.mxu0
        %v3104 = vmax.f32 %v2096, %v2451
        %v3105 = vmax.f32 %v2097, %v2453
        %v3106 = vmax.f32 %v2098, %v2494
        %v3107 = vmax.f32 %v2099, %v2496
        %v3108 = vmax.f32 %v2100, %v2537
        %v3109 = vmax.f32 %v2101, %v2539
        %v3110 = vmax.f32 %v2102, %v2580
        %v3111 = vmax.f32 %v2103, %v2582
        %v3112 = vmax.f32 %v2104, %v2623
        %v3113 = vmax.f32 %v2105, %v2625
        %v3114 = vmax.f32 %v2106, %v2666
        %v3115 = vmax.f32 %v2107, %v2668
        %v3116 = vmax.f32 %v2108, %v2709
        %v3117 = vmax.f32 %v2109, %v2711
        %v3118 = vmax.f32 %v2110, %v2752
        %v3119 = vmax.f32 %v2111, %v2754
        %v3120 = vmax.f32 %v2112, %v2795
        %v3121 = vmax.f32 %v2113, %v2797
        %v3122 = vmax.f32 %v2114, %v2838
        %v3123 = vmax.f32 %v2115, %v2840
        %v3124 = vmax.f32 %v2116, %v2881
        %v3125 = vmax.f32 %v2117, %v2883
        %v3126 = vmax.f32 %v2118, %v2924
        %v3127 = vmax.f32 %v2119, %v2926
        %v3128 = vmax.f32 %v2120, %v2967
        %v3129 = vmax.f32 %v2121, %v2969
        %v3130 = vmax.f32 %v2122, %v3010
        %v3131 = vmax.f32 %v2123, %v3012
        %v3132 = vmax.f32 %v2124, %v3053
        %v3133 = vmax.f32 %v2125, %v3055
        %v3134 = vmax.f32 %v2126, %v3096
        %v3135 = vmax.f32 %v2127, %v3098
        %v3136 = vmax.f32 %v2128, %v2455
        %v3137 = vmax.f32 %v2129, %v2457
        %v3138 = vmax.f32 %v2130, %v2498
        %v3139 = vmax.f32 %v2131, %v2500
        %v3140 = vmax.f32 %v2132, %v2541
        %v3141 = vmax.f32 %v2133, %v2543
        %v3142 = vmax.f32 %v2134, %v2584
        %v3143 = vmax.f32 %v2135, %v2586
        %v3144 = vmax.f32 %v2136, %v2627
        %v3145 = vmax.f32 %v2137, %v2629
        %v3146 = vmax.f32 %v2138, %v2670
        %v3147 = vmax.f32 %v2139, %v2672
        %v3148 = vmax.f32 %v2140, %v2713
        %v3149 = vmax.f32 %v2141, %v2715
        %v3150 = vmax.f32 %v2142, %v2756
        %v3151 = vmax.f32 %v2143, %v2758
        %v3152 = vmax.f32 %v2144, %v2799
        %v3153 = vmax.f32 %v2145, %v2801
        %v3154 = vmax.f32 %v2146, %v2842
        %v3155 = vmax.f32 %v2147, %v2844
        %v3156 = vmax.f32 %v2148, %v2885
        %v3157 = vmax.f32 %v2149, %v2887
        %v3158 = vmax.f32 %v2150, %v2928
        %v3159 = vmax.f32 %v2151, %v2930
        %v3160 = vmax.f32 %v2152, %v2971
        %v3161 = vmax.f32 %v2153, %v2973
        %v3162 = vmax.f32 %v2154, %v3014
        %v3163 = vmax.f32 %v2155, %v3016
        %v3164 = vmax.f32 %v2156, %v3057
        %v3165 = vmax.f32 %v2157, %v3059
        %v3166 = vmax.f32 %v2158, %v3100
        %v3167 = vmax.f32 %v2159, %v3102
        %v3168 = vld [vmem:[%s194 + $0x180] sm:$0xff]
        %v3169 = vld [vmem:[%s194 + $0x188] sm:$0xff]
        %v3170 = vld [vmem:[%s194 + $0x190] sm:$0xff]
        %v3171 = vld [vmem:[%s194 + $0x198] sm:$0xff]
        %v3172 = vld [vmem:[%s194 + $0x1a0] sm:$0xff]
        %v3173 = vld [vmem:[%s194 + $0x1a8] sm:$0xff]
        %v3174 = vld [vmem:[%s194 + $0x1b0] sm:$0xff]
        %v3175 = vld [vmem:[%s194 + $0x1b8] sm:$0xff]
        %v3176 = vld [vmem:[%s194 + $0x1c0] sm:$0xff]
        %v3177 = vld [vmem:[%s194 + $0x1c8] sm:$0xff]
        %v3178 = vld [vmem:[%s194 + $0x1d0] sm:$0xff]
        %v3179 = vld [vmem:[%s194 + $0x1d8] sm:$0xff]
        %v3180 = vld [vmem:[%s194 + $0x1e0] sm:$0xff]
        %v3181 = vld [vmem:[%s194 + $0x1e8] sm:$0xff]
        %v3182 = vld [vmem:[%s194 + $0x1f0] sm:$0xff]
        %v3183 = vld [vmem:[%s194 + $0x1f8] sm:$0xff]
        %v3184 = vld [vmem:[%s194 + $0x380] sm:$0x11]
        %v3185 = vld [vmem:[%s194 + $0x388] sm:$0x11]
        %v3186 = vld [vmem:[%s194 + $0x390] sm:$0x11]
        %v3187 = vld [vmem:[%s194 + $0x398] sm:$0x11]
        %v3188 = vld [vmem:[%s194 + $0x3a0] sm:$0x11]
        %v3189 = vld [vmem:[%s194 + $0x3a8] sm:$0x11]
        %v3190 = vld [vmem:[%s194 + $0x3b0] sm:$0x11]
        %v3191 = vld [vmem:[%s194 + $0x3b8] sm:$0x11]
        %v3192 = vld [vmem:[%s194 + $0x3c0] sm:$0x11]
        %v3193 = vld [vmem:[%s194 + $0x3c8] sm:$0x11]
        %v3194 = vld [vmem:[%s194 + $0x3d0] sm:$0x11]
        %v3195 = vld [vmem:[%s194 + $0x3d8] sm:$0x11]
        %v3196 = vld [vmem:[%s194 + $0x3e0] sm:$0x11]
        %v3197 = vld [vmem:[%s194 + $0x3e8] sm:$0x11]
        %v3198 = vld [vmem:[%s194 + $0x3f0] sm:$0x11]
        %v3199 = vld [vmem:[%s194 + $0x3f8] sm:$0x11]
        %v3232 = vunpack.c.l.b16 %v3168
        %v3233 = vunpack.c.h.b16 %v3168
        %v3234 = vunpack.c.l.b16 %v3169
        %v3235 = vunpack.c.h.b16 %v3169
        %v3236 = vunpack.c.l.b16 %v3170
        %v3237 = vunpack.c.h.b16 %v3170
        %v3238 = vunpack.c.l.b16 %v3171
        %v3239 = vunpack.c.h.b16 %v3171
        %v3240 = vunpack.c.l.b16 %v3172
        %v3241 = vunpack.c.h.b16 %v3172
        %v3242 = vunpack.c.l.b16 %v3173
        %v3243 = vunpack.c.h.b16 %v3173
        %v3244 = vunpack.c.l.b16 %v3174
        %v3245 = vunpack.c.h.b16 %v3174
        %v3246 = vunpack.c.l.b16 %v3175
        %v3247 = vunpack.c.h.b16 %v3175
        %v3248 = vunpack.c.l.b16 %v3176
        %v3249 = vunpack.c.h.b16 %v3176
        %v3250 = vunpack.c.l.b16 %v3177
        %v3251 = vunpack.c.h.b16 %v3177
        %v3252 = vunpack.c.l.b16 %v3178
        %v3253 = vunpack.c.h.b16 %v3178
        %v3254 = vunpack.c.l.b16 %v3179
        %v3255 = vunpack.c.h.b16 %v3179
        %v3256 = vunpack.c.l.b16 %v3180
        %v3257 = vunpack.c.h.b16 %v3180
        %v3258 = vunpack.c.l.b16 %v3181
        %v3259 = vunpack.c.h.b16 %v3181
        %v3260 = vunpack.c.l.b16 %v3182
        %v3261 = vunpack.c.h.b16 %v3182
        %v3262 = vunpack.c.l.b16 %v3183
        %v3263 = vunpack.c.h.b16 %v3183
        %v3264 = vunpack.c.l.b16 %v3184
        %v3265 = vunpack.c.h.b16 %v3184
        %v3266 = vunpack.c.l.b16 %v3185
        %v3267 = vunpack.c.h.b16 %v3185
        %v3268 = vunpack.c.l.b16 %v3186
        %v3269 = vunpack.c.h.b16 %v3186
        %v3270 = vunpack.c.l.b16 %v3187
        %v3271 = vunpack.c.h.b16 %v3187
        %v3272 = vunpack.c.l.b16 %v3188
        %v3273 = vunpack.c.h.b16 %v3188
        %v3274 = vunpack.c.l.b16 %v3189
        %v3275 = vunpack.c.h.b16 %v3189
        %v3276 = vunpack.c.l.b16 %v3190
        %v3277 = vunpack.c.h.b16 %v3190
        %v3278 = vunpack.c.l.b16 %v3191
        %v3279 = vunpack.c.h.b16 %v3191
        %v3280 = vunpack.c.l.b16 %v3192
        %v3281 = vunpack.c.h.b16 %v3192
        %v3282 = vunpack.c.l.b16 %v3193
        %v3283 = vunpack.c.h.b16 %v3193
        %v3284 = vunpack.c.l.b16 %v3194
        %v3285 = vunpack.c.h.b16 %v3194
        %v3286 = vunpack.c.l.b16 %v3195
        %v3287 = vunpack.c.h.b16 %v3195
        %v3288 = vunpack.c.l.b16 %v3196
        %v3289 = vunpack.c.h.b16 %v3196
        %v3290 = vunpack.c.l.b16 %v3197
        %v3291 = vunpack.c.h.b16 %v3197
        %v3292 = vunpack.c.l.b16 %v3198
        %v3293 = vunpack.c.h.b16 %v3198
        %v3294 = vunpack.c.l.b16 %v3199
        %v3295 = vunpack.c.h.b16 %v3199
        %v3296 = vpack.c.b16 %v3264, %v3232
        %v3297 = vpack.c.b16 %v3265, %v3233
        %v3298 = vpack.c.b16 %v3266, %v3234
        %v3299 = vpack.c.b16 %v3267, %v3235
        %v3300 = vpack.c.b16 %v3268, %v3236
        %v3301 = vpack.c.b16 %v3269, %v3237
        %v3302 = vpack.c.b16 %v3270, %v3238
        %v3303 = vpack.c.b16 %v3271, %v3239
        %v3304 = vpack.c.b16 %v3272, %v3240
        %v3305 = vpack.c.b16 %v3273, %v3241
        %v3306 = vpack.c.b16 %v3274, %v3242
        %v3307 = vpack.c.b16 %v3275, %v3243
        %v3308 = vpack.c.b16 %v3276, %v3244
        %v3309 = vpack.c.b16 %v3277, %v3245
        %v3310 = vpack.c.b16 %v3278, %v3246
        %v3311 = vpack.c.b16 %v3279, %v3247
        %v3312 = vpack.c.b16 %v3280, %v3248
        %v3313 = vpack.c.b16 %v3281, %v3249
        %v3314 = vpack.c.b16 %v3282, %v3250
        %v3315 = vpack.c.b16 %v3283, %v3251
        %v3316 = vpack.c.b16 %v3284, %v3252
        %v3317 = vpack.c.b16 %v3285, %v3253
        %v3318 = vpack.c.b16 %v3286, %v3254
        %v3319 = vpack.c.b16 %v3287, %v3255
        %v3320 = vpack.c.b16 %v3288, %v3256
        %v3321 = vpack.c.b16 %v3289, %v3257
        %v3322 = vpack.c.b16 %v3290, %v3258
        %v3323 = vpack.c.b16 %v3291, %v3259
        %v3324 = vpack.c.b16 %v3292, %v3260
        %v3325 = vpack.c.b16 %v3293, %v3261
        %v3326 = vpack.c.b16 %v3294, %v3262
        %v3327 = vpack.c.b16 %v3295, %v3263
        %v3329 = vsel %vm367, %v3296, 0
        %v3332 = vsel %vm367, %v3297, 0
        %v3335 = vsel %vm367, %v3298, 0
        %v3338 = vsel %vm367, %v3299, 0
        %v3341 = vsel %vm367, %v3300, 0
        %v3344 = vsel %vm367, %v3301, 0
        %v3347 = vsel %vm367, %v3302, 0
        %v3350 = vsel %vm367, %v3303, 0
        %v3353 = vsel %vm367, %v3304, 0
        %v3356 = vsel %vm367, %v3305, 0
        %v3359 = vsel %vm367, %v3306, 0
        %v3362 = vsel %vm367, %v3307, 0
        %v3365 = vsel %vm367, %v3308, 0
        %v3368 = vsel %vm367, %v3309, 0
        %v3371 = vsel %vm367, %v3310, 0
        %v3374 = vsel %vm367, %v3311, 0
        %v3377 = vsel %vm367, %v3312, 0
        %v3380 = vsel %vm367, %v3313, 0
        %v3383 = vsel %vm367, %v3314, 0
        %v3386 = vsel %vm367, %v3315, 0
        %v3389 = vsel %vm367, %v3316, 0
        %v3392 = vsel %vm367, %v3317, 0
        %v3395 = vsel %vm367, %v3318, 0
        %v3398 = vsel %vm367, %v3319, 0
        %v3401 = vsel %vm367, %v3320, 0
        %v3404 = vsel %vm367, %v3321, 0
        %v3407 = vsel %vm367, %v3322, 0
        %v3410 = vsel %vm367, %v3323, 0
        %v3413 = vsel %vm367, %v3324, 0
        %v3416 = vsel %vm367, %v3325, 0
        %v3419 = vsel %vm367, %v3326, 0
        %v3422 = vsel %vm367, %v3327, 0
        %3424 = vmatprep.subr.bf16.mxu0 %v3332
        %3425 = vmatpush1.bf16.msra.mxu0 %v3329
        %3426 = vmatprep.subr.bf16.mxu0 0
        %3427 = vmatpush1.bf16.msra.mxu0 0
        %3428 = vmatprep.subr.bf16.mxu0 0
        %3429 = vmatpush1.bf16.msra.mxu0 0
        %3430 = vmatprep.subr.bf16.mxu0 0
        %3431 = vmatpush1.bf16.msra.mxu0 0
        %3432 = vmatprep.subr.bf16.mxu0 0
        %3433 = vmatpush1.bf16.msra.mxu0 0
        %3434 = vmatprep.subr.bf16.mxu0 0
        %3435 = vmatpush1.bf16.msra.mxu0 0
        %3436 = vmatprep.subr.bf16.mxu0 0
        %3437 = vmatpush1.bf16.msra.mxu0 0
        %3438 = vmatprep.subr.bf16.mxu0 0
        %3439 = vmatpush1.bf16.msra.mxu0 0
        %3440 = vmatprep.subr.bf16.mxu0 0
        %3441 = vmatpush1.bf16.msra.mxu0 0
        %3442 = vmatprep.subr.bf16.mxu0 0
        %3443 = vmatpush1.bf16.msra.mxu0 0
        %3444 = vmatprep.subr.bf16.mxu0 0
        %3445 = vmatpush1.bf16.msra.mxu0 0
        %3446 = vmatprep.subr.bf16.mxu0 0
        %3447 = vmatpush1.bf16.msra.mxu0 0
        %3448 = vmatprep.subr.bf16.mxu0 0
        %3449 = vmatpush1.bf16.msra.mxu0 0
        %3450 = vmatprep.subr.bf16.mxu0 0
        %3451 = vmatpush1.bf16.msra.mxu0 0
        %3452 = vmatprep.subr.bf16.mxu0 0
        %3453 = vmatpush1.bf16.msra.mxu0 0
        %3454 = vmatprep.subr.bf16.mxu0 0
        %3455 = vmatpush1.bf16.msra.mxu0 0
        %3456 = vmatprep.mubr.bf16.mxu0 0
        %3457 = vmatmul.mubr.bf16.gmra.mrb[0].mxu0 %v365
        %v3458 = vpop.f32.mrb[0].mxu0
        %v3459 = vadd.f32 0.0, %v3458
        %v3460 = vpop.f32.mrb[0].mxu0
        %v3461 = vadd.f32 0.0, %v3460
        %v3462 = vpop.f32.mrb[0].mxu0
        %v3463 = vadd.f32 0.0, %v3462
        %v3464 = vpop.f32.mrb[0].mxu0
        %v3465 = vadd.f32 0.0, %v3464
        %3466 = vdwg.mxu0
        %3467 = vmatprep.subr.bf16.mxu0 %v3338
        %3468 = vmatpush1.bf16.msra.mxu0 %v3335
        %3469 = vmatprep.subr.bf16.mxu0 0
        %3470 = vmatpush1.bf16.msra.mxu0 0
        %3471 = vmatprep.subr.bf16.mxu0 0
        %3472 = vmatpush1.bf16.msra.mxu0 0
        %3473 = vmatprep.subr.bf16.mxu0 0
        %3474 = vmatpush1.bf16.msra.mxu0 0
        %3475 = vmatprep.subr.bf16.mxu0 0
        %3476 = vmatpush1.bf16.msra.mxu0 0
        %3477 = vmatprep.subr.bf16.mxu0 0
        %3478 = vmatpush1.bf16.msra.mxu0 0
        %3479 = vmatprep.subr.bf16.mxu0 0
        %3480 = vmatpush1.bf16.msra.mxu0 0
        %3481 = vmatprep.subr.bf16.mxu0 0
        %3482 = vmatpush1.bf16.msra.mxu0 0
        %3483 = vmatprep.subr.bf16.mxu0 0
        %3484 = vmatpush1.bf16.msra.mxu0 0
        %3485 = vmatprep.subr.bf16.mxu0 0
        %3486 = vmatpush1.bf16.msra.mxu0 0
        %3487 = vmatprep.subr.bf16.mxu0 0
        %3488 = vmatpush1.bf16.msra.mxu0 0
        %3489 = vmatprep.subr.bf16.mxu0 0
        %3490 = vmatpush1.bf16.msra.mxu0 0
        %3491 = vmatprep.subr.bf16.mxu0 0
        %3492 = vmatpush1.bf16.msra.mxu0 0
        %3493 = vmatprep.subr.bf16.mxu0 0
        %3494 = vmatpush1.bf16.msra.mxu0 0
        %3495 = vmatprep.subr.bf16.mxu0 0
        %3496 = vmatpush1.bf16.msra.mxu0 0
        %3497 = vmatprep.subr.bf16.mxu0 0
        %3498 = vmatpush1.bf16.msra.mxu0 0
        %3499 = vmatprep.mubr.bf16.mxu0 0
        %3500 = vmatmul.mubr.bf16.gmra.mrb[0].mxu0 %v365
        %v3501 = vpop.f32.mrb[0].mxu0
        %v3502 = vadd.f32 0.0, %v3501
        %v3503 = vpop.f32.mrb[0].mxu0
        %v3504 = vadd.f32 0.0, %v3503
        %v3505 = vpop.f32.mrb[0].mxu0
        %v3506 = vadd.f32 0.0, %v3505
        %v3507 = vpop.f32.mrb[0].mxu0
        %v3508 = vadd.f32 0.0, %v3507
        %3509 = vdwg.mxu0
        %3510 = vmatprep.subr.bf16.mxu0 %v3344
        %3511 = vmatpush1.bf16.msra.mxu0 %v3341
        %3512 = vmatprep.subr.bf16.mxu0 0
        %3513 = vmatpush1.bf16.msra.mxu0 0
        %3514 = vmatprep.subr.bf16.mxu0 0
        %3515 = vmatpush1.bf16.msra.mxu0 0
        %3516 = vmatprep.subr.bf16.mxu0 0
        %3517 = vmatpush1.bf16.msra.mxu0 0
        %3518 = vmatprep.subr.bf16.mxu0 0
        %3519 = vmatpush1.bf16.msra.mxu0 0
        %3520 = vmatprep.subr.bf16.mxu0 0
        %3521 = vmatpush1.bf16.msra.mxu0 0
        %3522 = vmatprep.subr.bf16.mxu0 0
        %3523 = vmatpush1.bf16.msra.mxu0 0
        %3524 = vmatprep.subr.bf16.mxu0 0
        %3525 = vmatpush1.bf16.msra.mxu0 0
        %3526 = vmatprep.subr.bf16.mxu0 0
        %3527 = vmatpush1.bf16.msra.mxu0 0
        %3528 = vmatprep.subr.bf16.mxu0 0
        %3529 = vmatpush1.bf16.msra.mxu0 0
        %3530 = vmatprep.subr.bf16.mxu0 0
        %3531 = vmatpush1.bf16.msra.mxu0 0
        %3532 = vmatprep.subr.bf16.mxu0 0
        %3533 = vmatpush1.bf16.msra.mxu0 0
        %3534 = vmatprep.subr.bf16.mxu0 0
        %3535 = vmatpush1.bf16.msra.mxu0 0
        %3536 = vmatprep.subr.bf16.mxu0 0
        %3537 = vmatpush1.bf16.msra.mxu0 0
        %3538 = vmatprep.subr.bf16.mxu0 0
        %3539 = vmatpush1.bf16.msra.mxu0 0
        %3540 = vmatprep.subr.bf16.mxu0 0
        %3541 = vmatpush1.bf16.msra.mxu0 0
        %3542 = vmatprep.mubr.bf16.mxu0 0
        %3543 = vmatmul.mubr.bf16.gmra.mrb[0].mxu0 %v365
        %v3544 = vpop.f32.mrb[0].mxu0
        %v3545 = vadd.f32 0.0, %v3544
        %v3546 = vpop.f32.mrb[0].mxu0
        %v3547 = vadd.f32 0.0, %v3546
        %v3548 = vpop.f32.mrb[0].mxu0
        %v3549 = vadd.f32 0.0, %v3548
        %v3550 = vpop.f32.mrb[0].mxu0
        %v3551 = vadd.f32 0.0, %v3550
        %3552 = vdwg.mxu0
        %3553 = vmatprep.subr.bf16.mxu0 %v3350
        %3554 = vmatpush1.bf16.msra.mxu0 %v3347
        %3555 = vmatprep.subr.bf16.mxu0 0
        %3556 = vmatpush1.bf16.msra.mxu0 0
        %3557 = vmatprep.subr.bf16.mxu0 0
        %3558 = vmatpush1.bf16.msra.mxu0 0
        %3559 = vmatprep.subr.bf16.mxu0 0
        %3560 = vmatpush1.bf16.msra.mxu0 0
        %3561 = vmatprep.subr.bf16.mxu0 0
        %3562 = vmatpush1.bf16.msra.mxu0 0
        %3563 = vmatprep.subr.bf16.mxu0 0
        %3564 = vmatpush1.bf16.msra.mxu0 0
        %3565 = vmatprep.subr.bf16.mxu0 0
        %3566 = vmatpush1.bf16.msra.mxu0 0
        %3567 = vmatprep.subr.bf16.mxu0 0
        %3568 = vmatpush1.bf16.msra.mxu0 0
        %3569 = vmatprep.subr.bf16.mxu0 0
        %3570 = vmatpush1.bf16.msra.mxu0 0
        %3571 = vmatprep.subr.bf16.mxu0 0
        %3572 = vmatpush1.bf16.msra.mxu0 0
        %3573 = vmatprep.subr.bf16.mxu0 0
        %3574 = vmatpush1.bf16.msra.mxu0 0
        %3575 = vmatprep.subr.bf16.mxu0 0
        %3576 = vmatpush1.bf16.msra.mxu0 0
        %3577 = vmatprep.subr.bf16.mxu0 0
        %3578 = vmatpush1.bf16.msra.mxu0 0
        %3579 = vmatprep.subr.bf16.mxu0 0
        %3580 = vmatpush1.bf16.msra.mxu0 0
        %3581 = vmatprep.subr.bf16.mxu0 0
        %3582 = vmatpush1.bf16.msra.mxu0 0
        %3583 = vmatprep.subr.bf16.mxu0 0
        %3584 = vmatpush1.bf16.msra.mxu0 0
        %3585 = vmatprep.mubr.bf16.mxu0 0
        %3586 = vmatmul.mubr.bf16.gmra.mrb[0].mxu0 %v365
        %v3587 = vpop.f32.mrb[0].mxu0
        %v3588 = vadd.f32 0.0, %v3587
        %v3589 = vpop.f32.mrb[0].mxu0
        %v3590 = vadd.f32 0.0, %v3589
        %v3591 = vpop.f32.mrb[0].mxu0
        %v3592 = vadd.f32 0.0, %v3591
        %v3593 = vpop.f32.mrb[0].mxu0
        %v3594 = vadd.f32 0.0, %v3593
        %3595 = vdwg.mxu0
        %3596 = vmatprep.subr.bf16.mxu0 %v3356
        %3597 = vmatpush1.bf16.msra.mxu0 %v3353
        %3598 = vmatprep.subr.bf16.mxu0 0
        %3599 = vmatpush1.bf16.msra.mxu0 0
        %3600 = vmatprep.subr.bf16.mxu0 0
        %3601 = vmatpush1.bf16.msra.mxu0 0
        %3602 = vmatprep.subr.bf16.mxu0 0
        %3603 = vmatpush1.bf16.msra.mxu0 0
        %3604 = vmatprep.subr.bf16.mxu0 0
        %3605 = vmatpush1.bf16.msra.mxu0 0
        %3606 = vmatprep.subr.bf16.mxu0 0
        %3607 = vmatpush1.bf16.msra.mxu0 0
        %3608 = vmatprep.subr.bf16.mxu0 0
        %3609 = vmatpush1.bf16.msra.mxu0 0
        %3610 = vmatprep.subr.bf16.mxu0 0
        %3611 = vmatpush1.bf16.msra.mxu0 0
        %3612 = vmatprep.subr.bf16.mxu0 0
        %3613 = vmatpush1.bf16.msra.mxu0 0
        %3614 = vmatprep.subr.bf16.mxu0 0
        %3615 = vmatpush1.bf16.msra.mxu0 0
        %3616 = vmatprep.subr.bf16.mxu0 0
        %3617 = vmatpush1.bf16.msra.mxu0 0
        %3618 = vmatprep.subr.bf16.mxu0 0
        %3619 = vmatpush1.bf16.msra.mxu0 0
        %3620 = vmatprep.subr.bf16.mxu0 0
        %3621 = vmatpush1.bf16.msra.mxu0 0
        %3622 = vmatprep.subr.bf16.mxu0 0
        %3623 = vmatpush1.bf16.msra.mxu0 0
        %3624 = vmatprep.subr.bf16.mxu0 0
        %3625 = vmatpush1.bf16.msra.mxu0 0
        %3626 = vmatprep.subr.bf16.mxu0 0
        %3627 = vmatpush1.bf16.msra.mxu0 0
        %3628 = vmatprep.mubr.bf16.mxu0 0
        %3629 = vmatmul.mubr.bf16.gmra.mrb[0].mxu0 %v365
        %v3630 = vpop.f32.mrb[0].mxu0
        %v3631 = vadd.f32 0.0, %v3630
        %v3632 = vpop.f32.mrb[0].mxu0
        %v3633 = vadd.f32 0.0, %v3632
        %v3634 = vpop.f32.mrb[0].mxu0
        %v3635 = vadd.f32 0.0, %v3634
        %v3636 = vpop.f32.mrb[0].mxu0
        %v3637 = vadd.f32 0.0, %v3636
        %3638 = vdwg.mxu0
        %3639 = vmatprep.subr.bf16.mxu0 %v3362
        %3640 = vmatpush1.bf16.msra.mxu0 %v3359
        %3641 = vmatprep.subr.bf16.mxu0 0
        %3642 = vmatpush1.bf16.msra.mxu0 0
        %3643 = vmatprep.subr.bf16.mxu0 0
        %3644 = vmatpush1.bf16.msra.mxu0 0
        %3645 = vmatprep.subr.bf16.mxu0 0
        %3646 = vmatpush1.bf16.msra.mxu0 0
        %3647 = vmatprep.subr.bf16.mxu0 0
        %3648 = vmatpush1.bf16.msra.mxu0 0
        %3649 = vmatprep.subr.bf16.mxu0 0
        %3650 = vmatpush1.bf16.msra.mxu0 0
        %3651 = vmatprep.subr.bf16.mxu0 0
        %3652 = vmatpush1.bf16.msra.mxu0 0
        %3653 = vmatprep.subr.bf16.mxu0 0
        %3654 = vmatpush1.bf16.msra.mxu0 0
        %3655 = vmatprep.subr.bf16.mxu0 0
        %3656 = vmatpush1.bf16.msra.mxu0 0
        %3657 = vmatprep.subr.bf16.mxu0 0
        %3658 = vmatpush1.bf16.msra.mxu0 0
        %3659 = vmatprep.subr.bf16.mxu0 0
        %3660 = vmatpush1.bf16.msra.mxu0 0
        %3661 = vmatprep.subr.bf16.mxu0 0
        %3662 = vmatpush1.bf16.msra.mxu0 0
        %3663 = vmatprep.subr.bf16.mxu0 0
        %3664 = vmatpush1.bf16.msra.mxu0 0
        %3665 = vmatprep.subr.bf16.mxu0 0
        %3666 = vmatpush1.bf16.msra.mxu0 0
        %3667 = vmatprep.subr.bf16.mxu0 0
        %3668 = vmatpush1.bf16.msra.mxu0 0
        %3669 = vmatprep.subr.bf16.mxu0 0
        %3670 = vmatpush1.bf16.msra.mxu0 0
        %3671 = vmatprep.mubr.bf16.mxu0 0
        %3672 = vmatmul.mubr.bf16.gmra.mrb[0].mxu0 %v365
        %v3673 = vpop.f32.mrb[0].mxu0
        %v3674 = vadd.f32 0.0, %v3673
        %v3675 = vpop.f32.mrb[0].mxu0
        %v3676 = vadd.f32 0.0, %v3675
        %v3677 = vpop.f32.mrb[0].mxu0
        %v3678 = vadd.f32 0.0, %v3677
        %v3679 = vpop.f32.mrb[0].mxu0
        %v3680 = vadd.f32 0.0, %v3679
        %3681 = vdwg.mxu0
        %3682 = vmatprep.subr.bf16.mxu0 %v3368
        %3683 = vmatpush1.bf16.msra.mxu0 %v3365
        %3684 = vmatprep.subr.bf16.mxu0 0
        %3685 = vmatpush1.bf16.msra.mxu0 0
        %3686 = vmatprep.subr.bf16.mxu0 0
        %3687 = vmatpush1.bf16.msra.mxu0 0
        %3688 = vmatprep.subr.bf16.mxu0 0
        %3689 = vmatpush1.bf16.msra.mxu0 0
        %3690 = vmatprep.subr.bf16.mxu0 0
        %3691 = vmatpush1.bf16.msra.mxu0 0
        %3692 = vmatprep.subr.bf16.mxu0 0
        %3693 = vmatpush1.bf16.msra.mxu0 0
        %3694 = vmatprep.subr.bf16.mxu0 0
        %3695 = vmatpush1.bf16.msra.mxu0 0
        %3696 = vmatprep.subr.bf16.mxu0 0
        %3697 = vmatpush1.bf16.msra.mxu0 0
        %3698 = vmatprep.subr.bf16.mxu0 0
        %3699 = vmatpush1.bf16.msra.mxu0 0
        %3700 = vmatprep.subr.bf16.mxu0 0
        %3701 = vmatpush1.bf16.msra.mxu0 0
        %3702 = vmatprep.subr.bf16.mxu0 0
        %3703 = vmatpush1.bf16.msra.mxu0 0
        %3704 = vmatprep.subr.bf16.mxu0 0
        %3705 = vmatpush1.bf16.msra.mxu0 0
        %3706 = vmatprep.subr.bf16.mxu0 0
        %3707 = vmatpush1.bf16.msra.mxu0 0
        %3708 = vmatprep.subr.bf16.mxu0 0
        %3709 = vmatpush1.bf16.msra.mxu0 0
        %3710 = vmatprep.subr.bf16.mxu0 0
        %3711 = vmatpush1.bf16.msra.mxu0 0
        %3712 = vmatprep.subr.bf16.mxu0 0
        %3713 = vmatpush1.bf16.msra.mxu0 0
        %3714 = vmatprep.mubr.bf16.mxu0 0
        %3715 = vmatmul.mubr.bf16.gmra.mrb[0].mxu0 %v365
        %v3716 = vpop.f32.mrb[0].mxu0
        %v3717 = vadd.f32 0.0, %v3716
        %v3718 = vpop.f32.mrb[0].mxu0
        %v3719 = vadd.f32 0.0, %v3718
        %v3720 = vpop.f32.mrb[0].mxu0
        %v3721 = vadd.f32 0.0, %v3720
        %v3722 = vpop.f32.mrb[0].mxu0
        %v3723 = vadd.f32 0.0, %v3722
        %3724 = vdwg.mxu0
        %3725 = vmatprep.subr.bf16.mxu0 %v3374
        %3726 = vmatpush1.bf16.msra.mxu0 %v3371
        %3727 = vmatprep.subr.bf16.mxu0 0
        %3728 = vmatpush1.bf16.msra.mxu0 0
        %3729 = vmatprep.subr.bf16.mxu0 0
        %3730 = vmatpush1.bf16.msra.mxu0 0
        %3731 = vmatprep.subr.bf16.mxu0 0
        %3732 = vmatpush1.bf16.msra.mxu0 0
        %3733 = vmatprep.subr.bf16.mxu0 0
        %3734 = vmatpush1.bf16.msra.mxu0 0
        %3735 = vmatprep.subr.bf16.mxu0 0
        %3736 = vmatpush1.bf16.msra.mxu0 0
        %3737 = vmatprep.subr.bf16.mxu0 0
        %3738 = vmatpush1.bf16.msra.mxu0 0
        %3739 = vmatprep.subr.bf16.mxu0 0
        %3740 = vmatpush1.bf16.msra.mxu0 0
        %3741 = vmatprep.subr.bf16.mxu0 0
        %3742 = vmatpush1.bf16.msra.mxu0 0
        %3743 = vmatprep.subr.bf16.mxu0 0
        %3744 = vmatpush1.bf16.msra.mxu0 0
        %3745 = vmatprep.subr.bf16.mxu0 0
        %3746 = vmatpush1.bf16.msra.mxu0 0
        %3747 = vmatprep.subr.bf16.mxu0 0
        %3748 = vmatpush1.bf16.msra.mxu0 0
        %3749 = vmatprep.subr.bf16.mxu0 0
        %3750 = vmatpush1.bf16.msra.mxu0 0
        %3751 = vmatprep.subr.bf16.mxu0 0
        %3752 = vmatpush1.bf16.msra.mxu0 0
        %3753 = vmatprep.subr.bf16.mxu0 0
        %3754 = vmatpush1.bf16.msra.mxu0 0
        %3755 = vmatprep.subr.bf16.mxu0 0
        %3756 = vmatpush1.bf16.msra.mxu0 0
        %3757 = vmatprep.mubr.bf16.mxu0 0
        %3758 = vmatmul.mubr.bf16.gmra.mrb[0].mxu0 %v365
        %v3759 = vpop.f32.mrb[0].mxu0
        %v3760 = vadd.f32 0.0, %v3759
        %v3761 = vpop.f32.mrb[0].mxu0
        %v3762 = vadd.f32 0.0, %v3761
        %v3763 = vpop.f32.mrb[0].mxu0
        %v3764 = vadd.f32 0.0, %v3763
        %v3765 = vpop.f32.mrb[0].mxu0
        %v3766 = vadd.f32 0.0, %v3765
        %3767 = vdwg.mxu0
        %3768 = vmatprep.subr.bf16.mxu0 %v3380
        %3769 = vmatpush1.bf16.msra.mxu0 %v3377
        %3770 = vmatprep.subr.bf16.mxu0 0
        %3771 = vmatpush1.bf16.msra.mxu0 0
        %3772 = vmatprep.subr.bf16.mxu0 0
        %3773 = vmatpush1.bf16.msra.mxu0 0
        %3774 = vmatprep.subr.bf16.mxu0 0
        %3775 = vmatpush1.bf16.msra.mxu0 0
        %3776 = vmatprep.subr.bf16.mxu0 0
        %3777 = vmatpush1.bf16.msra.mxu0 0
        %3778 = vmatprep.subr.bf16.mxu0 0
        %3779 = vmatpush1.bf16.msra.mxu0 0
        %3780 = vmatprep.subr.bf16.mxu0 0
        %3781 = vmatpush1.bf16.msra.mxu0 0
        %3782 = vmatprep.subr.bf16.mxu0 0
        %3783 = vmatpush1.bf16.msra.mxu0 0
        %3784 = vmatprep.subr.bf16.mxu0 0
        %3785 = vmatpush1.bf16.msra.mxu0 0
        %3786 = vmatprep.subr.bf16.mxu0 0
        %3787 = vmatpush1.bf16.msra.mxu0 0
        %3788 = vmatprep.subr.bf16.mxu0 0
        %3789 = vmatpush1.bf16.msra.mxu0 0
        %3790 = vmatprep.subr.bf16.mxu0 0
        %3791 = vmatpush1.bf16.msra.mxu0 0
        %3792 = vmatprep.subr.bf16.mxu0 0
        %3793 = vmatpush1.bf16.msra.mxu0 0
        %3794 = vmatprep.subr.bf16.mxu0 0
        %3795 = vmatpush1.bf16.msra.mxu0 0
        %3796 = vmatprep.subr.bf16.mxu0 0
        %3797 = vmatpush1.bf16.msra.mxu0 0
        %3798 = vmatprep.subr.bf16.mxu0 0
        %3799 = vmatpush1.bf16.msra.mxu0 0
        %3800 = vmatprep.mubr.bf16.mxu0 0
        %3801 = vmatmul.mubr.bf16.gmra.mrb[0].mxu0 %v365
        %v3802 = vpop.f32.mrb[0].mxu0
        %v3803 = vadd.f32 0.0, %v3802
        %v3804 = vpop.f32.mrb[0].mxu0
        %v3805 = vadd.f32 0.0, %v3804
        %v3806 = vpop.f32.mrb[0].mxu0
        %v3807 = vadd.f32 0.0, %v3806
        %v3808 = vpop.f32.mrb[0].mxu0
        %v3809 = vadd.f32 0.0, %v3808
        %3810 = vdwg.mxu0
        %3811 = vmatprep.subr.bf16.mxu0 %v3386
        %3812 = vmatpush1.bf16.msra.mxu0 %v3383
        %3813 = vmatprep.subr.bf16.mxu0 0
        %3814 = vmatpush1.bf16.msra.mxu0 0
        %3815 = vmatprep.subr.bf16.mxu0 0
        %3816 = vmatpush1.bf16.msra.mxu0 0
        %3817 = vmatprep.subr.bf16.mxu0 0
        %3818 = vmatpush1.bf16.msra.mxu0 0
        %3819 = vmatprep.subr.bf16.mxu0 0
        %3820 = vmatpush1.bf16.msra.mxu0 0
        %3821 = vmatprep.subr.bf16.mxu0 0
        %3822 = vmatpush1.bf16.msra.mxu0 0
        %3823 = vmatprep.subr.bf16.mxu0 0
        %3824 = vmatpush1.bf16.msra.mxu0 0
        %3825 = vmatprep.subr.bf16.mxu0 0
        %3826 = vmatpush1.bf16.msra.mxu0 0
        %3827 = vmatprep.subr.bf16.mxu0 0
        %3828 = vmatpush1.bf16.msra.mxu0 0
        %3829 = vmatprep.subr.bf16.mxu0 0
        %3830 = vmatpush1.bf16.msra.mxu0 0
        %3831 = vmatprep.subr.bf16.mxu0 0
        %3832 = vmatpush1.bf16.msra.mxu0 0
        %3833 = vmatprep.subr.bf16.mxu0 0
        %3834 = vmatpush1.bf16.msra.mxu0 0
        %3835 = vmatprep.subr.bf16.mxu0 0
        %3836 = vmatpush1.bf16.msra.mxu0 0
        %3837 = vmatprep.subr.bf16.mxu0 0
        %3838 = vmatpush1.bf16.msra.mxu0 0
        %3839 = vmatprep.subr.bf16.mxu0 0
        %3840 = vmatpush1.bf16.msra.mxu0 0
        %3841 = vmatprep.subr.bf16.mxu0 0
        %3842 = vmatpush1.bf16.msra.mxu0 0
        %3843 = vmatprep.mubr.bf16.mxu0 0
        %3844 = vmatmul.mubr.bf16.gmra.mrb[0].mxu0 %v365
        %v3845 = vpop.f32.mrb[0].mxu0
        %v3846 = vadd.f32 0.0, %v3845
        %v3847 = vpop.f32.mrb[0].mxu0
        %v3848 = vadd.f32 0.0, %v3847
        %v3849 = vpop.f32.mrb[0].mxu0
        %v3850 = vadd.f32 0.0, %v3849
        %v3851 = vpop.f32.mrb[0].mxu0
        %v3852 = vadd.f32 0.0, %v3851
        %3853 = vdwg.mxu0
        %3854 = vmatprep.subr.bf16.mxu0 %v3392
        %3855 = vmatpush1.bf16.msra.mxu0 %v3389
        %3856 = vmatprep.subr.bf16.mxu0 0
        %3857 = vmatpush1.bf16.msra.mxu0 0
        %3858 = vmatprep.subr.bf16.mxu0 0
        %3859 = vmatpush1.bf16.msra.mxu0 0
        %3860 = vmatprep.subr.bf16.mxu0 0
        %3861 = vmatpush1.bf16.msra.mxu0 0
        %3862 = vmatprep.subr.bf16.mxu0 0
        %3863 = vmatpush1.bf16.msra.mxu0 0
        %3864 = vmatprep.subr.bf16.mxu0 0
        %3865 = vmatpush1.bf16.msra.mxu0 0
        %3866 = vmatprep.subr.bf16.mxu0 0
        %3867 = vmatpush1.bf16.msra.mxu0 0
        %3868 = vmatprep.subr.bf16.mxu0 0
        %3869 = vmatpush1.bf16.msra.mxu0 0
        %3870 = vmatprep.subr.bf16.mxu0 0
        %3871 = vmatpush1.bf16.msra.mxu0 0
        %3872 = vmatprep.subr.bf16.mxu0 0
        %3873 = vmatpush1.bf16.msra.mxu0 0
        %3874 = vmatprep.subr.bf16.mxu0 0
        %3875 = vmatpush1.bf16.msra.mxu0 0
        %3876 = vmatprep.subr.bf16.mxu0 0
        %3877 = vmatpush1.bf16.msra.mxu0 0
        %3878 = vmatprep.subr.bf16.mxu0 0
        %3879 = vmatpush1.bf16.msra.mxu0 0
        %3880 = vmatprep.subr.bf16.mxu0 0
        %3881 = vmatpush1.bf16.msra.mxu0 0
        %3882 = vmatprep.subr.bf16.mxu0 0
        %3883 = vmatpush1.bf16.msra.mxu0 0
        %3884 = vmatprep.subr.bf16.mxu0 0
        %3885 = vmatpush1.bf16.msra.mxu0 0
        %3886 = vmatprep.mubr.bf16.mxu0 0
        %3887 = vmatmul.mubr.bf16.gmra.mrb[0].mxu0 %v365
        %v3888 = vpop.f32.mrb[0].mxu0
        %v3889 = vadd.f32 0.0, %v3888
        %v3890 = vpop.f32.mrb[0].mxu0
        %v3891 = vadd.f32 0.0, %v3890
        %v3892 = vpop.f32.mrb[0].mxu0
        %v3893 = vadd.f32 0.0, %v3892
        %v3894 = vpop.f32.mrb[0].mxu0
        %v3895 = vadd.f32 0.0, %v3894
        %3896 = vdwg.mxu0
        %3897 = vmatprep.subr.bf16.mxu0 %v3398
        %3898 = vmatpush1.bf16.msra.mxu0 %v3395
        %3899 = vmatprep.subr.bf16.mxu0 0
        %3900 = vmatpush1.bf16.msra.mxu0 0
        %3901 = vmatprep.subr.bf16.mxu0 0
        %3902 = vmatpush1.bf16.msra.mxu0 0
        %3903 = vmatprep.subr.bf16.mxu0 0
        %3904 = vmatpush1.bf16.msra.mxu0 0
        %3905 = vmatprep.subr.bf16.mxu0 0
        %3906 = vmatpush1.bf16.msra.mxu0 0
        %3907 = vmatprep.subr.bf16.mxu0 0
        %3908 = vmatpush1.bf16.msra.mxu0 0
        %3909 = vmatprep.subr.bf16.mxu0 0
        %3910 = vmatpush1.bf16.msra.mxu0 0
        %3911 = vmatprep.subr.bf16.mxu0 0
        %3912 = vmatpush1.bf16.msra.mxu0 0
        %3913 = vmatprep.subr.bf16.mxu0 0
        %3914 = vmatpush1.bf16.msra.mxu0 0
        %3915 = vmatprep.subr.bf16.mxu0 0
        %3916 = vmatpush1.bf16.msra.mxu0 0
        %3917 = vmatprep.subr.bf16.mxu0 0
        %3918 = vmatpush1.bf16.msra.mxu0 0
        %3919 = vmatprep.subr.bf16.mxu0 0
        %3920 = vmatpush1.bf16.msra.mxu0 0
        %3921 = vmatprep.subr.bf16.mxu0 0
        %3922 = vmatpush1.bf16.msra.mxu0 0
        %3923 = vmatprep.subr.bf16.mxu0 0
        %3924 = vmatpush1.bf16.msra.mxu0 0
        %3925 = vmatprep.subr.bf16.mxu0 0
        %3926 = vmatpush1.bf16.msra.mxu0 0
        %3927 = vmatprep.subr.bf16.mxu0 0
        %3928 = vmatpush1.bf16.msra.mxu0 0
        %3929 = vmatprep.mubr.bf16.mxu0 0
        %3930 = vmatmul.mubr.bf16.gmra.mrb[0].mxu0 %v365
        %v3931 = vpop.f32.mrb[0].mxu0
        %v3932 = vadd.f32 0.0, %v3931
        %v3933 = vpop.f32.mrb[0].mxu0
        %v3934 = vadd.f32 0.0, %v3933
        %v3935 = vpop.f32.mrb[0].mxu0
        %v3936 = vadd.f32 0.0, %v3935
        %v3937 = vpop.f32.mrb[0].mxu0
        %v3938 = vadd.f32 0.0, %v3937
        %3939 = vdwg.mxu0
        %3940 = vmatprep.subr.bf16.mxu0 %v3404
        %3941 = vmatpush1.bf16.msra.mxu0 %v3401
        %3942 = vmatprep.subr.bf16.mxu0 0
        %3943 = vmatpush1.bf16.msra.mxu0 0
        %3944 = vmatprep.subr.bf16.mxu0 0
        %3945 = vmatpush1.bf16.msra.mxu0 0
        %3946 = vmatprep.subr.bf16.mxu0 0
        %3947 = vmatpush1.bf16.msra.mxu0 0
        %3948 = vmatprep.subr.bf16.mxu0 0
        %3949 = vmatpush1.bf16.msra.mxu0 0
        %3950 = vmatprep.subr.bf16.mxu0 0
        %3951 = vmatpush1.bf16.msra.mxu0 0
        %3952 = vmatprep.subr.bf16.mxu0 0
        %3953 = vmatpush1.bf16.msra.mxu0 0
        %3954 = vmatprep.subr.bf16.mxu0 0
        %3955 = vmatpush1.bf16.msra.mxu0 0
        %3956 = vmatprep.subr.bf16.mxu0 0
        %3957 = vmatpush1.bf16.msra.mxu0 0
        %3958 = vmatprep.subr.bf16.mxu0 0
        %3959 = vmatpush1.bf16.msra.mxu0 0
        %3960 = vmatprep.subr.bf16.mxu0 0
        %3961 = vmatpush1.bf16.msra.mxu0 0
        %3962 = vmatprep.subr.bf16.mxu0 0
        %3963 = vmatpush1.bf16.msra.mxu0 0
        %3964 = vmatprep.subr.bf16.mxu0 0
        %3965 = vmatpush1.bf16.msra.mxu0 0
        %3966 = vmatprep.subr.bf16.mxu0 0
        %3967 = vmatpush1.bf16.msra.mxu0 0
        %3968 = vmatprep.subr.bf16.mxu0 0
        %3969 = vmatpush1.bf16.msra.mxu0 0
        %3970 = vmatprep.subr.bf16.mxu0 0
        %3971 = vmatpush1.bf16.msra.mxu0 0
        %3972 = vmatprep.mubr.bf16.mxu0 0
        %3973 = vmatmul.mubr.bf16.gmra.mrb[0].mxu0 %v365
        %v3974 = vpop.f32.mrb[0].mxu0
        %v3975 = vadd.f32 0.0, %v3974
        %v3976 = vpop.f32.mrb[0].mxu0
        %v3977 = vadd.f32 0.0, %v3976
        %v3978 = vpop.f32.mrb[0].mxu0
        %v3979 = vadd.f32 0.0, %v3978
        %v3980 = vpop.f32.mrb[0].mxu0
        %v3981 = vadd.f32 0.0, %v3980
        %3982 = vdwg.mxu0
        %3983 = vmatprep.subr.bf16.mxu0 %v3410
        %3984 = vmatpush1.bf16.msra.mxu0 %v3407
        %3985 = vmatprep.subr.bf16.mxu0 0
        %3986 = vmatpush1.bf16.msra.mxu0 0
        %3987 = vmatprep.subr.bf16.mxu0 0
        %3988 = vmatpush1.bf16.msra.mxu0 0
        %3989 = vmatprep.subr.bf16.mxu0 0
        %3990 = vmatpush1.bf16.msra.mxu0 0
        %3991 = vmatprep.subr.bf16.mxu0 0
        %3992 = vmatpush1.bf16.msra.mxu0 0
        %3993 = vmatprep.subr.bf16.mxu0 0
        %3994 = vmatpush1.bf16.msra.mxu0 0
        %3995 = vmatprep.subr.bf16.mxu0 0
        %3996 = vmatpush1.bf16.msra.mxu0 0
        %3997 = vmatprep.subr.bf16.mxu0 0
        %3998 = vmatpush1.bf16.msra.mxu0 0
        %3999 = vmatprep.subr.bf16.mxu0 0
        %4000 = vmatpush1.bf16.msra.mxu0 0
        %4001 = vmatprep.subr.bf16.mxu0 0
        %4002 = vmatpush1.bf16.msra.mxu0 0
        %4003 = vmatprep.subr.bf16.mxu0 0
        %4004 = vmatpush1.bf16.msra.mxu0 0
        %4005 = vmatprep.subr.bf16.mxu0 0
        %4006 = vmatpush1.bf16.msra.mxu0 0
        %4007 = vmatprep.subr.bf16.mxu0 0
        %4008 = vmatpush1.bf16.msra.mxu0 0
        %4009 = vmatprep.subr.bf16.mxu0 0
        %4010 = vmatpush1.bf16.msra.mxu0 0
        %4011 = vmatprep.subr.bf16.mxu0 0
        %4012 = vmatpush1.bf16.msra.mxu0 0
        %4013 = vmatprep.subr.bf16.mxu0 0
        %4014 = vmatpush1.bf16.msra.mxu0 0
        %4015 = vmatprep.mubr.bf16.mxu0 0
        %4016 = vmatmul.mubr.bf16.gmra.mrb[0].mxu0 %v365
        %v4017 = vpop.f32.mrb[0].mxu0
        %v4018 = vadd.f32 0.0, %v4017
        %v4019 = vpop.f32.mrb[0].mxu0
        %v4020 = vadd.f32 0.0, %v4019
        %v4021 = vpop.f32.mrb[0].mxu0
        %v4022 = vadd.f32 0.0, %v4021
        %v4023 = vpop.f32.mrb[0].mxu0
        %v4024 = vadd.f32 0.0, %v4023
        %4025 = vdwg.mxu0
        %4026 = vmatprep.subr.bf16.mxu0 %v3416
        %4027 = vmatpush1.bf16.msra.mxu0 %v3413
        %4028 = vmatprep.subr.bf16.mxu0 0
        %4029 = vmatpush1.bf16.msra.mxu0 0
        %4030 = vmatprep.subr.bf16.mxu0 0
        %4031 = vmatpush1.bf16.msra.mxu0 0
        %4032 = vmatprep.subr.bf16.mxu0 0
        %4033 = vmatpush1.bf16.msra.mxu0 0
        %4034 = vmatprep.subr.bf16.mxu0 0
        %4035 = vmatpush1.bf16.msra.mxu0 0
        %4036 = vmatprep.subr.bf16.mxu0 0
        %4037 = vmatpush1.bf16.msra.mxu0 0
        %4038 = vmatprep.subr.bf16.mxu0 0
        %4039 = vmatpush1.bf16.msra.mxu0 0
        %4040 = vmatprep.subr.bf16.mxu0 0
        %4041 = vmatpush1.bf16.msra.mxu0 0
        %4042 = vmatprep.subr.bf16.mxu0 0
        %4043 = vmatpush1.bf16.msra.mxu0 0
        %4044 = vmatprep.subr.bf16.mxu0 0
        %4045 = vmatpush1.bf16.msra.mxu0 0
        %4046 = vmatprep.subr.bf16.mxu0 0
        %4047 = vmatpush1.bf16.msra.mxu0 0
        %4048 = vmatprep.subr.bf16.mxu0 0
        %4049 = vmatpush1.bf16.msra.mxu0 0
        %4050 = vmatprep.subr.bf16.mxu0 0
        %4051 = vmatpush1.bf16.msra.mxu0 0
        %4052 = vmatprep.subr.bf16.mxu0 0
        %4053 = vmatpush1.bf16.msra.mxu0 0
        %4054 = vmatprep.subr.bf16.mxu0 0
        %4055 = vmatpush1.bf16.msra.mxu0 0
        %4056 = vmatprep.subr.bf16.mxu0 0
        %4057 = vmatpush1.bf16.msra.mxu0 0
        %4058 = vmatprep.mubr.bf16.mxu0 0
        %4059 = vmatmul.mubr.bf16.gmra.mrb[0].mxu0 %v365
        %v4060 = vpop.f32.mrb[0].mxu0
        %v4061 = vadd.f32 0.0, %v4060
        %v4062 = vpop.f32.mrb[0].mxu0
        %v4063 = vadd.f32 0.0, %v4062
        %v4064 = vpop.f32.mrb[0].mxu0
        %v4065 = vadd.f32 0.0, %v4064
        %v4066 = vpop.f32.mrb[0].mxu0
        %v4067 = vadd.f32 0.0, %v4066
        %4068 = vdwg.mxu0
        %4069 = vmatprep.subr.bf16.mxu0 %v3422
        %4070 = vmatpush1.bf16.msra.mxu0 %v3419
        %4071 = vmatprep.subr.bf16.mxu0 0
        %4072 = vmatpush1.bf16.msra.mxu0 0
        %4073 = vmatprep.subr.bf16.mxu0 0
        %4074 = vmatpush1.bf16.msra.mxu0 0
        %4075 = vmatprep.subr.bf16.mxu0 0
        %4076 = vmatpush1.bf16.msra.mxu0 0
        %4077 = vmatprep.subr.bf16.mxu0 0
        %4078 = vmatpush1.bf16.msra.mxu0 0
        %4079 = vmatprep.subr.bf16.mxu0 0
        %4080 = vmatpush1.bf16.msra.mxu0 0
        %4081 = vmatprep.subr.bf16.mxu0 0
        %4082 = vmatpush1.bf16.msra.mxu0 0
        %4083 = vmatprep.subr.bf16.mxu0 0
        %4084 = vmatpush1.bf16.msra.mxu0 0
        %4085 = vmatprep.subr.bf16.mxu0 0
        %4086 = vmatpush1.bf16.msra.mxu0 0
        %4087 = vmatprep.subr.bf16.mxu0 0
        %4088 = vmatpush1.bf16.msra.mxu0 0
        %4089 = vmatprep.subr.bf16.mxu0 0
        %4090 = vmatpush1.bf16.msra.mxu0 0
        %4091 = vmatprep.subr.bf16.mxu0 0
        %4092 = vmatpush1.bf16.msra.mxu0 0
        %4093 = vmatprep.subr.bf16.mxu0 0
        %4094 = vmatpush1.bf16.msra.mxu0 0
        %4095 = vmatprep.subr.bf16.mxu0 0
        %4096 = vmatpush1.bf16.msra.mxu0 0
        %4097 = vmatprep.subr.bf16.mxu0 0
        %4098 = vmatpush1.bf16.msra.mxu0 0
        %4099 = vmatprep.subr.bf16.mxu0 0
        %4100 = vmatpush1.bf16.msra.mxu0 0
        %4101 = vmatprep.mubr.bf16.mxu0 0
        %4102 = vmatmul.mubr.bf16.gmra.mrb[0].mxu0 %v365
        %v4103 = vpop.f32.mrb[0].mxu0
        %v4104 = vadd.f32 0.0, %v4103
        %v4105 = vpop.f32.mrb[0].mxu0
        %v4106 = vadd.f32 0.0, %v4105
        %v4107 = vpop.f32.mrb[0].mxu0
        %v4108 = vadd.f32 0.0, %v4107
        %v4109 = vpop.f32.mrb[0].mxu0
        %v4110 = vadd.f32 0.0, %v4109
        %4111 = vdwg.mxu0
        %v4112 = vmax.f32 %v3104, %v3459
        %v4113 = vmax.f32 %v3105, %v3461
        %v4114 = vmax.f32 %v3106, %v3502
        %v4115 = vmax.f32 %v3107, %v3504
        %v4116 = vmax.f32 %v3108, %v3545
        %v4117 = vmax.f32 %v3109, %v3547
        %v4118 = vmax.f32 %v3110, %v3588
        %v4119 = vmax.f32 %v3111, %v3590
        %v4120 = vmax.f32 %v3112, %v3631
        %v4121 = vmax.f32 %v3113, %v3633
        %v4122 = vmax.f32 %v3114, %v3674
        %v4123 = vmax.f32 %v3115, %v3676
        %v4124 = vmax.f32 %v3116, %v3717
        %v4125 = vmax.f32 %v3117, %v3719
        %v4126 = vmax.f32 %v3118, %v3760
        %v4127 = vmax.f32 %v3119, %v3762
        %v4128 = vmax.f32 %v3120, %v3803
        %v4129 = vmax.f32 %v3121, %v3805
        %v4130 = vmax.f32 %v3122, %v3846
        %v4131 = vmax.f32 %v3123, %v3848
        %v4132 = vmax.f32 %v3124, %v3889
        %v4133 = vmax.f32 %v3125, %v3891
        %v4134 = vmax.f32 %v3126, %v3932
        %v4135 = vmax.f32 %v3127, %v3934
        %v4136 = vmax.f32 %v3128, %v3975
        %v4137 = vmax.f32 %v3129, %v3977
        %v4138 = vmax.f32 %v3130, %v4018
        %v4139 = vmax.f32 %v3131, %v4020
        %v4140 = vmax.f32 %v3132, %v4061
        %v4141 = vmax.f32 %v3133, %v4063
        %v4142 = vmax.f32 %v3134, %v4104
        %v4143 = vmax.f32 %v3135, %v4106
        %v4144 = vmax.f32 %v3136, %v3463
        %v4145 = vmax.f32 %v3137, %v3465
        %v4146 = vmax.f32 %v3138, %v3506
        %v4147 = vmax.f32 %v3139, %v3508
        %v4148 = vmax.f32 %v3140, %v3549
        %v4149 = vmax.f32 %v3141, %v3551
        %v4150 = vmax.f32 %v3142, %v3592
        %v4151 = vmax.f32 %v3143, %v3594
        %v4152 = vmax.f32 %v3144, %v3635
        %v4153 = vmax.f32 %v3145, %v3637
        %v4154 = vmax.f32 %v3146, %v3678
        %v4155 = vmax.f32 %v3147, %v3680
        %v4156 = vmax.f32 %v3148, %v3721
        %v4157 = vmax.f32 %v3149, %v3723
        %v4158 = vmax.f32 %v3150, %v3764
        %v4159 = vmax.f32 %v3151, %v3766
        %v4160 = vmax.f32 %v3152, %v3807
        %v4161 = vmax.f32 %v3153, %v3809
        %v4162 = vmax.f32 %v3154, %v3850
        %v4163 = vmax.f32 %v3155, %v3852
        %v4164 = vmax.f32 %v3156, %v3893
        %v4165 = vmax.f32 %v3157, %v3895
        %v4166 = vmax.f32 %v3158, %v3936
        %v4167 = vmax.f32 %v3159, %v3938
        %v4168 = vmax.f32 %v3160, %v3979
        %v4169 = vmax.f32 %v3161, %v3981
        %v4170 = vmax.f32 %v3162, %v4022
        %v4171 = vmax.f32 %v3163, %v4024
        %v4172 = vmax.f32 %v3164, %v4065
        %v4173 = vmax.f32 %v3165, %v4067
        %v4174 = vmax.f32 %v3166, %v4108
        %v4175 = vmax.f32 %v3167, %v4110
        %v4176 = vmax.f32 %v4112, 0.0
        %v4177 = vmax.f32 %v4113, 0.0
        %v4178 = vmax.f32 %v4114, 0.0
        %v4179 = vmax.f32 %v4115, 0.0
        %v4180 = vmax.f32 %v4116, 0.0
        %v4181 = vmax.f32 %v4117, 0.0
        %v4182 = vmax.f32 %v4118, 0.0
        %v4183 = vmax.f32 %v4119, 0.0
        %v4184 = vmax.f32 %v4120, 0.0
        %v4185 = vmax.f32 %v4121, 0.0
        %v4186 = vmax.f32 %v4122, 0.0
        %v4187 = vmax.f32 %v4123, 0.0
        %v4188 = vmax.f32 %v4124, 0.0
        %v4189 = vmax.f32 %v4125, 0.0
        %v4190 = vmax.f32 %v4126, 0.0
        %v4191 = vmax.f32 %v4127, 0.0
        %v4192 = vmax.f32 %v4128, 0.0
        %v4193 = vmax.f32 %v4129, 0.0
        %v4194 = vmax.f32 %v4130, 0.0
        %v4195 = vmax.f32 %v4131, 0.0
        %v4196 = vmax.f32 %v4132, 0.0
        %v4197 = vmax.f32 %v4133, 0.0
        %v4198 = vmax.f32 %v4134, 0.0
        %v4199 = vmax.f32 %v4135, 0.0
        %v4200 = vmax.f32 %v4136, 0.0
        %v4201 = vmax.f32 %v4137, 0.0
        %v4202 = vmax.f32 %v4138, 0.0
        %v4203 = vmax.f32 %v4139, 0.0
        %v4204 = vmax.f32 %v4140, 0.0
        %v4205 = vmax.f32 %v4141, 0.0
        %v4206 = vmax.f32 %v4142, 0.0
        %v4207 = vmax.f32 %v4143, 0.0
        %v4208 = vmax.f32 %v4144, 0.0
        %v4209 = vmax.f32 %v4145, 0.0
        %v4210 = vmax.f32 %v4146, 0.0
        %v4211 = vmax.f32 %v4147, 0.0
        %v4212 = vmax.f32 %v4148, 0.0
        %v4213 = vmax.f32 %v4149, 0.0
        %v4214 = vmax.f32 %v4150, 0.0
        %v4215 = vmax.f32 %v4151, 0.0
        %v4216 = vmax.f32 %v4152, 0.0
        %v4217 = vmax.f32 %v4153, 0.0
        %v4218 = vmax.f32 %v4154, 0.0
        %v4219 = vmax.f32 %v4155, 0.0
        %v4220 = vmax.f32 %v4156, 0.0
        %v4221 = vmax.f32 %v4157, 0.0
        %v4222 = vmax.f32 %v4158, 0.0
        %v4223 = vmax.f32 %v4159, 0.0
        %v4224 = vmax.f32 %v4160, 0.0
        %v4225 = vmax.f32 %v4161, 0.0
        %v4226 = vmax.f32 %v4162, 0.0
        %v4227 = vmax.f32 %v4163, 0.0
        %v4228 = vmax.f32 %v4164, 0.0
        %v4229 = vmax.f32 %v4165, 0.0
        %v4230 = vmax.f32 %v4166, 0.0
        %v4231 = vmax.f32 %v4167, 0.0
        %v4232 = vmax.f32 %v4168, 0.0
        %v4233 = vmax.f32 %v4169, 0.0
        %v4234 = vmax.f32 %v4170, 0.0
        %v4235 = vmax.f32 %v4171, 0.0
        %v4236 = vmax.f32 %v4172, 0.0
        %v4237 = vmax.f32 %v4173, 0.0
        %v4238 = vmax.f32 %v4174, 0.0
        %v4239 = vmax.f32 %v4175, 0.0
        %v4240 = vld [vmem:[%s1] sm:$0xff]
        %v4241 = vld [vmem:[%s1 + $0x8] sm:$0xff]
        %v4242 = vld [vmem:[%s1 + $0x10] sm:$0xff]
        %v4243 = vld [vmem:[%s1 + $0x18] sm:$0xff]
        %v4244 = vld [vmem:[%s1 + $0x20] sm:$0xff]
        %v4245 = vld [vmem:[%s1 + $0x28] sm:$0xff]
        %v4246 = vld [vmem:[%s1 + $0x30] sm:$0xff]
        %v4247 = vld [vmem:[%s1 + $0x38] sm:$0xff]
        %v4248 = vld [vmem:[%s1 + $0x40] sm:$0xff]
        %v4249 = vld [vmem:[%s1 + $0x48] sm:$0xff]
        %v4250 = vld [vmem:[%s1 + $0x50] sm:$0xff]
        %v4251 = vld [vmem:[%s1 + $0x58] sm:$0xff]
        %v4252 = vld [vmem:[%s1 + $0x60] sm:$0xff]
        %v4253 = vld [vmem:[%s1 + $0x68] sm:$0xff]
        %v4254 = vld [vmem:[%s1 + $0x70] sm:$0xff]
        %v4255 = vld [vmem:[%s1 + $0x78] sm:$0xff]
        %v4256 = vld [vmem:[%s1 + $0x80] sm:$0xff]
        %v4257 = vld [vmem:[%s1 + $0x88] sm:$0xff]
        %v4258 = vld [vmem:[%s1 + $0x90] sm:$0xff]
        %v4259 = vld [vmem:[%s1 + $0x98] sm:$0xff]
        %v4260 = vld [vmem:[%s1 + $0xa0] sm:$0xff]
        %v4261 = vld [vmem:[%s1 + $0xa8] sm:$0xff]
        %v4262 = vld [vmem:[%s1 + $0xb0] sm:$0xff]
        %v4263 = vld [vmem:[%s1 + $0xb8] sm:$0xff]
        %v4264 = vld [vmem:[%s1 + $0xc0] sm:$0xff]
        %v4265 = vld [vmem:[%s1 + $0xc8] sm:$0xff]
        %v4266 = vld [vmem:[%s1 + $0xd0] sm:$0xff]
        %v4267 = vld [vmem:[%s1 + $0xd8] sm:$0xff]
        %v4268 = vld [vmem:[%s1 + $0xe0] sm:$0xff]
        %v4269 = vld [vmem:[%s1 + $0xe8] sm:$0xff]
        %v4270 = vld [vmem:[%s1 + $0xf0] sm:$0xff]
        %v4271 = vld [vmem:[%s1 + $0xf8] sm:$0xff]
        %v4272 = vld [vmem:[%s1 + $0x100] sm:$0xff]
        %v4273 = vld [vmem:[%s1 + $0x108] sm:$0xff]
        %v4274 = vld [vmem:[%s1 + $0x110] sm:$0xff]
        %v4275 = vld [vmem:[%s1 + $0x118] sm:$0xff]
        %v4276 = vld [vmem:[%s1 + $0x120] sm:$0xff]
        %v4277 = vld [vmem:[%s1 + $0x128] sm:$0xff]
        %v4278 = vld [vmem:[%s1 + $0x130] sm:$0xff]
        %v4279 = vld [vmem:[%s1 + $0x138] sm:$0xff]
        %v4280 = vld [vmem:[%s1 + $0x140] sm:$0xff]
        %v4281 = vld [vmem:[%s1 + $0x148] sm:$0xff]
        %v4282 = vld [vmem:[%s1 + $0x150] sm:$0xff]
        %v4283 = vld [vmem:[%s1 + $0x158] sm:$0xff]
        %v4284 = vld [vmem:[%s1 + $0x160] sm:$0xff]
        %v4285 = vld [vmem:[%s1 + $0x168] sm:$0xff]
        %v4286 = vld [vmem:[%s1 + $0x170] sm:$0xff]
        %v4287 = vld [vmem:[%s1 + $0x178] sm:$0xff]
        %v4288 = vld [vmem:[%s1 + $0x180] sm:$0xff]
        %v4289 = vld [vmem:[%s1 + $0x188] sm:$0xff]
        %v4290 = vld [vmem:[%s1 + $0x190] sm:$0xff]
        %v4291 = vld [vmem:[%s1 + $0x198] sm:$0xff]
        %v4292 = vld [vmem:[%s1 + $0x1a0] sm:$0xff]
        %v4293 = vld [vmem:[%s1 + $0x1a8] sm:$0xff]
        %v4294 = vld [vmem:[%s1 + $0x1b0] sm:$0xff]
        %v4295 = vld [vmem:[%s1 + $0x1b8] sm:$0xff]
        %v4296 = vld [vmem:[%s1 + $0x1c0] sm:$0xff]
        %v4297 = vld [vmem:[%s1 + $0x1c8] sm:$0xff]
        %v4298 = vld [vmem:[%s1 + $0x1d0] sm:$0xff]
        %v4299 = vld [vmem:[%s1 + $0x1d8] sm:$0xff]
        %v4300 = vld [vmem:[%s1 + $0x1e0] sm:$0xff]
        %v4301 = vld [vmem:[%s1 + $0x1e8] sm:$0xff]
        %v4302 = vld [vmem:[%s1 + $0x1f0] sm:$0xff]
        %v4303 = vld [vmem:[%s1 + $0x1f8] sm:$0xff]
        %s4304 = scalar_lea.vmem %s1, 512
        %v4305 = vld [vmem:[%s4304] sm:$0xff]
        %v4306 = vld [vmem:[%s4304 + $0x8] sm:$0xff]
        %v4307 = vld [vmem:[%s4304 + $0x10] sm:$0xff]
        %v4308 = vld [vmem:[%s4304 + $0x18] sm:$0xff]
        %v4309 = vld [vmem:[%s4304 + $0x20] sm:$0xff]
        %v4310 = vld [vmem:[%s4304 + $0x28] sm:$0xff]
        %v4311 = vld [vmem:[%s4304 + $0x30] sm:$0xff]
        %v4312 = vld [vmem:[%s4304 + $0x38] sm:$0xff]
        %v4313 = vld [vmem:[%s4304 + $0x40] sm:$0xff]
        %v4314 = vld [vmem:[%s4304 + $0x48] sm:$0xff]
        %v4315 = vld [vmem:[%s4304 + $0x50] sm:$0xff]
        %v4316 = vld [vmem:[%s4304 + $0x58] sm:$0xff]
        %v4317 = vld [vmem:[%s4304 + $0x60] sm:$0xff]
        %v4318 = vld [vmem:[%s4304 + $0x68] sm:$0xff]
        %v4319 = vld [vmem:[%s4304 + $0x70] sm:$0xff]
        %v4320 = vld [vmem:[%s4304 + $0x78] sm:$0xff]
        %v4321 = vld [vmem:[%s4304 + $0x80] sm:$0xff]
        %v4322 = vld [vmem:[%s4304 + $0x88] sm:$0xff]
        %v4323 = vld [vmem:[%s4304 + $0x90] sm:$0xff]
        %v4324 = vld [vmem:[%s4304 + $0x98] sm:$0xff]
        %v4325 = vld [vmem:[%s4304 + $0xa0] sm:$0xff]
        %v4326 = vld [vmem:[%s4304 + $0xa8] sm:$0xff]
        %v4327 = vld [vmem:[%s4304 + $0xb0] sm:$0xff]
        %v4328 = vld [vmem:[%s4304 + $0xb8] sm:$0xff]
        %v4329 = vld [vmem:[%s4304 + $0xc0] sm:$0xff]
        %v4330 = vld [vmem:[%s4304 + $0xc8] sm:$0xff]
        %v4331 = vld [vmem:[%s4304 + $0xd0] sm:$0xff]
        %v4332 = vld [vmem:[%s4304 + $0xd8] sm:$0xff]
        %v4333 = vld [vmem:[%s4304 + $0xe0] sm:$0xff]
        %v4334 = vld [vmem:[%s4304 + $0xe8] sm:$0xff]
        %v4335 = vld [vmem:[%s4304 + $0xf0] sm:$0xff]
        %v4336 = vld [vmem:[%s4304 + $0xf8] sm:$0xff]
        %v4337 = vld [vmem:[%s4304 + $0x100] sm:$0xff]
        %v4338 = vld [vmem:[%s4304 + $0x108] sm:$0xff]
        %v4339 = vld [vmem:[%s4304 + $0x110] sm:$0xff]
        %v4340 = vld [vmem:[%s4304 + $0x118] sm:$0xff]
        %v4341 = vld [vmem:[%s4304 + $0x120] sm:$0xff]
        %v4342 = vld [vmem:[%s4304 + $0x128] sm:$0xff]
        %v4343 = vld [vmem:[%s4304 + $0x130] sm:$0xff]
        %v4344 = vld [vmem:[%s4304 + $0x138] sm:$0xff]
        %v4345 = vld [vmem:[%s4304 + $0x140] sm:$0xff]
        %v4346 = vld [vmem:[%s4304 + $0x148] sm:$0xff]
        %v4347 = vld [vmem:[%s4304 + $0x150] sm:$0xff]
        %v4348 = vld [vmem:[%s4304 + $0x158] sm:$0xff]
        %v4349 = vld [vmem:[%s4304 + $0x160] sm:$0xff]
        %v4350 = vld [vmem:[%s4304 + $0x168] sm:$0xff]
        %v4351 = vld [vmem:[%s4304 + $0x170] sm:$0xff]
        %v4352 = vld [vmem:[%s4304 + $0x178] sm:$0xff]
        %v4353 = vld [vmem:[%s4304 + $0x180] sm:$0xff]
        %v4354 = vld [vmem:[%s4304 + $0x188] sm:$0xff]
        %v4355 = vld [vmem:[%s4304 + $0x190] sm:$0xff]
        %v4356 = vld [vmem:[%s4304 + $0x198] sm:$0xff]
        %v4357 = vld [vmem:[%s4304 + $0x1a0] sm:$0xff]
        %v4358 = vld [vmem:[%s4304 + $0x1a8] sm:$0xff]
        %v4359 = vld [vmem:[%s4304 + $0x1b0] sm:$0xff]
        %v4360 = vld [vmem:[%s4304 + $0x1b8] sm:$0xff]
        %v4361 = vld [vmem:[%s4304 + $0x1c0] sm:$0xff]
        %v4362 = vld [vmem:[%s4304 + $0x1c8] sm:$0xff]
        %v4363 = vld [vmem:[%s4304 + $0x1d0] sm:$0xff]
        %v4364 = vld [vmem:[%s4304 + $0x1d8] sm:$0xff]
        %v4365 = vld [vmem:[%s4304 + $0x1e0] sm:$0xff]
        %v4366 = vld [vmem:[%s4304 + $0x1e8] sm:$0xff]
        %v4367 = vld [vmem:[%s4304 + $0x1f0] sm:$0xff]
        %v4368 = vld [vmem:[%s4304 + $0x1f8] sm:$0xff]
        %v4369 = vmul.f32 %v4176, %v4240
        %v4370 = vmul.f32 %v4177, %v4241
        %v4371 = vmul.f32 %v4178, %v4242
        %v4372 = vmul.f32 %v4179, %v4243
        %v4373 = vmul.f32 %v4180, %v4244
        %v4374 = vmul.f32 %v4181, %v4245
        %v4375 = vmul.f32 %v4182, %v4246
        %v4376 = vmul.f32 %v4183, %v4247
        %v4377 = vmul.f32 %v4184, %v4248
        %v4378 = vmul.f32 %v4185, %v4249
        %v4379 = vmul.f32 %v4186, %v4250
        %v4380 = vmul.f32 %v4187, %v4251
        %v4381 = vmul.f32 %v4188, %v4252
        %v4382 = vmul.f32 %v4189, %v4253
        %v4383 = vmul.f32 %v4190, %v4254
        %v4384 = vmul.f32 %v4191, %v4255
        %v4385 = vmul.f32 %v4192, %v4256
        %v4386 = vmul.f32 %v4193, %v4257
        %v4387 = vmul.f32 %v4194, %v4258
        %v4388 = vmul.f32 %v4195, %v4259
        %v4389 = vmul.f32 %v4196, %v4260
        %v4390 = vmul.f32 %v4197, %v4261
        %v4391 = vmul.f32 %v4198, %v4262
        %v4392 = vmul.f32 %v4199, %v4263
        %v4393 = vmul.f32 %v4200, %v4264
        %v4394 = vmul.f32 %v4201, %v4265
        %v4395 = vmul.f32 %v4202, %v4266
        %v4396 = vmul.f32 %v4203, %v4267
        %v4397 = vmul.f32 %v4204, %v4268
        %v4398 = vmul.f32 %v4205, %v4269
        %v4399 = vmul.f32 %v4206, %v4270
        %v4400 = vmul.f32 %v4207, %v4271
        %v4401 = vmul.f32 %v4208, %v4272
        %v4402 = vmul.f32 %v4209, %v4273
        %v4403 = vmul.f32 %v4210, %v4274
        %v4404 = vmul.f32 %v4211, %v4275
        %v4405 = vmul.f32 %v4212, %v4276
        %v4406 = vmul.f32 %v4213, %v4277
        %v4407 = vmul.f32 %v4214, %v4278
        %v4408 = vmul.f32 %v4215, %v4279
        %v4409 = vmul.f32 %v4216, %v4280
        %v4410 = vmul.f32 %v4217, %v4281
        %v4411 = vmul.f32 %v4218, %v4282
        %v4412 = vmul.f32 %v4219, %v4283
        %v4413 = vmul.f32 %v4220, %v4284
        %v4414 = vmul.f32 %v4221, %v4285
        %v4415 = vmul.f32 %v4222, %v4286
        %v4416 = vmul.f32 %v4223, %v4287
        %v4417 = vmul.f32 %v4224, %v4288
        %v4418 = vmul.f32 %v4225, %v4289
        %v4419 = vmul.f32 %v4226, %v4290
        %v4420 = vmul.f32 %v4227, %v4291
        %v4421 = vmul.f32 %v4228, %v4292
        %v4422 = vmul.f32 %v4229, %v4293
        %v4423 = vmul.f32 %v4230, %v4294
        %v4424 = vmul.f32 %v4231, %v4295
        %v4425 = vmul.f32 %v4232, %v4296
        %v4426 = vmul.f32 %v4233, %v4297
        %v4427 = vmul.f32 %v4234, %v4298
        %v4428 = vmul.f32 %v4235, %v4299
        %v4429 = vmul.f32 %v4236, %v4300
        %v4430 = vmul.f32 %v4237, %v4301
        %v4431 = vmul.f32 %v4238, %v4302
        %v4432 = vmul.f32 %v4239, %v4303
        %v4433 = vadd.f32 %v4369, %v4370
        %v4434 = vadd.f32 %v4433, %v4371
        %v4435 = vadd.f32 %v4434, %v4372
        %v4436 = vadd.f32 %v4435, %v4373
        %v4437 = vadd.f32 %v4436, %v4374
        %v4438 = vadd.f32 %v4437, %v4375
        %v4439 = vadd.f32 %v4438, %v4376
        %v4440 = vadd.f32 %v4439, %v4377
        %v4441 = vadd.f32 %v4440, %v4378
        %v4442 = vadd.f32 %v4441, %v4379
        %v4443 = vadd.f32 %v4442, %v4380
        %v4444 = vadd.f32 %v4443, %v4381
        %v4445 = vadd.f32 %v4444, %v4382
        %v4446 = vadd.f32 %v4445, %v4383
        %v4447 = vadd.f32 %v4446, %v4384
        %v4448 = vadd.f32 %v4447, %v4385
        %v4449 = vadd.f32 %v4448, %v4386
        %v4450 = vadd.f32 %v4449, %v4387
        %v4451 = vadd.f32 %v4450, %v4388
        %v4452 = vadd.f32 %v4451, %v4389
        %v4453 = vadd.f32 %v4452, %v4390
        %v4454 = vadd.f32 %v4453, %v4391
        %v4455 = vadd.f32 %v4454, %v4392
        %v4456 = vadd.f32 %v4455, %v4393
        %v4457 = vadd.f32 %v4456, %v4394
        %v4458 = vadd.f32 %v4457, %v4395
        %v4459 = vadd.f32 %v4458, %v4396
        %v4460 = vadd.f32 %v4459, %v4397
        %v4461 = vadd.f32 %v4460, %v4398
        %v4462 = vadd.f32 %v4461, %v4399
        %v4463 = vadd.f32 %v4462, %v4400
        %4464 = vadd.xlane.f32.xlu0 %v4463
        %v4465 = vpop.xlane.xlu0 %4464
        %v4466 = vadd.f32 %v4401, %v4402
        %v4467 = vadd.f32 %v4466, %v4403
        %v4468 = vadd.f32 %v4467, %v4404
        %v4469 = vadd.f32 %v4468, %v4405
        %v4470 = vadd.f32 %v4469, %v4406
        %v4471 = vadd.f32 %v4470, %v4407
        %v4472 = vadd.f32 %v4471, %v4408
        %v4473 = vadd.f32 %v4472, %v4409
        %v4474 = vadd.f32 %v4473, %v4410
        %v4475 = vadd.f32 %v4474, %v4411
        %v4476 = vadd.f32 %v4475, %v4412
        %v4477 = vadd.f32 %v4476, %v4413
        %v4478 = vadd.f32 %v4477, %v4414
        %v4479 = vadd.f32 %v4478, %v4415
        %v4480 = vadd.f32 %v4479, %v4416
        %v4481 = vadd.f32 %v4480, %v4417
        %v4482 = vadd.f32 %v4481, %v4418
        %v4483 = vadd.f32 %v4482, %v4419
        %v4484 = vadd.f32 %v4483, %v4420
        %v4485 = vadd.f32 %v4484, %v4421
        %v4486 = vadd.f32 %v4485, %v4422
        %v4487 = vadd.f32 %v4486, %v4423
        %v4488 = vadd.f32 %v4487, %v4424
        %v4489 = vadd.f32 %v4488, %v4425
        %v4490 = vadd.f32 %v4489, %v4426
        %v4491 = vadd.f32 %v4490, %v4427
        %v4492 = vadd.f32 %v4491, %v4428
        %v4493 = vadd.f32 %v4492, %v4429
        %v4494 = vadd.f32 %v4493, %v4430
        %v4495 = vadd.f32 %v4494, %v4431
        %v4496 = vadd.f32 %v4495, %v4432
        %4497 = vadd.xlane.f32.xlu0 %v4496
        %v4498 = vpop.xlane.xlu0 %4497
        %v4499 = vadd.f32 %v4465, %v4498
        %v4500 = vrot.slane %v4499, 4
        %v4501 = vadd.f32 %v4499, %v4500
        %v4502 = vrot.slane %v4501, 2
        %v4503 = vadd.f32 %v4501, %v4502
        %v4504 = vrot.slane %v4503, 1
        %v4505 = vadd.f32 %v4503, %v4504
        %v4506 = vmul.f32 %v4176, %v4305
        %v4507 = vmul.f32 %v4177, %v4306
        %v4508 = vmul.f32 %v4178, %v4307
        %v4509 = vmul.f32 %v4179, %v4308
        %v4510 = vmul.f32 %v4180, %v4309
        %v4511 = vmul.f32 %v4181, %v4310
        %v4512 = vmul.f32 %v4182, %v4311
        %v4513 = vmul.f32 %v4183, %v4312
        %v4514 = vmul.f32 %v4184, %v4313
        %v4515 = vmul.f32 %v4185, %v4314
        %v4516 = vmul.f32 %v4186, %v4315
        %v4517 = vmul.f32 %v4187, %v4316
        %v4518 = vmul.f32 %v4188, %v4317
        %v4519 = vmul.f32 %v4189, %v4318
        %v4520 = vmul.f32 %v4190, %v4319
        %v4521 = vmul.f32 %v4191, %v4320
        %v4522 = vmul.f32 %v4192, %v4321
        %v4523 = vmul.f32 %v4193, %v4322
        %v4524 = vmul.f32 %v4194, %v4323
        %v4525 = vmul.f32 %v4195, %v4324
        %v4526 = vmul.f32 %v4196, %v4325
        %v4527 = vmul.f32 %v4197, %v4326
        %v4528 = vmul.f32 %v4198, %v4327
        %v4529 = vmul.f32 %v4199, %v4328
        %v4530 = vmul.f32 %v4200, %v4329
        %v4531 = vmul.f32 %v4201, %v4330
        %v4532 = vmul.f32 %v4202, %v4331
        %v4533 = vmul.f32 %v4203, %v4332
        %v4534 = vmul.f32 %v4204, %v4333
        %v4535 = vmul.f32 %v4205, %v4334
        %v4536 = vmul.f32 %v4206, %v4335
        %v4537 = vmul.f32 %v4207, %v4336
        %v4538 = vmul.f32 %v4208, %v4337
        %v4539 = vmul.f32 %v4209, %v4338
        %v4540 = vmul.f32 %v4210, %v4339
        %v4541 = vmul.f32 %v4211, %v4340
        %v4542 = vmul.f32 %v4212, %v4341
        %v4543 = vmul.f32 %v4213, %v4342
        %v4544 = vmul.f32 %v4214, %v4343
        %v4545 = vmul.f32 %v4215, %v4344
        %v4546 = vmul.f32 %v4216, %v4345
        %v4547 = vmul.f32 %v4217, %v4346
        %v4548 = vmul.f32 %v4218, %v4347
        %v4549 = vmul.f32 %v4219, %v4348
        %v4550 = vmul.f32 %v4220, %v4349
        %v4551 = vmul.f32 %v4221, %v4350
        %v4552 = vmul.f32 %v4222, %v4351
        %v4553 = vmul.f32 %v4223, %v4352
        %v4554 = vmul.f32 %v4224, %v4353
        %v4555 = vmul.f32 %v4225, %v4354
        %v4556 = vmul.f32 %v4226, %v4355
        %v4557 = vmul.f32 %v4227, %v4356
        %v4558 = vmul.f32 %v4228, %v4357
        %v4559 = vmul.f32 %v4229, %v4358
        %v4560 = vmul.f32 %v4230, %v4359
        %v4561 = vmul.f32 %v4231, %v4360
        %v4562 = vmul.f32 %v4232, %v4361
        %v4563 = vmul.f32 %v4233, %v4362
        %v4564 = vmul.f32 %v4234, %v4363
        %v4565 = vmul.f32 %v4235, %v4364
        %v4566 = vmul.f32 %v4236, %v4365
        %v4567 = vmul.f32 %v4237, %v4366
        %v4568 = vmul.f32 %v4238, %v4367
        %v4569 = vmul.f32 %v4239, %v4368
        %v4570 = vadd.f32 %v4506, %v4507
        %v4571 = vadd.f32 %v4570, %v4508
        %v4572 = vadd.f32 %v4571, %v4509
        %v4573 = vadd.f32 %v4572, %v4510
        %v4574 = vadd.f32 %v4573, %v4511
        %v4575 = vadd.f32 %v4574, %v4512
        %v4576 = vadd.f32 %v4575, %v4513
        %v4577 = vadd.f32 %v4576, %v4514
        %v4578 = vadd.f32 %v4577, %v4515
        %v4579 = vadd.f32 %v4578, %v4516
        %v4580 = vadd.f32 %v4579, %v4517
        %v4581 = vadd.f32 %v4580, %v4518
        %v4582 = vadd.f32 %v4581, %v4519
        %v4583 = vadd.f32 %v4582, %v4520
        %v4584 = vadd.f32 %v4583, %v4521
        %v4585 = vadd.f32 %v4584, %v4522
        %v4586 = vadd.f32 %v4585, %v4523
        %v4587 = vadd.f32 %v4586, %v4524
        %v4588 = vadd.f32 %v4587, %v4525
        %v4589 = vadd.f32 %v4588, %v4526
        %v4590 = vadd.f32 %v4589, %v4527
        %v4591 = vadd.f32 %v4590, %v4528
        %v4592 = vadd.f32 %v4591, %v4529
        %v4593 = vadd.f32 %v4592, %v4530
        %v4594 = vadd.f32 %v4593, %v4531
        %v4595 = vadd.f32 %v4594, %v4532
        %v4596 = vadd.f32 %v4595, %v4533
        %v4597 = vadd.f32 %v4596, %v4534
        %v4598 = vadd.f32 %v4597, %v4535
        %v4599 = vadd.f32 %v4598, %v4536
        %v4600 = vadd.f32 %v4599, %v4537
        %4601 = vadd.xlane.f32.xlu0 %v4600
        %v4602 = vpop.xlane.xlu0 %4601
        %v4603 = vadd.f32 %v4538, %v4539
        %v4604 = vadd.f32 %v4603, %v4540
        %v4605 = vadd.f32 %v4604, %v4541
        %v4606 = vadd.f32 %v4605, %v4542
        %v4607 = vadd.f32 %v4606, %v4543
        %v4608 = vadd.f32 %v4607, %v4544
        %v4609 = vadd.f32 %v4608, %v4545
        %v4610 = vadd.f32 %v4609, %v4546
        %v4611 = vadd.f32 %v4610, %v4547
        %v4612 = vadd.f32 %v4611, %v4548
        %v4613 = vadd.f32 %v4612, %v4549
        %v4614 = vadd.f32 %v4613, %v4550
        %v4615 = vadd.f32 %v4614, %v4551
        %v4616 = vadd.f32 %v4615, %v4552
        %v4617 = vadd.f32 %v4616, %v4553
        %v4618 = vadd.f32 %v4617, %v4554
        %v4619 = vadd.f32 %v4618, %v4555
        %v4620 = vadd.f32 %v4619, %v4556
        %v4621 = vadd.f32 %v4620, %v4557
        %v4622 = vadd.f32 %v4621, %v4558
        %v4623 = vadd.f32 %v4622, %v4559
        %v4624 = vadd.f32 %v4623, %v4560
        %v4625 = vadd.f32 %v4624, %v4561
        %v4626 = vadd.f32 %v4625, %v4562
        %v4627 = vadd.f32 %v4626, %v4563
        %v4628 = vadd.f32 %v4627, %v4564
        %v4629 = vadd.f32 %v4628, %v4565
        %v4630 = vadd.f32 %v4629, %v4566
        %v4631 = vadd.f32 %v4630, %v4567
        %v4632 = vadd.f32 %v4631, %v4568
        %v4633 = vadd.f32 %v4632, %v4569
        %4634 = vadd.xlane.f32.xlu0 %v4633
        %v4635 = vpop.xlane.xlu0 %4634
        %v4636 = vadd.f32 %v4602, %v4635
        %v4637 = vrot.slane %v4636, 4
        %v4638 = vadd.f32 %v4636, %v4637
        %v4639 = vrot.slane %v4638, 2
        %v4640 = vadd.f32 %v4638, %v4639
        %v4641 = vrot.slane %v4640, 1
        %v4642 = vadd.f32 %v4640, %v4641
        %vm4643 = vcmask 7168
        %v4644 = vsel %vm4643, %v4505, %v4642
        %v4645 = vld [vmem:[%s2] sm:$0x1]
        %v4646 = vadd.f32 %v4644, %v4645
        %vm4647 = vcmask 8192
        %4648 = vst.msk [vmem:[%s189] sm:$0x1] %vm4647, %v4646
        %s4649 = sand.u32 %s115, 1
        %s4650 = scalar_lea.sflag [#allocation3], %s4649
        %s4651 = sand.u32 %s115, 1
        %s4652 = scalar_lea.vmem [#allocation2], %s4651
        // Predicated region
        $region37: #{simple_cnn_forward.1} parent=35 // pred_check
          %p4653 = pneg %p125
        $region38: #{simple_cnn_forward.1} parent=35 // pred_check_branch
          %4655 = sbr.rel (%p4653) target = $region40
        $region39: #{simple_cnn_forward.1} parent=35 // pred_region
          %s4657 = ssub.s32 16, 16
          %4658 = vsyncadd %s4650, %s4657
          %s4659 = smul.addr %s18, 16
          %s4660 = scalar_lea.hbm %s4, %s4659
          %s4662 = sshll.u32 %s4652, 4
          %s4663 = int_to_ptr.vmem [resolvable:$true] %s4662
          %4665 = dma.vmem_to_hbm [thread:$0]  %s4663, 16, %s4660, %s4650
        $region40: #{simple_cnn_forward.1} parent=35 // pred_fallthru
          _
      $region36: #{simple_cnn_forward.1} parent=5 // pred_fallthru
        _
      %p4666 = scmp.le.s32.totalorder 2, %s13
      // Predicated region
      $region41: #{simple_cnn_forward.1} parent=5 // pred_check
        %p4667 = pneg %p4666
      $region42: #{simple_cnn_forward.1} parent=5 // pred_check_branch
        %4669 = sbr.rel (%p4667) target = $region44
      $region43: #{simple_cnn_forward.1} parent=5 // pred_region
        %s4670 = ssub.s32 %s13, 2
        // Predicated region
        $region45: #{simple_cnn_forward.1} parent=43 // pred_check
          %p4671 = pneg %p131
        $region46: #{simple_cnn_forward.1} parent=43 // pred_check_branch
          %4673 = sbr.rel (%p4671) target = $region48
        $region47: #{simple_cnn_forward.1} parent=43 // pred_region
          %s4674 = sand.u32 %s116, 1
          %s4675 = scalar_lea.sflag [#allocation3], %s4674
          %s4676 = sand.u32 %s116, 1
          %s4677 = scalar_lea.vmem [#allocation2], %s4676
          %4678 = dma.done %s4675, 16
        $region48: #{simple_cnn_forward.1} parent=43 // pred_fallthru
          _
      $region44: #{simple_cnn_forward.1} parent=5 // pred_fallthru
        _
    $region6: #{simple_cnn_forward.1} parent=1 // loop_footer
      %s17 = sadd.s32 1, %s13
    $region7: #{simple_cnn_forward.1} parent=1 // loop_footer_branch
      %12 = sbr.rel target = $region3
    $region8: #{simple_cnn_forward.1} parent=1 // loop_exit
      _
    %4679 = vsyncpa [#allocation3], 1
    %s4680 = scalar_lea.sflag [#allocation3], 1
    %4681 = vsyncpa %s4680, 1

</llo_original>
